<compile_context>
chip_gen: v6e
topology: v6e:2x2x1
jax: 0.10.0
libtpu: 0.0.40
codegen_flags: <defaults>
</compile_context>

<pallas_src>
import numpy as np
import jax
import jax.numpy as jnp
from jax import lax
from jax.experimental import pallas as pl
from jax.experimental.pallas import tpu as pltpu

# ---- small synthetic Conv-TasNet separator config ----
M  = 2      # batch
Bc = 16     # bottleneck channels (input channels of network[2:])
H  = 32     # TCN hidden channels
P  = 3      # depthwise kernel size
X  = 2      # blocks per repeat (dilations 1, 2)
R  = 2      # repeats
N  = 16     # encoder channels
C  = 2      # number of sources
K  = 128    # time frames per batch element (one 128-lane segment)
CN = C * N
MK = M * K
NBLK = R * X
DILATIONS = tuple(2 ** x for _ in range(R) for x in range(X))
EPS = 1e-8
INV_H = 1.0 / H
# TODO(synk): exact (R, X, H, N, C) of the original checkpointed model are not
# recoverable from the module alone; this is a faithful small-scale instance.


def _cln(y):
    """Channelwise LayerNorm over axis 0, no affine (gamma/beta are folded into
    the adjacent conv weights in the wrapper).  Fused single reduction pass:
    var = E[y^2] - mean^2, clamped at 0."""
    s1 = jnp.sum(y, axis=0, keepdims=True)
    s2 = jnp.sum(y * y, axis=0, keepdims=True)
    mu = s1 * INV_H
    var = jnp.maximum(s2 * INV_H - mu * mu, 0.0)
    # NOTE: if a bundle dump shows the XLU saturating, these two sums can be
    # offloaded to the (idle) MXU via a dot against ones -- measure first.
    return (y - mu) * lax.rsqrt(var + EPS)


def separator_kernel(x_ref, wmat_ref, wm_ref, vec_ref, alpha_ref, out_ref):
    """network[2:]: NBLK causal TCN blocks + final 1x1 mask conv.

    x_ref    : (Bc, L) activations; L == M*K (fused path) or K (batch grid).
    wmat_ref : (NBLK, 2, H, Bc) f32; slot 0 = w1, slot 1 = (wp * g2^T)^T.
    wm_ref   : (CN, Bc) final mask 1x1 conv.
    vec_ref  : (NBLK, P+2, H, 1); slots 0..P-1 = depthwise taps * g1,
               slot P = b1/g1, slot P+1 = wp @ b2 (zero-padded Bc -> H).
    alpha_ref: (2*NBLK,) SMEM PReLU alphas [a1_0, a2_0, a1_1, a2_1, ...].
    """
    x = x_ref[...]                                     # (Bc, L) f32
    L = x.shape[1]

    # Small (1, L) causal masks, only needed when multiple K-frame batch
    # segments share the lane axis (they zero cross-batch leakage).
    if L > K:
        shifts = sorted({(P - 1 - t) * d
                         for d in set(DILATIONS) for t in range(P - 1)})
        lane_pos = lax.broadcasted_iota(jnp.int32, (1, L), 1) % K
        masks = {s: (lane_pos >= s).astype(jnp.float32) for s in shifts}
    else:
        masks = None

    for blk in range(NBLK):                            # fully unrolled TCN
        d = DILATIONS[blk]

        # --- 1x1 bottleneck conv (Bc -> H): MXU, f32 ---
        y = jnp.dot(wmat_ref[blk, 0], x, preferred_element_type=jnp.float32)
        a1 = alpha_ref[2 * blk]                        # SMEM scalar
        y = jnp.maximum(y, a1 * y)                     # PReLU (needs alpha <= 1)
        y = _cln(y) + vec_ref[blk, P]                  # cLN1 (gamma folded into taps)

        # --- causal dilated depthwise conv (kernel P, dilation d) ---
        acc = vec_ref[blk, P - 1] * y                  # shift-0 tap (already * g1)
        for t in range(P - 1):
            s = (P - 1 - t) * d                        # causal right-shift
            ys = jnp.concatenate(
                [jnp.zeros((H, s), jnp.float32), y[:, :L - s]], axis=1)
            if masks is not None:
                ys = ys * masks[s]                     # zero cross-batch wrap
            acc = acc + vec_ref[blk, t] * ys

        a2 = alpha_ref[2 * blk + 1]
        z = jnp.maximum(acc, a2 * acc)                 # PReLU
        z = _cln(z)                                    # cLN2 (affine folded into wp/bp)

        # --- pointwise 1x1 conv (H -> Bc) + residual ---
        # LHS is stored pre-transposed as (H, Bc); contract over dim 0
        # (== pl.dot(..., trans_a=True)), so no in-kernel transpose is needed.
        delta = lax.dot_general(wmat_ref[blk, 1], z,
                                dimension_numbers=(((0,), (0,)), ((), ())),
                                preferred_element_type=jnp.float32)
        bp = vec_ref[blk, P + 1][:Bc]                  # (Bc, 1) == wp @ b2
        x = x + delta + bp

    # --- final mask 1x1 conv (Bc -> C*N), lane-dense (CN, L) store ---
    out_ref[...] = jnp.dot(wm_ref[...], x,
                           preferred_element_type=jnp.float32).astype(out_ref.dtype)


def _pack_params(params):
    """Fold cLN affines into adjacent convs and pack 10 arrays into 3 VMEM + 1 SMEM."""
    w1, a1, g1, b1, wd, a2, g2, b2, wp, wm = params

    # cLN1: g1*yhat + b1 == g1*(yhat + b1/g1); the per-channel g1 commutes with
    # the causal shift/mask, so it folds into the depthwise taps.
    # (Requires g1 != 0 -- true for this config's unit-gamma init.)
    wd_f = wd * g1                                       # (NBLK, H, P)
    b1g = b1 / g1                                        # (NBLK, H, 1)
    # cLN2: wp @ (g2*zhat + b2) == (wp * g2^T) @ zhat + wp @ b2.
    wp_f = wp * jnp.transpose(g2, (0, 2, 1))             # (NBLK, Bc, H)
    bp = jnp.matmul(wp, b2)                              # (NBLK, Bc, 1)

    # Matmul weights: slot 0 = w1 (H, Bc), slot 1 = (wp*g2^T)^T (H, Bc).
    wmat = jnp.stack([w1, jnp.transpose(wp_f, (0, 2, 1))], axis=1)  # (NBLK,2,H,Bc)

    # Per-channel vectors: P depthwise taps, then b1/g1, then bp (padded to H).
    wd_taps = jnp.transpose(wd_f, (0, 2, 1))[..., None]             # (NBLK,P,H,1)
    bp_pad = jnp.pad(bp, ((0, 0), (0, H - Bc), (0, 0)))             # (NBLK,H,1)
    vec = jnp.concatenate([wd_taps, b1g[:, None], bp_pad[:, None]], axis=1)

    # PReLU alphas as a single SMEM vector [a1_0, a2_0, a1_1, a2_1, ...].
    alphas = jnp.stack([a1.reshape(NBLK), a2.reshape(NBLK)], axis=1).reshape(2 * NBLK)
    return wmat, wm.astype(jnp.float32), vec, alphas


def _use_batch_grid():
    """True on 2-TensorCore chips (v7x): split the batch across the cores.
    On 1-TC generations (v5e/v6e) the fused gridless call is faster."""
    try:
        kind = jax.devices()[0].device_kind.lower()
    except Exception:
        return False
    return "v7" in kind


def separator_forward(x, params):
    """network[2:](layernorm_buffer): x (M, Bc, K) -> estimate_mask (M, CN, K)."""
    wmat, wm, vec, alphas = _pack_params(params)
    # Fuse batch into the lane axis: (M, Bc, K) -> (Bc, M*K).
    x_fused = jnp.transpose(x, (1, 0, 2)).reshape(Bc, MK)

    cost = pl.CostEstimate(
        flops=2 * MK * Bc * (2 * NBLK * H + CN),
        transcendentals=2 * NBLK * MK,                 # one rsqrt per cLN lane
        bytes_accessed=4 * (Bc * MK + CN * MK
                            + wmat.size + wm.size + vec.size + alphas.size))

    smem = pl.BlockSpec(memory_space=pltpu.MemorySpace.SMEM)
    if _use_batch_grid():
        # v7x: one 128-frame batch segment per grid step; "parallel" lets the
        # two TensorCores each take half the batch.  Weights are replicated
        # (index_map returns block 0, so they are DMA'd only once).
        def rep(a):
            return pl.BlockSpec(a.shape, lambda b: (0,) * a.ndim)
        call = pl.pallas_call(
            separator_kernel,
            out_shape=jax.ShapeDtypeStruct((CN, MK), jnp.float32),
            grid=(M,),
            in_specs=[pl.BlockSpec((Bc, K), lambda b: (0, b)),
                      rep(wmat), rep(wm), rep(vec), smem],
            out_specs=pl.BlockSpec((CN, K), lambda b: (0, b)),
            compiler_params=pltpu.CompilerParams(
                dimension_semantics=("parallel",)),
            cost_estimate=cost)
    else:
        # v5e/v6e: single gridless call, whole net resident in VMEM,
        # 256-lane-wide matmuls and a lane-dense (CN, M*K) output.
        vmem = pl.BlockSpec(memory_space=pltpu.MemorySpace.VMEM)
        call = pl.pallas_call(
            separator_kernel,
            out_shape=jax.ShapeDtypeStruct((CN, MK), jnp.float32),
            in_specs=[vmem, vmem, vmem, vmem, smem],
            out_specs=vmem,
            cost_estimate=cost)

    out_fused = call(x_fused, wmat, wm, vec, alphas)
    # (CN, M*K) -> (M, CN, K)
    return jnp.transpose(out_fused.reshape(CN, M, K), (1, 0, 2))


def reference(x, params):
    """Pure-JAX f32 reference of network[2:] for correctness checking."""
    w1, a1, g1, b1, wd, a2, g2, b2, wp, wm = params

    def cln(y, gamma, beta):
        mu = jnp.mean(y, axis=0, keepdims=True)
        var = jnp.mean((y - mu) ** 2, axis=0, keepdims=True)
        return gamma * (y - mu) * lax.rsqrt(var + EPS) + beta

    outs = []
    for m in range(M):
        h = x[m]
        for blk in range(NBLK):
            d = DILATIONS[blk]
            y = w1[blk] @ h
            y = jnp.where(y > 0, y, a1[blk] * y)
            y = cln(y, g1[blk], b1[blk])
            acc = jnp.zeros_like(y)
            for t in range(P):
                s = (P - 1 - t) * d
                xs = y if s == 0 else jnp.concatenate(
                    [jnp.zeros((H, s), jnp.float32), y[:, : K - s]], axis=1)
                acc = acc + wd[blk][:, t:t + 1] * xs
            z = jnp.where(acc > 0, acc, a2[blk] * acc)
            z = cln(z, g2[blk], b2[blk])
            h = h + wp[blk] @ z
        outs.append(wm @ h)
    return jnp.stack(outs)


def init_params(key):
    ks = jax.random.split(key, 5)
    w1 = 0.1 * jax.random.normal(ks[0], (NBLK, H, Bc), jnp.float32)
    wd = 0.1 * jax.random.normal(ks[1], (NBLK, H, P), jnp.float32)
    wp = 0.1 * jax.random.normal(ks[2], (NBLK, Bc, H), jnp.float32)
    wm = 0.1 * jax.random.normal(ks[3], (CN, Bc), jnp.float32)
    a1 = jnp.full((NBLK, 1, 1), 0.25, jnp.float32)   # PReLU default init
    a2 = jnp.full((NBLK, 1, 1), 0.25, jnp.float32)
    g1 = jnp.ones((NBLK, H, 1), jnp.float32)
    b1 = jnp.zeros((NBLK, H, 1), jnp.float32)
    g2 = jnp.ones((NBLK, H, 1), jnp.float32)
    b2 = jnp.zeros((NBLK, H, 1), jnp.float32)
    return (w1, a1, g1, b1, wd, a2, g2, b2, wp, wm), ks[4]


if __name__ == "__main__":
    params, xkey = init_params(jax.random.PRNGKey(0))
    layernorm_buffer = jax.random.normal(xkey, (M, Bc, K), jnp.float32)

    # The PReLU-as-maximum rewrite requires alpha <= 1 (holds for the 0.25 init).
    assert float(jnp.max(params[1])) <= 1.0 and float(jnp.max(params[5])) <= 1.0

    fwd = jax.jit(separator_forward)
    est_mask = jax.block_until_ready(fwd(layernorm_buffer, params))

    ref = jax.block_until_ready(reference(layernorm_buffer, params))
    # All-f32 kernel (bf16 casts removed per review); only reassociation /
    # fused-variance differences remain.
    np.testing.assert_allclose(np.asarray(est_mask), np.asarray(ref),
                               rtol=3e-3, atol=3e-3)
    assert est_mask.shape == (M, CN, K)
    print("KERNEL_OK")
</pallas_src>

<mosaic_0001>
module attributes {stable_mosaic.version = 11 : i64} {
  func.func @separator_kernel(%arg0: memref<16x256xf32, #tpu.memory_space<vmem>>, %arg1: memref<4x2x32x16xf32, #tpu.memory_space<vmem>>, %arg2: memref<32x16xf32, #tpu.memory_space<vmem>>, %arg3: memref<4x5x32x1xf32, #tpu.memory_space<vmem>>, %arg4: memref<8xf32, #tpu.memory_space<smem>>, %arg5: memref<32x256xf32, #tpu.memory_space<vmem>>) attributes {dimension_semantics = [], scalar_prefetch = 0 : i64, scratch_operands = 0 : i64, tpu.core_type = #tpu.core_type<tc>} {
    %c0 = arith.constant 0 : index
    %c0_0 = arith.constant 0 : index
    %0 = vector.load %arg0[%c0, %c0_0] : memref<16x256xf32, #tpu.memory_space<vmem>>, vector<16x256xf32>
    %1 = tpu.iota {dimensions = array<i32: 1>} : vector<1x256xi32>
    %c128_i32 = arith.constant 128 : i32
    %c0_i32 = arith.constant 0 : i32
    %2 = arith.cmpi eq, %c128_i32, %c0_i32 : i32
    %c1_i32 = arith.constant 1 : i32
    %3 = arith.select %2, %c1_i32, %c128_i32 : i32
    %4 = vector.broadcast %3 : i32 to vector<1x256xi32>
    %5 = arith.remsi %1, %4 : vector<1x256xi32>
    %c0_i32_1 = arith.constant 0 : i32
    %6 = vector.broadcast %c0_i32_1 : i32 to vector<1x256xi32>
    %7 = arith.cmpi ne, %5, %6 : vector<1x256xi32>
    %c0_i32_2 = arith.constant 0 : i32
    %8 = vector.broadcast %c0_i32_2 : i32 to vector<1x256xi32>
    %9 = arith.cmpi slt, %5, %8 : vector<1x256xi32>
    %c0_i32_3 = arith.constant 0 : i32
    %10 = arith.cmpi slt, %3, %c0_i32_3 : i32
    %11 = vector.broadcast %10 : i1 to vector<1x256xi1>
    %12 = vector.broadcast %11 : vector<1x256xi1> to vector<1x256xi1>
    %13 = arith.xori %9, %12 : vector<1x256xi1>
    %14 = arith.andi %13, %7 : vector<1x256xi1>
    %15 = vector.broadcast %3 : i32 to vector<1x256xi32>
    %16 = arith.addi %5, %15 : vector<1x256xi32>
    %17 = arith.select %14, %16, %5 : vector<1x256xi1>, vector<1x256xi32>
    %c1_i32_4 = arith.constant 1 : i32
    %18 = vector.broadcast %c1_i32_4 : i32 to vector<1x256xi32>
    %19 = arith.cmpi sge, %17, %18 : vector<1x256xi32>
    %20 = arith.extui %19 : vector<1x256xi1> to vector<1x256xi32>
    %21 = arith.sitofp %20 : vector<1x256xi32> to vector<1x256xf32>
    %c2_i32 = arith.constant 2 : i32
    %22 = vector.broadcast %c2_i32 : i32 to vector<1x256xi32>
    %23 = arith.cmpi sge, %17, %22 : vector<1x256xi32>
    %24 = arith.extui %23 : vector<1x256xi1> to vector<1x256xi32>
    %25 = arith.sitofp %24 : vector<1x256xi32> to vector<1x256xf32>
    %c4_i32 = arith.constant 4 : i32
    %26 = vector.broadcast %c4_i32 : i32 to vector<1x256xi32>
    %27 = arith.cmpi sge, %17, %26 : vector<1x256xi32>
    %28 = arith.extui %27 : vector<1x256xi1> to vector<1x256xi32>
    %29 = arith.sitofp %28 : vector<1x256xi32> to vector<1x256xf32>
    %c0_5 = arith.constant 0 : index
    %c0_6 = arith.constant 0 : index
    %c0_7 = arith.constant 0 : index
    %c0_8 = arith.constant 0 : index
    %30 = vector.load %arg1[%c0_5, %c0_6, %c0_7, %c0_8] : memref<4x2x32x16xf32, #tpu.memory_space<vmem>>, vector<1x1x32x16xf32>
    %31 = vector.shape_cast %30 : vector<1x1x32x16xf32> to vector<32x16xf32>
    %cst = arith.constant dense<0.000000e+00> : vector<32x256xf32>
    %32 = tpu.matmul %31, %0, %cst {dimension_numbers = #tpu.dot_dimension_numbers<[1], [0], [0], [1], [0, 0, 1, 1], [], []>} : vector<32x16xf32>, vector<16x256xf32>, vector<32x256xf32> -> vector<32x256xf32>
    %c0_9 = arith.constant 0 : index
    %33 = memref.load %arg4[%c0_9] : memref<8xf32, #tpu.memory_space<smem>>
    %34 = vector.broadcast %33 : f32 to vector<32x256xf32>
    %35 = arith.mulf %34, %32 : vector<32x256xf32>
    %36 = arith.maximumf %32, %35 : vector<32x256xf32>
    %cst_10 = arith.constant dense<0.000000e+00> : vector<256xf32>
    %37 = vector.multi_reduction <add>, %36, %cst_10 [0] : vector<32x256xf32> to vector<256xf32>
    %38 = vector.shape_cast %37 : vector<256xf32> to vector<1x256xf32>
    %39 = arith.mulf %36, %36 : vector<32x256xf32>
    %cst_11 = arith.constant dense<0.000000e+00> : vector<256xf32>
    %40 = vector.multi_reduction <add>, %39, %cst_11 [0] : vector<32x256xf32> to vector<256xf32>
    %41 = vector.shape_cast %40 : vector<256xf32> to vector<1x256xf32>
    %cst_12 = arith.constant 3.125000e-02 : f32
    %42 = vector.broadcast %cst_12 : f32 to vector<1x256xf32>
    %43 = arith.mulf %38, %42 : vector<1x256xf32>
    %cst_13 = arith.constant 3.125000e-02 : f32
    %44 = vector.broadcast %cst_13 : f32 to vector<1x256xf32>
    %45 = arith.mulf %41, %44 : vector<1x256xf32>
    %46 = arith.mulf %43, %43 : vector<1x256xf32>
    %47 = arith.subf %45, %46 : vector<1x256xf32>
    %cst_14 = arith.constant 0.000000e+00 : f32
    %48 = vector.broadcast %cst_14 : f32 to vector<1x256xf32>
    %49 = arith.maximumf %47, %48 : vector<1x256xf32>
    %50 = vector.broadcast %43 : vector<1x256xf32> to vector<32x256xf32>
    %51 = arith.subf %36, %50 : vector<32x256xf32>
    %cst_15 = arith.constant 9.99999993E-9 : f32
    %52 = vector.broadcast %cst_15 : f32 to vector<1x256xf32>
    %53 = arith.addf %49, %52 : vector<1x256xf32>
    %54 = math.rsqrt %53 : vector<1x256xf32>
    %55 = vector.broadcast %54 : vector<1x256xf32> to vector<32x256xf32>
    %56 = arith.mulf %51, %55 : vector<32x256xf32>
    %c0_16 = arith.constant 0 : index
    %c3 = arith.constant 3 : index
    %c0_17 = arith.constant 0 : index
    %c0_18 = arith.constant 0 : index
    %57 = vector.load %arg3[%c0_16, %c3, %c0_17, %c0_18] : memref<4x5x32x1xf32, #tpu.memory_space<vmem>>, vector<1x1x32x1xf32>
    %58 = vector.shape_cast %57 : vector<1x1x32x1xf32> to vector<32x1xf32>
    %59 = vector.broadcast %58 : vector<32x1xf32> to vector<32x256xf32>
    %60 = arith.addf %56, %59 : vector<32x256xf32>
    %c0_19 = arith.constant 0 : index
    %c2 = arith.constant 2 : index
    %c0_20 = arith.constant 0 : index
    %c0_21 = arith.constant 0 : index
    %61 = vector.load %arg3[%c0_19, %c2, %c0_20, %c0_21] : memref<4x5x32x1xf32, #tpu.memory_space<vmem>>, vector<1x1x32x1xf32>
    %62 = vector.shape_cast %61 : vector<1x1x32x1xf32> to vector<32x1xf32>
    %63 = vector.broadcast %62 : vector<32x1xf32> to vector<32x256xf32>
    %64 = arith.mulf %63, %60 : vector<32x256xf32>
    %cst_22 = arith.constant 0.000000e+00 : f32
    %65 = vector.broadcast %cst_22 : f32 to vector<32x2xf32>
    %66 = vector.extract_strided_slice %60 {offsets = [0, 0], sizes = [32, 254], strides = [1, 1]} : vector<32x256xf32> to vector<32x254xf32>
    %67 = tpu.concatenate %65, %66 in 1 : vector<32x2xf32>, vector<32x254xf32> -> vector<32x256xf32>
    %68 = vector.broadcast %25 : vector<1x256xf32> to vector<32x256xf32>
    %69 = arith.mulf %67, %68 : vector<32x256xf32>
    %c0_23 = arith.constant 0 : index
    %c0_24 = arith.constant 0 : index
    %c0_25 = arith.constant 0 : index
    %c0_26 = arith.constant 0 : index
    %70 = vector.load %arg3[%c0_23, %c0_24, %c0_25, %c0_26] : memref<4x5x32x1xf32, #tpu.memory_space<vmem>>, vector<1x1x32x1xf32>
    %71 = vector.shape_cast %70 : vector<1x1x32x1xf32> to vector<32x1xf32>
    %72 = vector.broadcast %71 : vector<32x1xf32> to vector<32x256xf32>
    %73 = arith.mulf %72, %69 : vector<32x256xf32>
    %74 = arith.addf %64, %73 : vector<32x256xf32>
    %cst_27 = arith.constant 0.000000e+00 : f32
    %75 = vector.broadcast %cst_27 : f32 to vector<32x1xf32>
    %76 = vector.extract_strided_slice %60 {offsets = [0, 0], sizes = [32, 255], strides = [1, 1]} : vector<32x256xf32> to vector<32x255xf32>
    %77 = tpu.concatenate %75, %76 in 1 : vector<32x1xf32>, vector<32x255xf32> -> vector<32x256xf32>
    %78 = vector.broadcast %21 : vector<1x256xf32> to vector<32x256xf32>
    %79 = arith.mulf %77, %78 : vector<32x256xf32>
    %c0_28 = arith.constant 0 : index
    %c1 = arith.constant 1 : index
    %c0_29 = arith.constant 0 : index
    %c0_30 = arith.constant 0 : index
    %80 = vector.load %arg3[%c0_28, %c1, %c0_29, %c0_30] : memref<4x5x32x1xf32, #tpu.memory_space<vmem>>, vector<1x1x32x1xf32>
    %81 = vector.shape_cast %80 : vector<1x1x32x1xf32> to vector<32x1xf32>
    %82 = vector.broadcast %81 : vector<32x1xf32> to vector<32x256xf32>
    %83 = arith.mulf %82, %79 : vector<32x256xf32>
    %84 = arith.addf %74, %83 : vector<32x256xf32>
    %c1_31 = arith.constant 1 : index
    %85 = memref.load %arg4[%c1_31] : memref<8xf32, #tpu.memory_space<smem>>
    %86 = vector.broadcast %85 : f32 to vector<32x256xf32>
    %87 = arith.mulf %86, %84 : vector<32x256xf32>
    %88 = arith.maximumf %84, %87 : vector<32x256xf32>
    %cst_32 = arith.constant dense<0.000000e+00> : vector<256xf32>
    %89 = vector.multi_reduction <add>, %88, %cst_32 [0] : vector<32x256xf32> to vector<256xf32>
    %90 = vector.shape_cast %89 : vector<256xf32> to vector<1x256xf32>
    %91 = arith.mulf %88, %88 : vector<32x256xf32>
    %cst_33 = arith.constant dense<0.000000e+00> : vector<256xf32>
    %92 = vector.multi_reduction <add>, %91, %cst_33 [0] : vector<32x256xf32> to vector<256xf32>
    %93 = vector.shape_cast %92 : vector<256xf32> to vector<1x256xf32>
    %cst_34 = arith.constant 3.125000e-02 : f32
    %94 = vector.broadcast %cst_34 : f32 to vector<1x256xf32>
    %95 = arith.mulf %90, %94 : vector<1x256xf32>
    %cst_35 = arith.constant 3.125000e-02 : f32
    %96 = vector.broadcast %cst_35 : f32 to vector<1x256xf32>
    %97 = arith.mulf %93, %96 : vector<1x256xf32>
    %98 = arith.mulf %95, %95 : vector<1x256xf32>
    %99 = arith.subf %97, %98 : vector<1x256xf32>
    %cst_36 = arith.constant 0.000000e+00 : f32
    %100 = vector.broadcast %cst_36 : f32 to vector<1x256xf32>
    %101 = arith.maximumf %99, %100 : vector<1x256xf32>
    %102 = vector.broadcast %95 : vector<1x256xf32> to vector<32x256xf32>
    %103 = arith.subf %88, %102 : vector<32x256xf32>
    %cst_37 = arith.constant 9.99999993E-9 : f32
    %104 = vector.broadcast %cst_37 : f32 to vector<1x256xf32>
    %105 = arith.addf %101, %104 : vector<1x256xf32>
    %106 = math.rsqrt %105 : vector<1x256xf32>
    %107 = vector.broadcast %106 : vector<1x256xf32> to vector<32x256xf32>
    %108 = arith.mulf %103, %107 : vector<32x256xf32>
    %c0_38 = arith.constant 0 : index
    %c1_39 = arith.constant 1 : index
    %c0_40 = arith.constant 0 : index
    %c0_41 = arith.constant 0 : index
    %109 = vector.load %arg1[%c0_38, %c1_39, %c0_40, %c0_41] : memref<4x2x32x16xf32, #tpu.memory_space<vmem>>, vector<1x1x32x16xf32>
    %110 = vector.shape_cast %109 : vector<1x1x32x16xf32> to vector<32x16xf32>
    %cst_42 = arith.constant dense<0.000000e+00> : vector<16x256xf32>
    %111 = tpu.matmul %110, %108, %cst_42 {dimension_numbers = #tpu.dot_dimension_numbers<[0], [0], [1], [1], [0, 1, 1, 1], [], []>} : vector<32x16xf32>, vector<32x256xf32>, vector<16x256xf32> -> vector<16x256xf32>
    %c0_43 = arith.constant 0 : index
    %c4 = arith.constant 4 : index
    %c0_44 = arith.constant 0 : index
    %c0_45 = arith.constant 0 : index
    %112 = vector.load %arg3[%c0_43, %c4, %c0_44, %c0_45] : memref<4x5x32x1xf32, #tpu.memory_space<vmem>>, vector<1x1x32x1xf32>
    %113 = vector.shape_cast %112 : vector<1x1x32x1xf32> to vector<32x1xf32>
    %114 = vector.extract_strided_slice %113 {offsets = [0, 0], sizes = [16, 1], strides = [1, 1]} : vector<32x1xf32> to vector<16x1xf32>
    %115 = arith.addf %0, %111 : vector<16x256xf32>
    %116 = vector.broadcast %114 : vector<16x1xf32> to vector<16x256xf32>
    %117 = arith.addf %115, %116 : vector<16x256xf32>
    %c1_46 = arith.constant 1 : index
    %c0_47 = arith.constant 0 : index
    %c0_48 = arith.constant 0 : index
    %c0_49 = arith.constant 0 : index
    %118 = vector.load %arg1[%c1_46, %c0_47, %c0_48, %c0_49] : memref<4x2x32x16xf32, #tpu.memory_space<vmem>>, vector<1x1x32x16xf32>
    %119 = vector.shape_cast %118 : vector<1x1x32x16xf32> to vector<32x16xf32>
    %cst_50 = arith.constant dense<0.000000e+00> : vector<32x256xf32>
    %120 = tpu.matmul %119, %117, %cst_50 {dimension_numbers = #tpu.dot_dimension_numbers<[1], [0], [0], [1], [0, 0, 1, 1], [], []>} : vector<32x16xf32>, vector<16x256xf32>, vector<32x256xf32> -> vector<32x256xf32>
    %c2_51 = arith.constant 2 : index
    %121 = memref.load %arg4[%c2_51] : memref<8xf32, #tpu.memory_space<smem>>
    %122 = vector.broadcast %121 : f32 to vector<32x256xf32>
    %123 = arith.mulf %122, %120 : vector<32x256xf32>
    %124 = arith.maximumf %120, %123 : vector<32x256xf32>
    %cst_52 = arith.constant dense<0.000000e+00> : vector<256xf32>
    %125 = vector.multi_reduction <add>, %124, %cst_52 [0] : vector<32x256xf32> to vector<256xf32>
    %126 = vector.shape_cast %125 : vector<256xf32> to vector<1x256xf32>
    %127 = arith.mulf %124, %124 : vector<32x256xf32>
    %cst_53 = arith.constant dense<0.000000e+00> : vector<256xf32>
    %128 = vector.multi_reduction <add>, %127, %cst_53 [0] : vector<32x256xf32> to vector<256xf32>
    %129 = vector.shape_cast %128 : vector<256xf32> to vector<1x256xf32>
    %cst_54 = arith.constant 3.125000e-02 : f32
    %130 = vector.broadcast %cst_54 : f32 to vector<1x256xf32>
    %131 = arith.mulf %126, %130 : vector<1x256xf32>
    %cst_55 = arith.constant 3.125000e-02 : f32
    %132 = vector.broadcast %cst_55 : f32 to vector<1x256xf32>
    %133 = arith.mulf %129, %132 : vector<1x256xf32>
    %134 = arith.mulf %131, %131 : vector<1x256xf32>
    %135 = arith.subf %133, %134 : vector<1x256xf32>
    %cst_56 = arith.constant 0.000000e+00 : f32
    %136 = vector.broadcast %cst_56 : f32 to vector<1x256xf32>
    %137 = arith.maximumf %135, %136 : vector<1x256xf32>
    %138 = vector.broadcast %131 : vector<1x256xf32> to vector<32x256xf32>
    %139 = arith.subf %124, %138 : vector<32x256xf32>
    %cst_57 = arith.constant 9.99999993E-9 : f32
    %140 = vector.broadcast %cst_57 : f32 to vector<1x256xf32>
    %141 = arith.addf %137, %140 : vector<1x256xf32>
    %142 = math.rsqrt %141 : vector<1x256xf32>
    %143 = vector.broadcast %142 : vector<1x256xf32> to vector<32x256xf32>
    %144 = arith.mulf %139, %143 : vector<32x256xf32>
    %c1_58 = arith.constant 1 : index
    %c3_59 = arith.constant 3 : index
    %c0_60 = arith.constant 0 : index
    %c0_61 = arith.constant 0 : index
    %145 = vector.load %arg3[%c1_58, %c3_59, %c0_60, %c0_61] : memref<4x5x32x1xf32, #tpu.memory_space<vmem>>, vector<1x1x32x1xf32>
    %146 = vector.shape_cast %145 : vector<1x1x32x1xf32> to vector<32x1xf32>
    %147 = vector.broadcast %146 : vector<32x1xf32> to vector<32x256xf32>
    %148 = arith.addf %144, %147 : vector<32x256xf32>
    %c1_62 = arith.constant 1 : index
    %c2_63 = arith.constant 2 : index
    %c0_64 = arith.constant 0 : index
    %c0_65 = arith.constant 0 : index
    %149 = vector.load %arg3[%c1_62, %c2_63, %c0_64, %c0_65] : memref<4x5x32x1xf32, #tpu.memory_space<vmem>>, vector<1x1x32x1xf32>
    %150 = vector.shape_cast %149 : vector<1x1x32x1xf32> to vector<32x1xf32>
    %151 = vector.broadcast %150 : vector<32x1xf32> to vector<32x256xf32>
    %152 = arith.mulf %151, %148 : vector<32x256xf32>
    %cst_66 = arith.constant 0.000000e+00 : f32
    %153 = vector.broadcast %cst_66 : f32 to vector<32x4xf32>
    %154 = vector.extract_strided_slice %148 {offsets = [0, 0], sizes = [32, 252], strides = [1, 1]} : vector<32x256xf32> to vector<32x252xf32>
    %155 = tpu.concatenate %153, %154 in 1 : vector<32x4xf32>, vector<32x252xf32> -> vector<32x256xf32>
    %156 = vector.broadcast %29 : vector<1x256xf32> to vector<32x256xf32>
    %157 = arith.mulf %155, %156 : vector<32x256xf32>
    %c1_67 = arith.constant 1 : index
    %c0_68 = arith.constant 0 : index
    %c0_69 = arith.constant 0 : index
    %c0_70 = arith.constant 0 : index
    %158 = vector.load %arg3[%c1_67, %c0_68, %c0_69, %c0_70] : memref<4x5x32x1xf32, #tpu.memory_space<vmem>>, vector<1x1x32x1xf32>
    %159 = vector.shape_cast %158 : vector<1x1x32x1xf32> to vector<32x1xf32>
    %160 = vector.broadcast %159 : vector<32x1xf32> to vector<32x256xf32>
    %161 = arith.mulf %160, %157 : vector<32x256xf32>
    %162 = arith.addf %152, %161 : vector<32x256xf32>
    %cst_71 = arith.constant 0.000000e+00 : f32
    %163 = vector.broadcast %cst_71 : f32 to vector<32x2xf32>
    %164 = vector.extract_strided_slice %148 {offsets = [0, 0], sizes = [32, 254], strides = [1, 1]} : vector<32x256xf32> to vector<32x254xf32>
    %165 = tpu.concatenate %163, %164 in 1 : vector<32x2xf32>, vector<32x254xf32> -> vector<32x256xf32>
    %166 = vector.broadcast %25 : vector<1x256xf32> to vector<32x256xf32>
    %167 = arith.mulf %165, %166 : vector<32x256xf32>
    %c1_72 = arith.constant 1 : index
    %c1_73 = arith.constant 1 : index
    %c0_74 = arith.constant 0 : index
    %c0_75 = arith.constant 0 : index
    %168 = vector.load %arg3[%c1_72, %c1_73, %c0_74, %c0_75] : memref<4x5x32x1xf32, #tpu.memory_space<vmem>>, vector<1x1x32x1xf32>
    %169 = vector.shape_cast %168 : vector<1x1x32x1xf32> to vector<32x1xf32>
    %170 = vector.broadcast %169 : vector<32x1xf32> to vector<32x256xf32>
    %171 = arith.mulf %170, %167 : vector<32x256xf32>
    %172 = arith.addf %162, %171 : vector<32x256xf32>
    %c3_76 = arith.constant 3 : index
    %173 = memref.load %arg4[%c3_76] : memref<8xf32, #tpu.memory_space<smem>>
    %174 = vector.broadcast %173 : f32 to vector<32x256xf32>
    %175 = arith.mulf %174, %172 : vector<32x256xf32>
    %176 = arith.maximumf %172, %175 : vector<32x256xf32>
    %cst_77 = arith.constant dense<0.000000e+00> : vector<256xf32>
    %177 = vector.multi_reduction <add>, %176, %cst_77 [0] : vector<32x256xf32> to vector<256xf32>
    %178 = vector.shape_cast %177 : vector<256xf32> to vector<1x256xf32>
    %179 = arith.mulf %176, %176 : vector<32x256xf32>
    %cst_78 = arith.constant dense<0.000000e+00> : vector<256xf32>
    %180 = vector.multi_reduction <add>, %179, %cst_78 [0] : vector<32x256xf32> to vector<256xf32>
    %181 = vector.shape_cast %180 : vector<256xf32> to vector<1x256xf32>
    %cst_79 = arith.constant 3.125000e-02 : f32
    %182 = vector.broadcast %cst_79 : f32 to vector<1x256xf32>
    %183 = arith.mulf %178, %182 : vector<1x256xf32>
    %cst_80 = arith.constant 3.125000e-02 : f32
    %184 = vector.broadcast %cst_80 : f32 to vector<1x256xf32>
    %185 = arith.mulf %181, %184 : vector<1x256xf32>
    %186 = arith.mulf %183, %183 : vector<1x256xf32>
    %187 = arith.subf %185, %186 : vector<1x256xf32>
    %cst_81 = arith.constant 0.000000e+00 : f32
    %188 = vector.broadcast %cst_81 : f32 to vector<1x256xf32>
    %189 = arith.maximumf %187, %188 : vector<1x256xf32>
    %190 = vector.broadcast %183 : vector<1x256xf32> to vector<32x256xf32>
    %191 = arith.subf %176, %190 : vector<32x256xf32>
    %cst_82 = arith.constant 9.99999993E-9 : f32
    %192 = vector.broadcast %cst_82 : f32 to vector<1x256xf32>
    %193 = arith.addf %189, %192 : vector<1x256xf32>
    %194 = math.rsqrt %193 : vector<1x256xf32>
    %195 = vector.broadcast %194 : vector<1x256xf32> to vector<32x256xf32>
    %196 = arith.mulf %191, %195 : vector<32x256xf32>
    %c1_83 = arith.constant 1 : index
    %c1_84 = arith.constant 1 : index
    %c0_85 = arith.constant 0 : index
    %c0_86 = arith.constant 0 : index
    %197 = vector.load %arg1[%c1_83, %c1_84, %c0_85, %c0_86] : memref<4x2x32x16xf32, #tpu.memory_space<vmem>>, vector<1x1x32x16xf32>
    %198 = vector.shape_cast %197 : vector<1x1x32x16xf32> to vector<32x16xf32>
    %cst_87 = arith.constant dense<0.000000e+00> : vector<16x256xf32>
    %199 = tpu.matmul %198, %196, %cst_87 {dimension_numbers = #tpu.dot_dimension_numbers<[0], [0], [1], [1], [0, 1, 1, 1], [], []>} : vector<32x16xf32>, vector<32x256xf32>, vector<16x256xf32> -> vector<16x256xf32>
    %c1_88 = arith.constant 1 : index
    %c4_89 = arith.constant 4 : index
    %c0_90 = arith.constant 0 : index
    %c0_91 = arith.constant 0 : index
    %200 = vector.load %arg3[%c1_88, %c4_89, %c0_90, %c0_91] : memref<4x5x32x1xf32, #tpu.memory_space<vmem>>, vector<1x1x32x1xf32>
    %201 = vector.shape_cast %200 : vector<1x1x32x1xf32> to vector<32x1xf32>
    %202 = vector.extract_strided_slice %201 {offsets = [0, 0], sizes = [16, 1], strides = [1, 1]} : vector<32x1xf32> to vector<16x1xf32>
    %203 = arith.addf %117, %199 : vector<16x256xf32>
    %204 = vector.broadcast %202 : vector<16x1xf32> to vector<16x256xf32>
    %205 = arith.addf %203, %204 : vector<16x256xf32>
    %c2_92 = arith.constant 2 : index
    %c0_93 = arith.constant 0 : index
    %c0_94 = arith.constant 0 : index
    %c0_95 = arith.constant 0 : index
    %206 = vector.load %arg1[%c2_92, %c0_93, %c0_94, %c0_95] : memref<4x2x32x16xf32, #tpu.memory_space<vmem>>, vector<1x1x32x16xf32>
    %207 = vector.shape_cast %206 : vector<1x1x32x16xf32> to vector<32x16xf32>
    %cst_96 = arith.constant dense<0.000000e+00> : vector<32x256xf32>
    %208 = tpu.matmul %207, %205, %cst_96 {dimension_numbers = #tpu.dot_dimension_numbers<[1], [0], [0], [1], [0, 0, 1, 1], [], []>} : vector<32x16xf32>, vector<16x256xf32>, vector<32x256xf32> -> vector<32x256xf32>
    %c4_97 = arith.constant 4 : index
    %209 = memref.load %arg4[%c4_97] : memref<8xf32, #tpu.memory_space<smem>>
    %210 = vector.broadcast %209 : f32 to vector<32x256xf32>
    %211 = arith.mulf %210, %208 : vector<32x256xf32>
    %212 = arith.maximumf %208, %211 : vector<32x256xf32>
    %cst_98 = arith.constant dense<0.000000e+00> : vector<256xf32>
    %213 = vector.multi_reduction <add>, %212, %cst_98 [0] : vector<32x256xf32> to vector<256xf32>
    %214 = vector.shape_cast %213 : vector<256xf32> to vector<1x256xf32>
    %215 = arith.mulf %212, %212 : vector<32x256xf32>
    %cst_99 = arith.constant dense<0.000000e+00> : vector<256xf32>
    %216 = vector.multi_reduction <add>, %215, %cst_99 [0] : vector<32x256xf32> to vector<256xf32>
    %217 = vector.shape_cast %216 : vector<256xf32> to vector<1x256xf32>
    %cst_100 = arith.constant 3.125000e-02 : f32
    %218 = vector.broadcast %cst_100 : f32 to vector<1x256xf32>
    %219 = arith.mulf %214, %218 : vector<1x256xf32>
    %cst_101 = arith.constant 3.125000e-02 : f32
    %220 = vector.broadcast %cst_101 : f32 to vector<1x256xf32>
    %221 = arith.mulf %217, %220 : vector<1x256xf32>
    %222 = arith.mulf %219, %219 : vector<1x256xf32>
    %223 = arith.subf %221, %222 : vector<1x256xf32>
    %cst_102 = arith.constant 0.000000e+00 : f32
    %224 = vector.broadcast %cst_102 : f32 to vector<1x256xf32>
    %225 = arith.maximumf %223, %224 : vector<1x256xf32>
    %226 = vector.broadcast %219 : vector<1x256xf32> to vector<32x256xf32>
    %227 = arith.subf %212, %226 : vector<32x256xf32>
    %cst_103 = arith.constant 9.99999993E-9 : f32
    %228 = vector.broadcast %cst_103 : f32 to vector<1x256xf32>
    %229 = arith.addf %225, %228 : vector<1x256xf32>
    %230 = math.rsqrt %229 : vector<1x256xf32>
    %231 = vector.broadcast %230 : vector<1x256xf32> to vector<32x256xf32>
    %232 = arith.mulf %227, %231 : vector<32x256xf32>
    %c2_104 = arith.constant 2 : index
    %c3_105 = arith.constant 3 : index
    %c0_106 = arith.constant 0 : index
    %c0_107 = arith.constant 0 : index
    %233 = vector.load %arg3[%c2_104, %c3_105, %c0_106, %c0_107] : memref<4x5x32x1xf32, #tpu.memory_space<vmem>>, vector<1x1x32x1xf32>
    %234 = vector.shape_cast %233 : vector<1x1x32x1xf32> to vector<32x1xf32>
    %235 = vector.broadcast %234 : vector<32x1xf32> to vector<32x256xf32>
    %236 = arith.addf %232, %235 : vector<32x256xf32>
    %c2_108 = arith.constant 2 : index
    %c2_109 = arith.constant 2 : index
    %c0_110 = arith.constant 0 : index
    %c0_111 = arith.constant 0 : index
    %237 = vector.load %arg3[%c2_108, %c2_109, %c0_110, %c0_111] : memref<4x5x32x1xf32, #tpu.memory_space<vmem>>, vector<1x1x32x1xf32>
    %238 = vector.shape_cast %237 : vector<1x1x32x1xf32> to vector<32x1xf32>
    %239 = vector.broadcast %238 : vector<32x1xf32> to vector<32x256xf32>
    %240 = arith.mulf %239, %236 : vector<32x256xf32>
    %cst_112 = arith.constant 0.000000e+00 : f32
    %241 = vector.broadcast %cst_112 : f32 to vector<32x2xf32>
    %242 = vector.extract_strided_slice %236 {offsets = [0, 0], sizes = [32, 254], strides = [1, 1]} : vector<32x256xf32> to vector<32x254xf32>
    %243 = tpu.concatenate %241, %242 in 1 : vector<32x2xf32>, vector<32x254xf32> -> vector<32x256xf32>
    %244 = vector.broadcast %25 : vector<1x256xf32> to vector<32x256xf32>
    %245 = arith.mulf %243, %244 : vector<32x256xf32>
    %c2_113 = arith.constant 2 : index
    %c0_114 = arith.constant 0 : index
    %c0_115 = arith.constant 0 : index
    %c0_116 = arith.constant 0 : index
    %246 = vector.load %arg3[%c2_113, %c0_114, %c0_115, %c0_116] : memref<4x5x32x1xf32, #tpu.memory_space<vmem>>, vector<1x1x32x1xf32>
    %247 = vector.shape_cast %246 : vector<1x1x32x1xf32> to vector<32x1xf32>
    %248 = vector.broadcast %247 : vector<32x1xf32> to vector<32x256xf32>
    %249 = arith.mulf %248, %245 : vector<32x256xf32>
    %250 = arith.addf %240, %249 : vector<32x256xf32>
    %cst_117 = arith.constant 0.000000e+00 : f32
    %251 = vector.broadcast %cst_117 : f32 to vector<32x1xf32>
    %252 = vector.extract_strided_slice %236 {offsets = [0, 0], sizes = [32, 255], strides = [1, 1]} : vector<32x256xf32> to vector<32x255xf32>
    %253 = tpu.concatenate %251, %252 in 1 : vector<32x1xf32>, vector<32x255xf32> -> vector<32x256xf32>
    %254 = vector.broadcast %21 : vector<1x256xf32> to vector<32x256xf32>
    %255 = arith.mulf %253, %254 : vector<32x256xf32>
    %c2_118 = arith.constant 2 : index
    %c1_119 = arith.constant 1 : index
    %c0_120 = arith.constant 0 : index
    %c0_121 = arith.constant 0 : index
    %256 = vector.load %arg3[%c2_118, %c1_119, %c0_120, %c0_121] : memref<4x5x32x1xf32, #tpu.memory_space<vmem>>, vector<1x1x32x1xf32>
    %257 = vector.shape_cast %256 : vector<1x1x32x1xf32> to vector<32x1xf32>
    %258 = vector.broadcast %257 : vector<32x1xf32> to vector<32x256xf32>
    %259 = arith.mulf %258, %255 : vector<32x256xf32>
    %260 = arith.addf %250, %259 : vector<32x256xf32>
    %c5 = arith.constant 5 : index
    %261 = memref.load %arg4[%c5] : memref<8xf32, #tpu.memory_space<smem>>
    %262 = vector.broadcast %261 : f32 to vector<32x256xf32>
    %263 = arith.mulf %262, %260 : vector<32x256xf32>
    %264 = arith.maximumf %260, %263 : vector<32x256xf32>
    %cst_122 = arith.constant dense<0.000000e+00> : vector<256xf32>
    %265 = vector.multi_reduction <add>, %264, %cst_122 [0] : vector<32x256xf32> to vector<256xf32>
    %266 = vector.shape_cast %265 : vector<256xf32> to vector<1x256xf32>
    %267 = arith.mulf %264, %264 : vector<32x256xf32>
    %cst_123 = arith.constant dense<0.000000e+00> : vector<256xf32>
    %268 = vector.multi_reduction <add>, %267, %cst_123 [0] : vector<32x256xf32> to vector<256xf32>
    %269 = vector.shape_cast %268 : vector<256xf32> to vector<1x256xf32>
    %cst_124 = arith.constant 3.125000e-02 : f32
    %270 = vector.broadcast %cst_124 : f32 to vector<1x256xf32>
    %271 = arith.mulf %266, %270 : vector<1x256xf32>
    %cst_125 = arith.constant 3.125000e-02 : f32
    %272 = vector.broadcast %cst_125 : f32 to vector<1x256xf32>
    %273 = arith.mulf %269, %272 : vector<1x256xf32>
    %274 = arith.mulf %271, %271 : vector<1x256xf32>
    %275 = arith.subf %273, %274 : vector<1x256xf32>
    %cst_126 = arith.constant 0.000000e+00 : f32
    %276 = vector.broadcast %cst_126 : f32 to vector<1x256xf32>
    %277 = arith.maximumf %275, %276 : vector<1x256xf32>
    %278 = vector.broadcast %271 : vector<1x256xf32> to vector<32x256xf32>
    %279 = arith.subf %264, %278 : vector<32x256xf32>
    %cst_127 = arith.constant 9.99999993E-9 : f32
    %280 = vector.broadcast %cst_127 : f32 to vector<1x256xf32>
    %281 = arith.addf %277, %280 : vector<1x256xf32>
    %282 = math.rsqrt %281 : vector<1x256xf32>
    %283 = vector.broadcast %282 : vector<1x256xf32> to vector<32x256xf32>
    %284 = arith.mulf %279, %283 : vector<32x256xf32>
    %c2_128 = arith.constant 2 : index
    %c1_129 = arith.constant 1 : index
    %c0_130 = arith.constant 0 : index
    %c0_131 = arith.constant 0 : index
    %285 = vector.load %arg1[%c2_128, %c1_129, %c0_130, %c0_131] : memref<4x2x32x16xf32, #tpu.memory_space<vmem>>, vector<1x1x32x16xf32>
    %286 = vector.shape_cast %285 : vector<1x1x32x16xf32> to vector<32x16xf32>
    %cst_132 = arith.constant dense<0.000000e+00> : vector<16x256xf32>
    %287 = tpu.matmul %286, %284, %cst_132 {dimension_numbers = #tpu.dot_dimension_numbers<[0], [0], [1], [1], [0, 1, 1, 1], [], []>} : vector<32x16xf32>, vector<32x256xf32>, vector<16x256xf32> -> vector<16x256xf32>
    %c2_133 = arith.constant 2 : index
    %c4_134 = arith.constant 4 : index
    %c0_135 = arith.constant 0 : index
    %c0_136 = arith.constant 0 : index
    %288 = vector.load %arg3[%c2_133, %c4_134, %c0_135, %c0_136] : memref<4x5x32x1xf32, #tpu.memory_space<vmem>>, vector<1x1x32x1xf32>
    %289 = vector.shape_cast %288 : vector<1x1x32x1xf32> to vector<32x1xf32>
    %290 = vector.extract_strided_slice %289 {offsets = [0, 0], sizes = [16, 1], strides = [1, 1]} : vector<32x1xf32> to vector<16x1xf32>
    %291 = arith.addf %205, %287 : vector<16x256xf32>
    %292 = vector.broadcast %290 : vector<16x1xf32> to vector<16x256xf32>
    %293 = arith.addf %291, %292 : vector<16x256xf32>
    %c3_137 = arith.constant 3 : index
    %c0_138 = arith.constant 0 : index
    %c0_139 = arith.constant 0 : index
    %c0_140 = arith.constant 0 : index
    %294 = vector.load %arg1[%c3_137, %c0_138, %c0_139, %c0_140] : memref<4x2x32x16xf32, #tpu.memory_space<vmem>>, vector<1x1x32x16xf32>
    %295 = vector.shape_cast %294 : vector<1x1x32x16xf32> to vector<32x16xf32>
    %cst_141 = arith.constant dense<0.000000e+00> : vector<32x256xf32>
    %296 = tpu.matmul %295, %293, %cst_141 {dimension_numbers = #tpu.dot_dimension_numbers<[1], [0], [0], [1], [0, 0, 1, 1], [], []>} : vector<32x16xf32>, vector<16x256xf32>, vector<32x256xf32> -> vector<32x256xf32>
    %c6 = arith.constant 6 : index
    %297 = memref.load %arg4[%c6] : memref<8xf32, #tpu.memory_space<smem>>
    %298 = vector.broadcast %297 : f32 to vector<32x256xf32>
    %299 = arith.mulf %298, %296 : vector<32x256xf32>
    %300 = arith.maximumf %296, %299 : vector<32x256xf32>
    %cst_142 = arith.constant dense<0.000000e+00> : vector<256xf32>
    %301 = vector.multi_reduction <add>, %300, %cst_142 [0] : vector<32x256xf32> to vector<256xf32>
    %302 = vector.shape_cast %301 : vector<256xf32> to vector<1x256xf32>
    %303 = arith.mulf %300, %300 : vector<32x256xf32>
    %cst_143 = arith.constant dense<0.000000e+00> : vector<256xf32>
    %304 = vector.multi_reduction <add>, %303, %cst_143 [0] : vector<32x256xf32> to vector<256xf32>
    %305 = vector.shape_cast %304 : vector<256xf32> to vector<1x256xf32>
    %cst_144 = arith.constant 3.125000e-02 : f32
    %306 = vector.broadcast %cst_144 : f32 to vector<1x256xf32>
    %307 = arith.mulf %302, %306 : vector<1x256xf32>
    %cst_145 = arith.constant 3.125000e-02 : f32
    %308 = vector.broadcast %cst_145 : f32 to vector<1x256xf32>
    %309 = arith.mulf %305, %308 : vector<1x256xf32>
    %310 = arith.mulf %307, %307 : vector<1x256xf32>
    %311 = arith.subf %309, %310 : vector<1x256xf32>
    %cst_146 = arith.constant 0.000000e+00 : f32
    %312 = vector.broadcast %cst_146 : f32 to vector<1x256xf32>
    %313 = arith.maximumf %311, %312 : vector<1x256xf32>
    %314 = vector.broadcast %307 : vector<1x256xf32> to vector<32x256xf32>
    %315 = arith.subf %300, %314 : vector<32x256xf32>
    %cst_147 = arith.constant 9.99999993E-9 : f32
    %316 = vector.broadcast %cst_147 : f32 to vector<1x256xf32>
    %317 = arith.addf %313, %316 : vector<1x256xf32>
    %318 = math.rsqrt %317 : vector<1x256xf32>
    %319 = vector.broadcast %318 : vector<1x256xf32> to vector<32x256xf32>
    %320 = arith.mulf %315, %319 : vector<32x256xf32>
    %c3_148 = arith.constant 3 : index
    %c3_149 = arith.constant 3 : index
    %c0_150 = arith.constant 0 : index
    %c0_151 = arith.constant 0 : index
    %321 = vector.load %arg3[%c3_148, %c3_149, %c0_150, %c0_151] : memref<4x5x32x1xf32, #tpu.memory_space<vmem>>, vector<1x1x32x1xf32>
    %322 = vector.shape_cast %321 : vector<1x1x32x1xf32> to vector<32x1xf32>
    %323 = vector.broadcast %322 : vector<32x1xf32> to vector<32x256xf32>
    %324 = arith.addf %320, %323 : vector<32x256xf32>
    %c3_152 = arith.constant 3 : index
    %c2_153 = arith.constant 2 : index
    %c0_154 = arith.constant 0 : index
    %c0_155 = arith.constant 0 : index
    %325 = vector.load %arg3[%c3_152, %c2_153, %c0_154, %c0_155] : memref<4x5x32x1xf32, #tpu.memory_space<vmem>>, vector<1x1x32x1xf32>
    %326 = vector.shape_cast %325 : vector<1x1x32x1xf32> to vector<32x1xf32>
    %327 = vector.broadcast %326 : vector<32x1xf32> to vector<32x256xf32>
    %328 = arith.mulf %327, %324 : vector<32x256xf32>
    %cst_156 = arith.constant 0.000000e+00 : f32
    %329 = vector.broadcast %cst_156 : f32 to vector<32x4xf32>
    %330 = vector.extract_strided_slice %324 {offsets = [0, 0], sizes = [32, 252], strides = [1, 1]} : vector<32x256xf32> to vector<32x252xf32>
    %331 = tpu.concatenate %329, %330 in 1 : vector<32x4xf32>, vector<32x252xf32> -> vector<32x256xf32>
    %332 = vector.broadcast %29 : vector<1x256xf32> to vector<32x256xf32>
    %333 = arith.mulf %331, %332 : vector<32x256xf32>
    %c3_157 = arith.constant 3 : index
    %c0_158 = arith.constant 0 : index
    %c0_159 = arith.constant 0 : index
    %c0_160 = arith.constant 0 : index
    %334 = vector.load %arg3[%c3_157, %c0_158, %c0_159, %c0_160] : memref<4x5x32x1xf32, #tpu.memory_space<vmem>>, vector<1x1x32x1xf32>
    %335 = vector.shape_cast %334 : vector<1x1x32x1xf32> to vector<32x1xf32>
    %336 = vector.broadcast %335 : vector<32x1xf32> to vector<32x256xf32>
    %337 = arith.mulf %336, %333 : vector<32x256xf32>
    %338 = arith.addf %328, %337 : vector<32x256xf32>
    %cst_161 = arith.constant 0.000000e+00 : f32
    %339 = vector.broadcast %cst_161 : f32 to vector<32x2xf32>
    %340 = vector.extract_strided_slice %324 {offsets = [0, 0], sizes = [32, 254], strides = [1, 1]} : vector<32x256xf32> to vector<32x254xf32>
    %341 = tpu.concatenate %339, %340 in 1 : vector<32x2xf32>, vector<32x254xf32> -> vector<32x256xf32>
    %342 = vector.broadcast %25 : vector<1x256xf32> to vector<32x256xf32>
    %343 = arith.mulf %341, %342 : vector<32x256xf32>
    %c3_162 = arith.constant 3 : index
    %c1_163 = arith.constant 1 : index
    %c0_164 = arith.constant 0 : index
    %c0_165 = arith.constant 0 : index
    %344 = vector.load %arg3[%c3_162, %c1_163, %c0_164, %c0_165] : memref<4x5x32x1xf32, #tpu.memory_space<vmem>>, vector<1x1x32x1xf32>
    %345 = vector.shape_cast %344 : vector<1x1x32x1xf32> to vector<32x1xf32>
    %346 = vector.broadcast %345 : vector<32x1xf32> to vector<32x256xf32>
    %347 = arith.mulf %346, %343 : vector<32x256xf32>
    %348 = arith.addf %338, %347 : vector<32x256xf32>
    %c7 = arith.constant 7 : index
    %349 = memref.load %arg4[%c7] : memref<8xf32, #tpu.memory_space<smem>>
    %350 = vector.broadcast %349 : f32 to vector<32x256xf32>
    %351 = arith.mulf %350, %348 : vector<32x256xf32>
    %352 = arith.maximumf %348, %351 : vector<32x256xf32>
    %cst_166 = arith.constant dense<0.000000e+00> : vector<256xf32>
    %353 = vector.multi_reduction <add>, %352, %cst_166 [0] : vector<32x256xf32> to vector<256xf32>
    %354 = vector.shape_cast %353 : vector<256xf32> to vector<1x256xf32>
    %355 = arith.mulf %352, %352 : vector<32x256xf32>
    %cst_167 = arith.constant dense<0.000000e+00> : vector<256xf32>
    %356 = vector.multi_reduction <add>, %355, %cst_167 [0] : vector<32x256xf32> to vector<256xf32>
    %357 = vector.shape_cast %356 : vector<256xf32> to vector<1x256xf32>
    %cst_168 = arith.constant 3.125000e-02 : f32
    %358 = vector.broadcast %cst_168 : f32 to vector<1x256xf32>
    %359 = arith.mulf %354, %358 : vector<1x256xf32>
    %cst_169 = arith.constant 3.125000e-02 : f32
    %360 = vector.broadcast %cst_169 : f32 to vector<1x256xf32>
    %361 = arith.mulf %357, %360 : vector<1x256xf32>
    %362 = arith.mulf %359, %359 : vector<1x256xf32>
    %363 = arith.subf %361, %362 : vector<1x256xf32>
    %cst_170 = arith.constant 0.000000e+00 : f32
    %364 = vector.broadcast %cst_170 : f32 to vector<1x256xf32>
    %365 = arith.maximumf %363, %364 : vector<1x256xf32>
    %366 = vector.broadcast %359 : vector<1x256xf32> to vector<32x256xf32>
    %367 = arith.subf %352, %366 : vector<32x256xf32>
    %cst_171 = arith.constant 9.99999993E-9 : f32
    %368 = vector.broadcast %cst_171 : f32 to vector<1x256xf32>
    %369 = arith.addf %365, %368 : vector<1x256xf32>
    %370 = math.rsqrt %369 : vector<1x256xf32>
    %371 = vector.broadcast %370 : vector<1x256xf32> to vector<32x256xf32>
    %372 = arith.mulf %367, %371 : vector<32x256xf32>
    %c3_172 = arith.constant 3 : index
    %c1_173 = arith.constant 1 : index
    %c0_174 = arith.constant 0 : index
    %c0_175 = arith.constant 0 : index
    %373 = vector.load %arg1[%c3_172, %c1_173, %c0_174, %c0_175] : memref<4x2x32x16xf32, #tpu.memory_space<vmem>>, vector<1x1x32x16xf32>
    %374 = vector.shape_cast %373 : vector<1x1x32x16xf32> to vector<32x16xf32>
    %cst_176 = arith.constant dense<0.000000e+00> : vector<16x256xf32>
    %375 = tpu.matmul %374, %372, %cst_176 {dimension_numbers = #tpu.dot_dimension_numbers<[0], [0], [1], [1], [0, 1, 1, 1], [], []>} : vector<32x16xf32>, vector<32x256xf32>, vector<16x256xf32> -> vector<16x256xf32>
    %c3_177 = arith.constant 3 : index
    %c4_178 = arith.constant 4 : index
    %c0_179 = arith.constant 0 : index
    %c0_180 = arith.constant 0 : index
    %376 = vector.load %arg3[%c3_177, %c4_178, %c0_179, %c0_180] : memref<4x5x32x1xf32, #tpu.memory_space<vmem>>, vector<1x1x32x1xf32>
    %377 = vector.shape_cast %376 : vector<1x1x32x1xf32> to vector<32x1xf32>
    %378 = vector.extract_strided_slice %377 {offsets = [0, 0], sizes = [16, 1], strides = [1, 1]} : vector<32x1xf32> to vector<16x1xf32>
    %379 = arith.addf %293, %375 : vector<16x256xf32>
    %380 = vector.broadcast %378 : vector<16x1xf32> to vector<16x256xf32>
    %381 = arith.addf %379, %380 : vector<16x256xf32>
    %c0_181 = arith.constant 0 : index
    %c0_182 = arith.constant 0 : index
    %382 = vector.load %arg2[%c0_181, %c0_182] : memref<32x16xf32, #tpu.memory_space<vmem>>, vector<32x16xf32>
    %cst_183 = arith.constant dense<0.000000e+00> : vector<32x256xf32>
    %383 = tpu.matmul %382, %381, %cst_183 {dimension_numbers = #tpu.dot_dimension_numbers<[1], [0], [0], [1], [0, 0, 1, 1], [], []>} : vector<32x16xf32>, vector<16x256xf32>, vector<32x256xf32> -> vector<32x256xf32>
    %c0_184 = arith.constant 0 : index
    %c0_185 = arith.constant 0 : index
    %384 = vector.load %arg5[%c0_184, %c0_185] : memref<32x256xf32, #tpu.memory_space<vmem>>, vector<32x256xf32>
    tpu.vector_store %arg5[%c0_184, %c0_185], %383 {strides = array<i32>} : memref<32x256xf32, #tpu.memory_space<vmem>>, vector<32x256xf32>,
    return
  }
}

</mosaic_0001>

<llo_original>
// kernel: div.1
$region0: #{div.1}
  #allocation0 [shape = 's32[1]{0}', space=sflag, size = 0x4, scoped, tag = 'scoped memory for div.1']
  %s0 = inlined_call_operand.vmem [shape: f32[4,32,1], index: 0, kind: input, shape index: {}]
  %s1 = inlined_call_operand.vmem [shape: f32[4,32,1], index: 1, kind: input, shape index: {}]
  %s2 = inlined_call_operand.vmem [shape: f32[4,32,1], index: 2, kind: output, shape index: {}]
  %v3 = vld [vmem:[%s0] sm:$0x1]
  %v4 = vld [vmem:[%s1] sm:$0x1]
  %5 = xla_tuple %v3, %v4
  %6 = xla_tuple %5
  %v7 = vrcp.pop %v4
  %v8 = vmul.f32 %v3, %v7
  %9 = xla_tuple %v8
  %10 = vst [vmem:[%s2] sm:$0x1] %v8
  %s11 = scalar_lea.vmem %s0, 1
  %v12 = vld [vmem:[%s11] sm:$0x1]
  %s13 = scalar_lea.vmem %s1, 1
  %v14 = vld [vmem:[%s13] sm:$0x1]
  %15 = xla_tuple %v12, %v14
  %16 = xla_tuple %15
  %v17 = vrcp.pop %v14
  %v18 = vmul.f32 %v12, %v17
  %19 = xla_tuple %v18
  %s20 = scalar_lea.vmem %s2, 1
  %21 = vst [vmem:[%s20] sm:$0x1] %v18
  %s22 = scalar_lea.vmem %s0, 2
  %v23 = vld [vmem:[%s22] sm:$0x1]
  %s24 = scalar_lea.vmem %s1, 2
  %v25 = vld [vmem:[%s24] sm:$0x1]
  %26 = xla_tuple %v23, %v25
  %27 = xla_tuple %26
  %v28 = vrcp.pop %v25
  %v29 = vmul.f32 %v23, %v28
  %30 = xla_tuple %v29
  %s31 = scalar_lea.vmem %s2, 2
  %32 = vst [vmem:[%s31] sm:$0x1] %v29
  %s33 = scalar_lea.vmem %s0, 3
  %v34 = vld [vmem:[%s33] sm:$0x1]
  %s35 = scalar_lea.vmem %s1, 3
  %v36 = vld [vmem:[%s35] sm:$0x1]
  %37 = xla_tuple %v34, %v36
  %38 = xla_tuple %37
  %v39 = vrcp.pop %v36
  %v40 = vmul.f32 %v34, %v39
  %41 = xla_tuple %v40
  %s42 = scalar_lea.vmem %s2, 3
  %43 = vst [vmem:[%s42] sm:$0x1] %v40

// kernel: separator_forward.1
$region0: #{separator_forward.1}
  #allocation0 [shape = 'u32[]', space=smem, size = 0x4, offset = 0x4, fixed_abs, tag = 'smem constant byte address 0x4 - core index']
  #allocation1 [shape = 'u32[144,128]{1,0:T(1,128)}', space=vmem, size = 0x12000, scoped, tag = 'internal scratch']
  %s0 = inlined_call_operand.vmem [shape: f32[16,256], index: 0, kind: input, shape index: {}]
  %s1 = inlined_call_operand.vmem [shape: f32[4,2,32,16], index: 1, kind: input, shape index: {}]
  %s2 = inlined_call_operand.vmem [shape: f32[32,16], index: 2, kind: input, shape index: {}]
  %s3 = inlined_call_operand.vmem [shape: f32[4,5,32,1], index: 3, kind: input, shape index: {}]
  %s4 = inlined_call_operand.vmem [shape: f32[8], index: 4, kind: input, shape index: {}]
  %s5 = inlined_call_operand.vmem [shape: f32[32,256], index: 5, kind: output, shape index: {}]
  %s6 = sld [smem:[#allocation0]]
  $region34: #{separator_forward.1} parent=0
    _
  %s8 = ssub.s32 1, %s6
  %s9 = scalar_select 0, %s8, %s6
  $region1: #{separator_forward.1} parent=0
    #allocation2 [shape = 'u8[512]{0}', space=smem, size = 0x200, scoped, tag = 'input window, operand 4, single buffered']
    #allocation3 [shape = 's32[1]{0}', space=sflag, size = 0x4, scoped, tag = 'scoped memory for separator_forward.1']
    %10 = vsyncpa [#allocation3], 0
    // Predicated region
    $region2: #{separator_forward.1} parent=1 // pred_check
      _
    $region3: #{separator_forward.1} parent=1 // pred_check_branch
      %12 = sbr.rel (0) target = $region5
    $region4: #{separator_forward.1} parent=1 // pred_region
      _
    $region5: #{separator_forward.1} parent=1 // pred_fallthru
      _
    // Predicated region
    $region6: #{separator_forward.1} parent=1 // pred_check
      _
    $region7: #{separator_forward.1} parent=1 // pred_check_branch
      %14 = sbr.rel (0) target = $region9
    $region8: #{separator_forward.1} parent=1 // pred_region
      _
    $region9: #{separator_forward.1} parent=1 // pred_fallthru
      _
    // Predicated region
    $region10: #{separator_forward.1} parent=1 // pred_check
      _
    $region11: #{separator_forward.1} parent=1 // pred_check_branch
      %16 = sbr.rel (0) target = $region13
    $region12: #{separator_forward.1} parent=1 // pred_region
      _
    $region13: #{separator_forward.1} parent=1 // pred_fallthru
      _
    // Predicated region
    $region14: #{separator_forward.1} parent=1 // pred_check
      _
    $region15: #{separator_forward.1} parent=1 // pred_check_branch
      %18 = sbr.rel (0) target = $region17
    $region16: #{separator_forward.1} parent=1 // pred_region
      _
    $region17: #{separator_forward.1} parent=1 // pred_fallthru
      _
    // Predicated region
    $region18: #{separator_forward.1} parent=1 // pred_check
      _
    $region19: #{separator_forward.1} parent=1 // pred_check_branch
      %20 = sbr.rel (0) target = $region21
    $region20: #{separator_forward.1} parent=1 // pred_region
      %s22 = ssub.s32 16, 16
      %23 = vsyncadd [#allocation3], %s22
      %s25 = sshll.u32 %s4, 4
      %s26 = int_to_ptr.vmem [resolvable:$true] %s25
      %28 = dma.vmem_to_smem %s26, 16, [#allocation2], [#allocation3]
    $region21: #{separator_forward.1} parent=1 // pred_fallthru
      _
    // Predicated region
    $region22: #{separator_forward.1} parent=1 // pred_check
      _
    $region23: #{separator_forward.1} parent=1 // pred_check_branch
      %30 = sbr.rel (0) target = $region25
    $region24: #{separator_forward.1} parent=1 // pred_region
      %31 = dma.done [#allocation3], 16
    $region25: #{separator_forward.1} parent=1 // pred_fallthru
      _
    %32 = sfence
    %v33 = vld [vmem:[%s0] sm:$0xff]
    %v34 = vld [vmem:[%s0 + $0x8] sm:$0xff]
    %v35 = vld [vmem:[%s0 + $0x10] sm:$0xff]
    %v36 = vld [vmem:[%s0 + $0x18] sm:$0xff]
    %v37 = vlaneseq
    %v38 = vand.u32 %v37, 127
    %v39 = vadd.s32 %v38, 128
    %vm40 = vcmp.lt.s32.totalorder %v38, 0
    %v41 = vsub.s32 0, %v38
    %v42 = vsel %vm40, %v41, %v38
    %v43 = vshrl.u32 %v42, 7
    %v44 = vand.u32 %v42, 127
    %v45 = vsub.s32 0, %v44
    %v46 = vsel %vm40, %v45, %v44
    %vm47 = vcmp.lt.s32.totalorder %v39, 0
    %v48 = vsub.s32 0, %v39
    %v49 = vsel %vm47, %v48, %v39
    %v50 = vshrl.u32 %v49, 7
    %v51 = vand.u32 %v49, 127
    %v52 = vsub.s32 0, %v51
    %v53 = vsel %vm47, %v52, %v51
    %vm54 = vcmp.ne.s32.totalorder %v46, 0
    %vm55 = vcmp.ne.s32.totalorder %v53, 0
    %vm56 = vcmp.lt.s32.totalorder %v46, 0
    %vm57 = vcmp.lt.s32.totalorder %v53, 0
    %vm58 = vmand %vm56, %vm54
    %vm59 = vmand %vm57, %vm55
    %v60 = vadd.s32 %v46, 128
    %v61 = vadd.s32 %v53, 128
    %v62 = vsel %vm58, %v60, %v46
    %v63 = vsel %vm59, %v61, %v53
    %vm64 = vcmp.ge.s32.totalorder %v62, 1
    %vm65 = vcmp.ge.s32.totalorder %v63, 1
    %v66 = vsel %vm64, 1, 0
    %v67 = vsel %vm65, 1, 0
    %v68 = vcvt.s32.f32 %v66
    %v69 = vcvt.s32.f32 %v67
    %vm70 = vcmp.ge.s32.totalorder %v62, 2
    %vm71 = vcmp.ge.s32.totalorder %v63, 2
    %v72 = vsel %vm70, 1, 0
    %v73 = vsel %vm71, 1, 0
    %v74 = vcvt.s32.f32 %v72
    %v75 = vcvt.s32.f32 %v73
    %vm76 = vcmp.ge.s32.totalorder %v62, 4
    %vm77 = vcmp.ge.s32.totalorder %v63, 4
    %v78 = vsel %vm76, 1, 0
    %v79 = vsel %vm77, 1, 0
    %v80 = vcvt.s32.f32 %v78
    %v81 = vcvt.s32.f32 %v79
    %v82 = vld [vmem:[%s1] sm:$0xff]
    %v83 = vld [vmem:[%s1 + $0x8] sm:$0xff]
    %v84 = vld [vmem:[%s1 + $0x10] sm:$0xff]
    %v85 = vld [vmem:[%s1 + $0x18] sm:$0xff]
    %vm86 = vcmask 130048
    %v88 = vsel %vm86, %v82, 0
    %v91 = vsel %vm86, %v83, 0
    %v94 = vsel %vm86, %v84, 0
    %v97 = vsel %vm86, %v85, 0
    %99 = vmatprep.subr.mxu0 0.0
    %100 = vmatpush1.msra.mxu0 0.0
    %101 = vmatprep.subr.mxu0 0.0
    %102 = vmatpush1.msra.mxu0 0.0
    %103 = vmatprep.subr.mxu0 0.0
    %104 = vmatpush1.msra.mxu0 0.0
    %105 = vmatprep.subr.mxu0 0.0
    %106 = vmatpush1.msra.mxu0 0.0
    %107 = vmatprep.subr.mxu0 0.0
    %108 = vmatpush1.msra.mxu0 0.0
    %109 = vmatprep.subr.mxu0 0.0
    %110 = vmatpush1.msra.mxu0 0.0
    %111 = vmatprep.subr.mxu0 0.0
    %112 = vmatpush1.msra.mxu0 0.0
    %113 = vmatprep.subr.mxu0 0.0
    %114 = vmatpush1.msra.mxu0 0.0
    %115 = vmatprep.subr.mxu0 0.0
    %116 = vmatpush1.msra.mxu0 0.0
    %117 = vmatprep.subr.mxu0 0.0
    %118 = vmatpush1.msra.mxu0 0.0
    %119 = vmatprep.subr.mxu0 0.0
    %120 = vmatpush1.msra.mxu0 0.0
    %121 = vmatprep.subr.mxu0 0.0
    %122 = vmatpush1.msra.mxu0 0.0
    %123 = vmatprep.subr.mxu0 0.0
    %124 = vmatpush1.msra.mxu0 0.0
    %125 = vmatprep.subr.mxu0 0.0
    %126 = vmatpush1.msra.mxu0 0.0
    %127 = vmatprep.subr.mxu0 %v36
    %128 = vmatpush1.msra.mxu0 %v35
    %129 = vmatprep.subr.mxu0 %v34
    %130 = vmatpush1.msra.mxu0 %v33
    %131 = vmatprep.subr.mxu0 0.0
    %132 = vmatpush2.msra.mxu0 0.0
    %133 = vmatprep.subr.mxu0 0.0
    %134 = vmatpush2.msra.mxu0 0.0
    %135 = vmatprep.subr.mxu0 0.0
    %136 = vmatpush2.msra.mxu0 0.0
    %137 = vmatprep.subr.mxu0 0.0
    %138 = vmatpush2.msra.mxu0 0.0
    %139 = vmatprep.subr.mxu0 0.0
    %140 = vmatpush2.msra.mxu0 0.0
    %141 = vmatprep.subr.mxu0 0.0
    %142 = vmatpush2.msra.mxu0 0.0
    %143 = vmatprep.subr.mxu0 0.0
    %144 = vmatpush2.msra.mxu0 0.0
    %145 = vmatprep.subr.mxu0 0.0
    %146 = vmatpush2.msra.mxu0 0.0
    %147 = vmatprep.subr.mxu0 0.0
    %148 = vmatpush2.msra.mxu0 0.0
    %149 = vmatprep.subr.mxu0 0.0
    %150 = vmatpush2.msra.mxu0 0.0
    %151 = vmatprep.subr.mxu0 0.0
    %152 = vmatpush2.msra.mxu0 0.0
    %153 = vmatprep.subr.mxu0 0.0
    %154 = vmatpush2.msra.mxu0 0.0
    %155 = vmatprep.subr.mxu0 0.0
    %156 = vmatpush2.msra.mxu0 0.0
    %157 = vmatprep.subr.mxu0 0.0
    %158 = vmatpush2.msra.mxu0 0.0
    %159 = vmatprep.subr.mxu0 0.0
    %160 = vmatpush2.msra.mxu0 0.0
    %161 = vmatprep.subr.mxu0 0.0
    %162 = vmatpush2.msra.mxu0 0.0
    %163 = vmatprep.mubr.f32.mxu0 0.0
    %164 = vmatmul.mubr.f32.gmra.mxu0 %v88
    %v165 = vpop.f32.mrf.mxu0
    %v166 = vadd.f32 0.0, %v165
    %v167 = vpop.f32.mrf.mxu0
    %v168 = vadd.f32 0.0, %v167
    %169 = vmatprep.mubr.f32.mxu0 0.0
    %170 = vmatmul.mubr.f32.gmra.mxu0 %v91
    %v171 = vpop.f32.mrf.mxu0
    %v172 = vadd.f32 0.0, %v171
    %v173 = vpop.f32.mrf.mxu0
    %v174 = vadd.f32 0.0, %v173
    %175 = vmatprep.mubr.f32.mxu0 0.0
    %176 = vmatmul.mubr.f32.gmra.mxu0 %v94
    %v177 = vpop.f32.mrf.mxu0
    %v178 = vadd.f32 0.0, %v177
    %v179 = vpop.f32.mrf.mxu0
    %v180 = vadd.f32 0.0, %v179
    %181 = vmatprep.mubr.f32.mxu0 0.0
    %182 = vmatmul.mubr.f32.gmra.mxu0 %v97
    %v183 = vpop.f32.mrf.mxu0
    %v184 = vadd.f32 0.0, %v183
    %v185 = vpop.f32.mrf.mxu0
    %v186 = vadd.f32 0.0, %v185
    %187 = vdwg.mxu0
    %s188 = sld [smem:[#allocation2]]
    %v189 = vstv %s188
    %v190 = vmul.f32 %v189, %v166
    %v191 = vmul.f32 %v189, %v168
    %v192 = vmul.f32 %v189, %v172
    %v193 = vmul.f32 %v189, %v174
    %v194 = vmul.f32 %v189, %v178
    %v195 = vmul.f32 %v189, %v180
    %v196 = vmul.f32 %v189, %v184
    %v197 = vmul.f32 %v189, %v186
    %v198 = vmax.f32 %v166, %v190
    %v199 = vmax.f32 %v168, %v191
    %v200 = vmax.f32 %v172, %v192
    %v201 = vmax.f32 %v174, %v193
    %v202 = vmax.f32 %v178, %v194
    %v203 = vmax.f32 %v180, %v195
    %v204 = vmax.f32 %v184, %v196
    %v205 = vmax.f32 %v186, %v197
    %v206 = vadd.f32 %v198, %v200
    %v207 = vadd.f32 %v206, %v202
    %v208 = vadd.f32 %v207, %v204
    %v209 = vrot.slane %v208, 4
    %v210 = vadd.f32 %v208, %v209
    %v211 = vrot.slane %v210, 2
    %v212 = vadd.f32 %v210, %v211
    %v213 = vrot.slane %v212, 1
    %v214 = vadd.f32 %v212, %v213
    %v215 = vadd.f32 %v199, %v201
    %v216 = vadd.f32 %v215, %v203
    %v217 = vadd.f32 %v216, %v205
    %v218 = vrot.slane %v217, 4
    %v219 = vadd.f32 %v217, %v218
    %v220 = vrot.slane %v219, 2
    %v221 = vadd.f32 %v219, %v220
    %v222 = vrot.slane %v221, 1
    %v223 = vadd.f32 %v221, %v222
    %v224 = vmul.f32 %v198, %v198
    %v225 = vmul.f32 %v199, %v199
    %v226 = vmul.f32 %v200, %v200
    %v227 = vmul.f32 %v201, %v201
    %v228 = vmul.f32 %v202, %v202
    %v229 = vmul.f32 %v203, %v203
    %v230 = vmul.f32 %v204, %v204
    %v231 = vmul.f32 %v205, %v205
    %v232 = vadd.f32 %v224, %v226
    %v233 = vadd.f32 %v232, %v228
    %v234 = vadd.f32 %v233, %v230
    %v235 = vrot.slane %v234, 4
    %v236 = vadd.f32 %v234, %v235
    %v237 = vrot.slane %v236, 2
    %v238 = vadd.f32 %v236, %v237
    %v239 = vrot.slane %v238, 1
    %v240 = vadd.f32 %v238, %v239
    %v241 = vadd.f32 %v225, %v227
    %v242 = vadd.f32 %v241, %v229
    %v243 = vadd.f32 %v242, %v231
    %v244 = vrot.slane %v243, 4
    %v245 = vadd.f32 %v243, %v244
    %v246 = vrot.slane %v245, 2
    %v247 = vadd.f32 %v245, %v246
    %v248 = vrot.slane %v247, 1
    %v249 = vadd.f32 %v247, %v248
    %v250 = vmul.f32 %v214, 0.03125
    %v251 = vmul.f32 %v223, 0.03125
    %v252 = vmul.f32 %v240, 0.03125
    %v253 = vmul.f32 %v249, 0.03125
    %v254 = vmul.f32 %v250, %v250
    %v255 = vmul.f32 %v251, %v251
    %v256 = vsub.f32 %v252, %v254
    %v257 = vsub.f32 %v253, %v255
    %v258 = vmax.f32 %v256, 0.0
    %v259 = vmax.f32 %v257, 0.0
    %v260 = vsub.f32 %v198, %v250
    %v261 = vsub.f32 %v199, %v251
    %v262 = vsub.f32 %v200, %v250
    %v263 = vsub.f32 %v201, %v251
    %v264 = vsub.f32 %v202, %v250
    %v265 = vsub.f32 %v203, %v251
    %v266 = vsub.f32 %v204, %v250
    %v267 = vsub.f32 %v205, %v251
    %v268 = vadd.f32 %v258, 1e-08
    %v269 = vadd.f32 %v259, 1e-08
    %v270 = vrsqrt.pop %v268
    %v271 = vrsqrt.pop %v269
    %v272 = vmul.f32 %v260, %v270
    %v273 = vmul.f32 %v261, %v271
    %v274 = vmul.f32 %v262, %v270
    %v275 = vmul.f32 %v263, %v271
    %v276 = vmul.f32 %v264, %v270
    %v277 = vmul.f32 %v265, %v271
    %v278 = vmul.f32 %v266, %v270
    %v279 = vmul.f32 %v267, %v271
    %s280 = scalar_lea.vmem %s3, 96
    %v281 = vld [vmem:[%s280] sm:$0xff]
    %v282 = vld [vmem:[%s280 + $0x8] sm:$0xff]
    %v283 = vld [vmem:[%s280 + $0x10] sm:$0xff]
    %v284 = vld [vmem:[%s280 + $0x18] sm:$0xff]
    %286 = vset.pattern.permute.xlu0 0
    %287 = vperm.xlu0 %286, %v281
    %v288 = vpop.permute.xlu0 %287
    %291 = vset.pattern.permute.xlu0 0
    %292 = vperm.xlu0 %291, %v282
    %v293 = vpop.permute.xlu0 %292
    %296 = vset.pattern.permute.xlu0 0
    %297 = vperm.xlu0 %296, %v283
    %v298 = vpop.permute.xlu0 %297
    %301 = vset.pattern.permute.xlu0 0
    %302 = vperm.xlu0 %301, %v284
    %v303 = vpop.permute.xlu0 %302
    %v305 = vadd.f32 %v272, %v288
    %v306 = vadd.f32 %v273, %v288
    %v307 = vadd.f32 %v274, %v293
    %v308 = vadd.f32 %v275, %v293
    %v309 = vadd.f32 %v276, %v298
    %v310 = vadd.f32 %v277, %v298
    %v311 = vadd.f32 %v278, %v303
    %v312 = vadd.f32 %v279, %v303
    %s313 = scalar_lea.vmem %s3, 64
    %v314 = vld [vmem:[%s313] sm:$0xff]
    %v315 = vld [vmem:[%s313 + $0x8] sm:$0xff]
    %v316 = vld [vmem:[%s313 + $0x10] sm:$0xff]
    %v317 = vld [vmem:[%s313 + $0x18] sm:$0xff]
    %319 = vset.pattern.permute.xlu0 0
    %320 = vperm.xlu0 %319, %v314
    %v321 = vpop.permute.xlu0 %320
    %324 = vset.pattern.permute.xlu0 0
    %325 = vperm.xlu0 %324, %v315
    %v326 = vpop.permute.xlu0 %325
    %329 = vset.pattern.permute.xlu0 0
    %330 = vperm.xlu0 %329, %v316
    %v331 = vpop.permute.xlu0 %330
    %334 = vset.pattern.permute.xlu0 0
    %335 = vperm.xlu0 %334, %v317
    %v336 = vpop.permute.xlu0 %335
    %v338 = vmul.f32 %v321, %v305
    %v339 = vmul.f32 %v321, %v306
    %v340 = vmul.f32 %v326, %v307
    %v341 = vmul.f32 %v326, %v308
    %v342 = vmul.f32 %v331, %v309
    %v343 = vmul.f32 %v331, %v310
    %v344 = vmul.f32 %v336, %v311
    %v345 = vmul.f32 %v336, %v312
    %354 = vrot.lane.b32.xlu0 %v305, 2
    %v355 = vpop.permute.xlu0 %354
    %356 = vrot.lane.b32.xlu0 %v306, 2
    %v357 = vpop.permute.xlu0 %356
    %358 = vrot.lane.b32.xlu0 %v307, 2
    %v359 = vpop.permute.xlu0 %358
    %360 = vrot.lane.b32.xlu0 %v308, 2
    %v361 = vpop.permute.xlu0 %360
    %362 = vrot.lane.b32.xlu0 %v309, 2
    %v363 = vpop.permute.xlu0 %362
    %364 = vrot.lane.b32.xlu0 %v310, 2
    %v365 = vpop.permute.xlu0 %364
    %366 = vrot.lane.b32.xlu0 %v311, 2
    %v367 = vpop.permute.xlu0 %366
    %368 = vrot.lane.b32.xlu0 %v312, 2
    %v369 = vpop.permute.xlu0 %368
    %vm370 = vcmask 15360
    %v371 = vsel %vm370, %v355, %v357
    %v372 = vsel %vm370, %v359, %v361
    %v373 = vsel %vm370, %v363, %v365
    %v374 = vsel %vm370, %v367, %v369
    %v383 = vsel %vm370, 0.0, %v355
    %v384 = vsel %vm370, 0.0, %v359
    %v385 = vsel %vm370, 0.0, %v363
    %v386 = vsel %vm370, 0.0, %v367
    %v387 = vmul.f32 %v383, %v74
    %v388 = vmul.f32 %v371, %v75
    %v389 = vmul.f32 %v384, %v74
    %v390 = vmul.f32 %v372, %v75
    %v391 = vmul.f32 %v385, %v74
    %v392 = vmul.f32 %v373, %v75
    %v393 = vmul.f32 %v386, %v74
    %v394 = vmul.f32 %v374, %v75
    %v395 = vld [vmem:[%s3] sm:$0xff]
    %v396 = vld [vmem:[%s3 + $0x8] sm:$0xff]
    %v397 = vld [vmem:[%s3 + $0x10] sm:$0xff]
    %v398 = vld [vmem:[%s3 + $0x18] sm:$0xff]
    %400 = vset.pattern.permute.xlu0 0
    %401 = vperm.xlu0 %400, %v395
    %v402 = vpop.permute.xlu0 %401
    %405 = vset.pattern.permute.xlu0 0
    %406 = vperm.xlu0 %405, %v396
    %v407 = vpop.permute.xlu0 %406
    %410 = vset.pattern.permute.xlu0 0
    %411 = vperm.xlu0 %410, %v397
    %v412 = vpop.permute.xlu0 %411
    %415 = vset.pattern.permute.xlu0 0
    %416 = vperm.xlu0 %415, %v398
    %v417 = vpop.permute.xlu0 %416
    %v419 = vmul.f32 %v402, %v387
    %v420 = vmul.f32 %v402, %v388
    %v421 = vmul.f32 %v407, %v389
    %v422 = vmul.f32 %v407, %v390
    %v423 = vmul.f32 %v412, %v391
    %v424 = vmul.f32 %v412, %v392
    %v425 = vmul.f32 %v417, %v393
    %v426 = vmul.f32 %v417, %v394
    %v427 = vadd.f32 %v338, %v419
    %v428 = vadd.f32 %v339, %v420
    %v429 = vadd.f32 %v340, %v421
    %v430 = vadd.f32 %v341, %v422
    %v431 = vadd.f32 %v342, %v423
    %v432 = vadd.f32 %v343, %v424
    %v433 = vadd.f32 %v344, %v425
    %v434 = vadd.f32 %v345, %v426
    %435 = vrot.lane.b32.xlu0 %v305, 1
    %v436 = vpop.permute.xlu0 %435
    %437 = vrot.lane.b32.xlu0 %v306, 1
    %v438 = vpop.permute.xlu0 %437
    %439 = vrot.lane.b32.xlu0 %v307, 1
    %v440 = vpop.permute.xlu0 %439
    %441 = vrot.lane.b32.xlu0 %v308, 1
    %v442 = vpop.permute.xlu0 %441
    %443 = vrot.lane.b32.xlu0 %v309, 1
    %v444 = vpop.permute.xlu0 %443
    %445 = vrot.lane.b32.xlu0 %v310, 1
    %v446 = vpop.permute.xlu0 %445
    %447 = vrot.lane.b32.xlu0 %v311, 1
    %v448 = vpop.permute.xlu0 %447
    %449 = vrot.lane.b32.xlu0 %v312, 1
    %v450 = vpop.permute.xlu0 %449
    %vm451 = vcmask 7168
    %v452 = vsel %vm451, %v436, %v438
    %v453 = vsel %vm451, %v440, %v442
    %v454 = vsel %vm451, %v444, %v446
    %v455 = vsel %vm451, %v448, %v450
    %v464 = vsel %vm451, 0.0, %v436
    %v465 = vsel %vm451, 0.0, %v440
    %v466 = vsel %vm451, 0.0, %v444
    %v467 = vsel %vm451, 0.0, %v448
    %v468 = vmul.f32 %v464, %v68
    %v469 = vmul.f32 %v452, %v69
    %v470 = vmul.f32 %v465, %v68
    %v471 = vmul.f32 %v453, %v69
    %v472 = vmul.f32 %v466, %v68
    %v473 = vmul.f32 %v454, %v69
    %v474 = vmul.f32 %v467, %v68
    %v475 = vmul.f32 %v455, %v69
    %s476 = scalar_lea.vmem %s3, 32
    %v477 = vld [vmem:[%s476] sm:$0xff]
    %v478 = vld [vmem:[%s476 + $0x8] sm:$0xff]
    %v479 = vld [vmem:[%s476 + $0x10] sm:$0xff]
    %v480 = vld [vmem:[%s476 + $0x18] sm:$0xff]
    %482 = vset.pattern.permute.xlu0 0
    %483 = vperm.xlu0 %482, %v477
    %v484 = vpop.permute.xlu0 %483
    %487 = vset.pattern.permute.xlu0 0
    %488 = vperm.xlu0 %487, %v478
    %v489 = vpop.permute.xlu0 %488
    %492 = vset.pattern.permute.xlu0 0
    %493 = vperm.xlu0 %492, %v479
    %v494 = vpop.permute.xlu0 %493
    %497 = vset.pattern.permute.xlu0 0
    %498 = vperm.xlu0 %497, %v480
    %v499 = vpop.permute.xlu0 %498
    %v501 = vmul.f32 %v484, %v468
    %v502 = vmul.f32 %v484, %v469
    %v503 = vmul.f32 %v489, %v470
    %v504 = vmul.f32 %v489, %v471
    %v505 = vmul.f32 %v494, %v472
    %v506 = vmul.f32 %v494, %v473
    %v507 = vmul.f32 %v499, %v474
    %v508 = vmul.f32 %v499, %v475
    %v509 = vadd.f32 %v427, %v501
    %v510 = vadd.f32 %v428, %v502
    %v511 = vadd.f32 %v429, %v503
    %v512 = vadd.f32 %v430, %v504
    %v513 = vadd.f32 %v431, %v505
    %v514 = vadd.f32 %v432, %v506
    %v515 = vadd.f32 %v433, %v507
    %v516 = vadd.f32 %v434, %v508
    %s517 = sld [smem:[#allocation2 + $0x1]]
    %v518 = vstv %s517
    %v519 = vmul.f32 %v518, %v509
    %v520 = vmul.f32 %v518, %v510
    %v521 = vmul.f32 %v518, %v511
    %v522 = vmul.f32 %v518, %v512
    %v523 = vmul.f32 %v518, %v513
    %v524 = vmul.f32 %v518, %v514
    %v525 = vmul.f32 %v518, %v515
    %v526 = vmul.f32 %v518, %v516
    %v527 = vmax.f32 %v509, %v519
    %v528 = vmax.f32 %v510, %v520
    %v529 = vmax.f32 %v511, %v521
    %v530 = vmax.f32 %v512, %v522
    %v531 = vmax.f32 %v513, %v523
    %v532 = vmax.f32 %v514, %v524
    %v533 = vmax.f32 %v515, %v525
    %v534 = vmax.f32 %v516, %v526
    %v535 = vadd.f32 %v527, %v529
    %v536 = vadd.f32 %v535, %v531
    %v537 = vadd.f32 %v536, %v533
    %v538 = vrot.slane %v537, 4
    %v539 = vadd.f32 %v537, %v538
    %v540 = vrot.slane %v539, 2
    %v541 = vadd.f32 %v539, %v540
    %v542 = vrot.slane %v541, 1
    %v543 = vadd.f32 %v541, %v542
    %v544 = vadd.f32 %v528, %v530
    %v545 = vadd.f32 %v544, %v532
    %v546 = vadd.f32 %v545, %v534
    %v547 = vrot.slane %v546, 4
    %v548 = vadd.f32 %v546, %v547
    %v549 = vrot.slane %v548, 2
    %v550 = vadd.f32 %v548, %v549
    %v551 = vrot.slane %v550, 1
    %v552 = vadd.f32 %v550, %v551
    %v553 = vmul.f32 %v527, %v527
    %v554 = vmul.f32 %v528, %v528
    %v555 = vmul.f32 %v529, %v529
    %v556 = vmul.f32 %v530, %v530
    %v557 = vmul.f32 %v531, %v531
    %v558 = vmul.f32 %v532, %v532
    %v559 = vmul.f32 %v533, %v533
    %v560 = vmul.f32 %v534, %v534
    %v561 = vadd.f32 %v553, %v555
    %v562 = vadd.f32 %v561, %v557
    %v563 = vadd.f32 %v562, %v559
    %v564 = vrot.slane %v563, 4
    %v565 = vadd.f32 %v563, %v564
    %v566 = vrot.slane %v565, 2
    %v567 = vadd.f32 %v565, %v566
    %v568 = vrot.slane %v567, 1
    %v569 = vadd.f32 %v567, %v568
    %v570 = vadd.f32 %v554, %v556
    %v571 = vadd.f32 %v570, %v558
    %v572 = vadd.f32 %v571, %v560
    %v573 = vrot.slane %v572, 4
    %v574 = vadd.f32 %v572, %v573
    %v575 = vrot.slane %v574, 2
    %v576 = vadd.f32 %v574, %v575
    %v577 = vrot.slane %v576, 1
    %v578 = vadd.f32 %v576, %v577
    %v579 = vmul.f32 %v543, 0.03125
    %v580 = vmul.f32 %v552, 0.03125
    %v581 = vmul.f32 %v569, 0.03125
    %v582 = vmul.f32 %v578, 0.03125
    %v583 = vmul.f32 %v579, %v579
    %v584 = vmul.f32 %v580, %v580
    %v585 = vsub.f32 %v581, %v583
    %v586 = vsub.f32 %v582, %v584
    %v587 = vmax.f32 %v585, 0.0
    %v588 = vmax.f32 %v586, 0.0
    %v589 = vsub.f32 %v527, %v579
    %v590 = vsub.f32 %v528, %v580
    %v591 = vsub.f32 %v529, %v579
    %v592 = vsub.f32 %v530, %v580
    %v593 = vsub.f32 %v531, %v579
    %v594 = vsub.f32 %v532, %v580
    %v595 = vsub.f32 %v533, %v579
    %v596 = vsub.f32 %v534, %v580
    %v597 = vadd.f32 %v587, 1e-08
    %v598 = vadd.f32 %v588, 1e-08
    %v599 = vrsqrt.pop %v597
    %v600 = vrsqrt.pop %v598
    %v601 = vmul.f32 %v589, %v599
    %v602 = vmul.f32 %v590, %v600
    %v603 = vmul.f32 %v591, %v599
    %v604 = vmul.f32 %v592, %v600
    %v605 = vmul.f32 %v593, %v599
    %v606 = vmul.f32 %v594, %v600
    %v607 = vmul.f32 %v595, %v599
    %v608 = vmul.f32 %v596, %v600
    %s609 = scalar_lea.vmem %s1, 32
    %v610 = vld [vmem:[%s609] sm:$0xff]
    %v611 = vld [vmem:[%s609 + $0x8] sm:$0xff]
    %v612 = vld [vmem:[%s609 + $0x10] sm:$0xff]
    %v613 = vld [vmem:[%s609 + $0x18] sm:$0xff]
    %614 = vxpose.xlu0.b32.start [1/16] %v610, 128
    %615 = vxpose.xlu0.b32.cont [2/16] %v611, 128
    %616 = vxpose.xlu0.b32.cont [3/16] %v612, 128
    %617 = vxpose.xlu0.b32.cont [4/16] %v613, 128
    %618 = vxpose.xlu0.b32.cont [5/16] 0.0, 128
    %619 = vxpose.xlu0.b32.cont [6/16] 0.0, 128
    %620 = vxpose.xlu0.b32.cont [7/16] 0.0, 128
    %621 = vxpose.xlu0.b32.cont [8/16] 0.0, 128
    %622 = vxpose.xlu0.b32.cont [9/16] 0.0, 128
    %623 = vxpose.xlu0.b32.cont [10/16] 0.0, 128
    %624 = vxpose.xlu0.b32.cont [11/16] 0.0, 128
    %625 = vxpose.xlu0.b32.cont [12/16] 0.0, 128
    %626 = vxpose.xlu0.b32.cont [13/16] 0.0, 128
    %627 = vxpose.xlu0.b32.cont [14/16] 0.0, 128
    %628 = vxpose.xlu0.b32.cont [15/16] 0.0, 128
    %629 = vxpose.xlu0.b32.end [16/16] 0.0, 128
    %v630 = vpop.trf.xlu0
    %v631 = vpop.trf.xlu0
    %v632 = vpop.trf.xlu0
    %v633 = vpop.trf.xlu0
    %v634 = vpop.trf.xlu0
    %v635 = vpop.trf.xlu0
    %v636 = vpop.trf.xlu0
    %v637 = vpop.trf.xlu0
    %v638 = vpop.trf.xlu0
    %v639 = vpop.trf.xlu0
    %v640 = vpop.trf.xlu0
    %v641 = vpop.trf.xlu0
    %v642 = vpop.trf.xlu0
    %v643 = vpop.trf.xlu0
    %v644 = vpop.trf.xlu0
    %v645 = vpop.trf.xlu0
    %vm646 = vcmask 261120
    %v648 = vsel %vm646, %v630, 0
    %v651 = vsel %vm646, %v631, 0
    %653 = vmatprep.subr.mxu0 0.0
    %654 = vmatpush1.msra.mxu0 0.0
    %655 = vmatprep.subr.mxu0 0.0
    %656 = vmatpush1.msra.mxu0 0.0
    %657 = vmatprep.subr.mxu0 0.0
    %658 = vmatpush1.msra.mxu0 0.0
    %659 = vmatprep.subr.mxu0 0.0
    %660 = vmatpush1.msra.mxu0 0.0
    %661 = vmatprep.subr.mxu0 0.0
    %662 = vmatpush1.msra.mxu0 0.0
    %663 = vmatprep.subr.mxu0 0.0
    %664 = vmatpush1.msra.mxu0 0.0
    %665 = vmatprep.subr.mxu0 0.0
    %666 = vmatpush1.msra.mxu0 0.0
    %667 = vmatprep.subr.mxu0 0.0
    %668 = vmatpush1.msra.mxu0 0.0
    %669 = vmatprep.subr.mxu0 0.0
    %670 = vmatpush1.msra.mxu0 0.0
    %671 = vmatprep.subr.mxu0 0.0
    %672 = vmatpush1.msra.mxu0 0.0
    %673 = vmatprep.subr.mxu0 0.0
    %674 = vmatpush1.msra.mxu0 0.0
    %675 = vmatprep.subr.mxu0 0.0
    %676 = vmatpush1.msra.mxu0 0.0
    %677 = vmatprep.subr.mxu0 %v608
    %678 = vmatpush1.msra.mxu0 %v607
    %679 = vmatprep.subr.mxu0 %v606
    %680 = vmatpush1.msra.mxu0 %v605
    %681 = vmatprep.subr.mxu0 %v604
    %682 = vmatpush1.msra.mxu0 %v603
    %683 = vmatprep.subr.mxu0 %v602
    %684 = vmatpush1.msra.mxu0 %v601
    %685 = vmatprep.subr.mxu0 0.0
    %686 = vmatpush2.msra.mxu0 0.0
    %687 = vmatprep.subr.mxu0 0.0
    %688 = vmatpush2.msra.mxu0 0.0
    %689 = vmatprep.subr.mxu0 0.0
    %690 = vmatpush2.msra.mxu0 0.0
    %691 = vmatprep.subr.mxu0 0.0
    %692 = vmatpush2.msra.mxu0 0.0
    %693 = vmatprep.subr.mxu0 0.0
    %694 = vmatpush2.msra.mxu0 0.0
    %695 = vmatprep.subr.mxu0 0.0
    %696 = vmatpush2.msra.mxu0 0.0
    %697 = vmatprep.subr.mxu0 0.0
    %698 = vmatpush2.msra.mxu0 0.0
    %699 = vmatprep.subr.mxu0 0.0
    %700 = vmatpush2.msra.mxu0 0.0
    %701 = vmatprep.subr.mxu0 0.0
    %702 = vmatpush2.msra.mxu0 0.0
    %703 = vmatprep.subr.mxu0 0.0
    %704 = vmatpush2.msra.mxu0 0.0
    %705 = vmatprep.subr.mxu0 0.0
    %706 = vmatpush2.msra.mxu0 0.0
    %707 = vmatprep.subr.mxu0 0.0
    %708 = vmatpush2.msra.mxu0 0.0
    %709 = vmatprep.subr.mxu0 0.0
    %710 = vmatpush2.msra.mxu0 0.0
    %711 = vmatprep.subr.mxu0 0.0
    %712 = vmatpush2.msra.mxu0 0.0
    %713 = vmatprep.subr.mxu0 0.0
    %714 = vmatpush2.msra.mxu0 0.0
    %715 = vmatprep.subr.mxu0 0.0
    %716 = vmatpush2.msra.mxu0 0.0
    %717 = vmatprep.mubr.f32.mxu0 0.0
    %718 = vmatmul.mubr.f32.gmra.mxu0 %v648
    %v719 = vpop.f32.mrf.mxu0
    %v720 = vadd.f32 0.0, %v719
    %v721 = vpop.f32.mrf.mxu0
    %v722 = vadd.f32 0.0, %v721
    %723 = vmatprep.mubr.f32.mxu0 0.0
    %724 = vmatmul.mubr.f32.gmra.mxu0 %v651
    %v725 = vpop.f32.mrf.mxu0
    %v726 = vadd.f32 0.0, %v725
    %v727 = vpop.f32.mrf.mxu0
    %v728 = vadd.f32 0.0, %v727
    %729 = vdwg.mxu0
    %s730 = scalar_lea.vmem %s3, 128
    %v731 = vld [vmem:[%s730] sm:$0xff]
    %v732 = vld [vmem:[%s730 + $0x8] sm:$0xff]
    %v733 = vadd.f32 %v33, %v720
    %v734 = vadd.f32 %v34, %v722
    %v735 = vadd.f32 %v35, %v726
    %v736 = vadd.f32 %v36, %v728
    %738 = vset.pattern.permute.xlu0 0
    %739 = vperm.xlu0 %738, %v731
    %v740 = vpop.permute.xlu0 %739
    %743 = vset.pattern.permute.xlu0 0
    %744 = vperm.xlu0 %743, %v732
    %v745 = vpop.permute.xlu0 %744
    %v747 = vadd.f32 %v733, %v740
    %v748 = vadd.f32 %v734, %v740
    %v749 = vadd.f32 %v735, %v745
    %v750 = vadd.f32 %v736, %v745
    %s751 = scalar_lea.vmem %s1, 64
    %v752 = vld [vmem:[%s751] sm:$0xff]
    %v753 = vld [vmem:[%s751 + $0x8] sm:$0xff]
    %v754 = vld [vmem:[%s751 + $0x10] sm:$0xff]
    %v755 = vld [vmem:[%s751 + $0x18] sm:$0xff]
    %v757 = vsel %vm86, %v752, 0
    %v760 = vsel %vm86, %v753, 0
    %v763 = vsel %vm86, %v754, 0
    %v766 = vsel %vm86, %v755, 0
    %768 = vmatprep.subr.mxu0 0.0
    %769 = vmatpush1.msra.mxu0 0.0
    %770 = vmatprep.subr.mxu0 0.0
    %771 = vmatpush1.msra.mxu0 0.0
    %772 = vmatprep.subr.mxu0 0.0
    %773 = vmatpush1.msra.mxu0 0.0
    %774 = vmatprep.subr.mxu0 0.0
    %775 = vmatpush1.msra.mxu0 0.0
    %776 = vmatprep.subr.mxu0 0.0
    %777 = vmatpush1.msra.mxu0 0.0
    %778 = vmatprep.subr.mxu0 0.0
    %779 = vmatpush1.msra.mxu0 0.0
    %780 = vmatprep.subr.mxu0 0.0
    %781 = vmatpush1.msra.mxu0 0.0
    %782 = vmatprep.subr.mxu0 0.0
    %783 = vmatpush1.msra.mxu0 0.0
    %784 = vmatprep.subr.mxu0 0.0
    %785 = vmatpush1.msra.mxu0 0.0
    %786 = vmatprep.subr.mxu0 0.0
    %787 = vmatpush1.msra.mxu0 0.0
    %788 = vmatprep.subr.mxu0 0.0
    %789 = vmatpush1.msra.mxu0 0.0
    %790 = vmatprep.subr.mxu0 0.0
    %791 = vmatpush1.msra.mxu0 0.0
    %792 = vmatprep.subr.mxu0 0.0
    %793 = vmatpush1.msra.mxu0 0.0
    %794 = vmatprep.subr.mxu0 0.0
    %795 = vmatpush1.msra.mxu0 0.0
    %796 = vmatprep.subr.mxu0 %v750
    %797 = vmatpush1.msra.mxu0 %v749
    %798 = vmatprep.subr.mxu0 %v748
    %799 = vmatpush1.msra.mxu0 %v747
    %800 = vmatprep.subr.mxu0 0.0
    %801 = vmatpush2.msra.mxu0 0.0
    %802 = vmatprep.subr.mxu0 0.0
    %803 = vmatpush2.msra.mxu0 0.0
    %804 = vmatprep.subr.mxu0 0.0
    %805 = vmatpush2.msra.mxu0 0.0
    %806 = vmatprep.subr.mxu0 0.0
    %807 = vmatpush2.msra.mxu0 0.0
    %808 = vmatprep.subr.mxu0 0.0
    %809 = vmatpush2.msra.mxu0 0.0
    %810 = vmatprep.subr.mxu0 0.0
    %811 = vmatpush2.msra.mxu0 0.0
    %812 = vmatprep.subr.mxu0 0.0
    %813 = vmatpush2.msra.mxu0 0.0
    %814 = vmatprep.subr.mxu0 0.0
    %815 = vmatpush2.msra.mxu0 0.0
    %816 = vmatprep.subr.mxu0 0.0
    %817 = vmatpush2.msra.mxu0 0.0
    %818 = vmatprep.subr.mxu0 0.0
    %819 = vmatpush2.msra.mxu0 0.0
    %820 = vmatprep.subr.mxu0 0.0
    %821 = vmatpush2.msra.mxu0 0.0
    %822 = vmatprep.subr.mxu0 0.0
    %823 = vmatpush2.msra.mxu0 0.0
    %824 = vmatprep.subr.mxu0 0.0
    %825 = vmatpush2.msra.mxu0 0.0
    %826 = vmatprep.subr.mxu0 0.0
    %827 = vmatpush2.msra.mxu0 0.0
    %828 = vmatprep.subr.mxu0 0.0
    %829 = vmatpush2.msra.mxu0 0.0
    %830 = vmatprep.subr.mxu0 0.0
    %831 = vmatpush2.msra.mxu0 0.0
    %832 = vmatprep.mubr.f32.mxu0 0.0
    %833 = vmatmul.mubr.f32.gmra.mxu0 %v757
    %v834 = vpop.f32.mrf.mxu0
    %v835 = vadd.f32 0.0, %v834
    %v836 = vpop.f32.mrf.mxu0
    %v837 = vadd.f32 0.0, %v836
    %838 = vmatprep.mubr.f32.mxu0 0.0
    %839 = vmatmul.mubr.f32.gmra.mxu0 %v760
    %v840 = vpop.f32.mrf.mxu0
    %v841 = vadd.f32 0.0, %v840
    %v842 = vpop.f32.mrf.mxu0
    %v843 = vadd.f32 0.0, %v842
    %844 = vmatprep.mubr.f32.mxu0 0.0
    %845 = vmatmul.mubr.f32.gmra.mxu0 %v763
    %v846 = vpop.f32.mrf.mxu0
    %v847 = vadd.f32 0.0, %v846
    %v848 = vpop.f32.mrf.mxu0
    %v849 = vadd.f32 0.0, %v848
    %850 = vmatprep.mubr.f32.mxu0 0.0
    %851 = vmatmul.mubr.f32.gmra.mxu0 %v766
    %v852 = vpop.f32.mrf.mxu0
    %v853 = vadd.f32 0.0, %v852
    %v854 = vpop.f32.mrf.mxu0
    %v855 = vadd.f32 0.0, %v854
    %856 = vdwg.mxu0
    %s857 = sld [smem:[#allocation2 + $0x2]]
    %v858 = vstv %s857
    %v859 = vmul.f32 %v858, %v835
    %v860 = vmul.f32 %v858, %v837
    %v861 = vmul.f32 %v858, %v841
    %v862 = vmul.f32 %v858, %v843
    %v863 = vmul.f32 %v858, %v847
    %v864 = vmul.f32 %v858, %v849
    %v865 = vmul.f32 %v858, %v853
    %v866 = vmul.f32 %v858, %v855
    %v867 = vmax.f32 %v835, %v859
    %v868 = vmax.f32 %v837, %v860
    %v869 = vmax.f32 %v841, %v861
    %v870 = vmax.f32 %v843, %v862
    %v871 = vmax.f32 %v847, %v863
    %v872 = vmax.f32 %v849, %v864
    %v873 = vmax.f32 %v853, %v865
    %v874 = vmax.f32 %v855, %v866
    %v875 = vadd.f32 %v867, %v869
    %v876 = vadd.f32 %v875, %v871
    %v877 = vadd.f32 %v876, %v873
    %v878 = vrot.slane %v877, 4
    %v879 = vadd.f32 %v877, %v878
    %v880 = vrot.slane %v879, 2
    %v881 = vadd.f32 %v879, %v880
    %v882 = vrot.slane %v881, 1
    %v883 = vadd.f32 %v881, %v882
    %v884 = vadd.f32 %v868, %v870
    %v885 = vadd.f32 %v884, %v872
    %v886 = vadd.f32 %v885, %v874
    %v887 = vrot.slane %v886, 4
    %v888 = vadd.f32 %v886, %v887
    %v889 = vrot.slane %v888, 2
    %v890 = vadd.f32 %v888, %v889
    %v891 = vrot.slane %v890, 1
    %v892 = vadd.f32 %v890, %v891
    %v893 = vmul.f32 %v867, %v867
    %v894 = vmul.f32 %v868, %v868
    %v895 = vmul.f32 %v869, %v869
    %v896 = vmul.f32 %v870, %v870
    %v897 = vmul.f32 %v871, %v871
    %v898 = vmul.f32 %v872, %v872
    %v899 = vmul.f32 %v873, %v873
    %v900 = vmul.f32 %v874, %v874
    %v901 = vadd.f32 %v893, %v895
    %v902 = vadd.f32 %v901, %v897
    %v903 = vadd.f32 %v902, %v899
    %v904 = vrot.slane %v903, 4
    %v905 = vadd.f32 %v903, %v904
    %v906 = vrot.slane %v905, 2
    %v907 = vadd.f32 %v905, %v906
    %v908 = vrot.slane %v907, 1
    %v909 = vadd.f32 %v907, %v908
    %v910 = vadd.f32 %v894, %v896
    %v911 = vadd.f32 %v910, %v898
    %v912 = vadd.f32 %v911, %v900
    %v913 = vrot.slane %v912, 4
    %v914 = vadd.f32 %v912, %v913
    %v915 = vrot.slane %v914, 2
    %v916 = vadd.f32 %v914, %v915
    %v917 = vrot.slane %v916, 1
    %v918 = vadd.f32 %v916, %v917
    %v919 = vmul.f32 %v883, 0.03125
    %v920 = vmul.f32 %v892, 0.03125
    %v921 = vmul.f32 %v909, 0.03125
    %v922 = vmul.f32 %v918, 0.03125
    %v923 = vmul.f32 %v919, %v919
    %v924 = vmul.f32 %v920, %v920
    %v925 = vsub.f32 %v921, %v923
    %v926 = vsub.f32 %v922, %v924
    %v927 = vmax.f32 %v925, 0.0
    %v928 = vmax.f32 %v926, 0.0
    %v929 = vsub.f32 %v867, %v919
    %v930 = vsub.f32 %v868, %v920
    %v931 = vsub.f32 %v869, %v919
    %v932 = vsub.f32 %v870, %v920
    %v933 = vsub.f32 %v871, %v919
    %v934 = vsub.f32 %v872, %v920
    %v935 = vsub.f32 %v873, %v919
    %v936 = vsub.f32 %v874, %v920
    %v937 = vadd.f32 %v927, 1e-08
    %v938 = vadd.f32 %v928, 1e-08
    %v939 = vrsqrt.pop %v937
    %v940 = vrsqrt.pop %v938
    %v941 = vmul.f32 %v929, %v939
    %v942 = vmul.f32 %v930, %v940
    %v943 = vmul.f32 %v931, %v939
    %v944 = vmul.f32 %v932, %v940
    %v945 = vmul.f32 %v933, %v939
    %v946 = vmul.f32 %v934, %v940
    %v947 = vmul.f32 %v935, %v939
    %v948 = vmul.f32 %v936, %v940
    %s949 = scalar_lea.vmem %s3, 256
    %v950 = vld [vmem:[%s949] sm:$0xff]
    %v951 = vld [vmem:[%s949 + $0x8] sm:$0xff]
    %v952 = vld [vmem:[%s949 + $0x10] sm:$0xff]
    %v953 = vld [vmem:[%s949 + $0x18] sm:$0xff]
    %955 = vset.pattern.permute.xlu0 0
    %956 = vperm.xlu0 %955, %v950
    %v957 = vpop.permute.xlu0 %956
    %960 = vset.pattern.permute.xlu0 0
    %961 = vperm.xlu0 %960, %v951
    %v962 = vpop.permute.xlu0 %961
    %965 = vset.pattern.permute.xlu0 0
    %966 = vperm.xlu0 %965, %v952
    %v967 = vpop.permute.xlu0 %966
    %970 = vset.pattern.permute.xlu0 0
    %971 = vperm.xlu0 %970, %v953
    %v972 = vpop.permute.xlu0 %971
    %v974 = vadd.f32 %v941, %v957
    %v975 = vadd.f32 %v942, %v957
    %v976 = vadd.f32 %v943, %v962
    %v977 = vadd.f32 %v944, %v962
    %v978 = vadd.f32 %v945, %v967
    %v979 = vadd.f32 %v946, %v967
    %v980 = vadd.f32 %v947, %v972
    %v981 = vadd.f32 %v948, %v972
    %s982 = scalar_lea.vmem %s3, 224
    %v983 = vld [vmem:[%s982] sm:$0xff]
    %v984 = vld [vmem:[%s982 + $0x8] sm:$0xff]
    %v985 = vld [vmem:[%s982 + $0x10] sm:$0xff]
    %v986 = vld [vmem:[%s982 + $0x18] sm:$0xff]
    %988 = vset.pattern.permute.xlu0 0
    %989 = vperm.xlu0 %988, %v983
    %v990 = vpop.permute.xlu0 %989
    %993 = vset.pattern.permute.xlu0 0
    %994 = vperm.xlu0 %993, %v984
    %v995 = vpop.permute.xlu0 %994
    %998 = vset.pattern.permute.xlu0 0
    %999 = vperm.xlu0 %998, %v985
    %v1000 = vpop.permute.xlu0 %999
    %1003 = vset.pattern.permute.xlu0 0
    %1004 = vperm.xlu0 %1003, %v986
    %v1005 = vpop.permute.xlu0 %1004
    %v1007 = vmul.f32 %v990, %v974
    %v1008 = vmul.f32 %v990, %v975
    %v1009 = vmul.f32 %v995, %v976
    %v1010 = vmul.f32 %v995, %v977
    %v1011 = vmul.f32 %v1000, %v978
    %v1012 = vmul.f32 %v1000, %v979
    %v1013 = vmul.f32 %v1005, %v980
    %v1014 = vmul.f32 %v1005, %v981
    %1023 = vrot.lane.b32.xlu0 %v974, 4
    %v1024 = vpop.permute.xlu0 %1023
    %1025 = vrot.lane.b32.xlu0 %v975, 4
    %v1026 = vpop.permute.xlu0 %1025
    %1027 = vrot.lane.b32.xlu0 %v976, 4
    %v1028 = vpop.permute.xlu0 %1027
    %1029 = vrot.lane.b32.xlu0 %v977, 4
    %v1030 = vpop.permute.xlu0 %1029
    %1031 = vrot.lane.b32.xlu0 %v978, 4
    %v1032 = vpop.permute.xlu0 %1031
    %1033 = vrot.lane.b32.xlu0 %v979, 4
    %v1034 = vpop.permute.xlu0 %1033
    %1035 = vrot.lane.b32.xlu0 %v980, 4
    %v1036 = vpop.permute.xlu0 %1035
    %1037 = vrot.lane.b32.xlu0 %v981, 4
    %v1038 = vpop.permute.xlu0 %1037
    %vm1039 = vcmask 31744
    %v1040 = vsel %vm1039, %v1024, %v1026
    %v1041 = vsel %vm1039, %v1028, %v1030
    %v1042 = vsel %vm1039, %v1032, %v1034
    %v1043 = vsel %vm1039, %v1036, %v1038
    %v1052 = vsel %vm1039, 0.0, %v1024
    %v1053 = vsel %vm1039, 0.0, %v1028
    %v1054 = vsel %vm1039, 0.0, %v1032
    %v1055 = vsel %vm1039, 0.0, %v1036
    %v1056 = vmul.f32 %v1052, %v80
    %v1057 = vmul.f32 %v1040, %v81
    %v1058 = vmul.f32 %v1053, %v80
    %v1059 = vmul.f32 %v1041, %v81
    %v1060 = vmul.f32 %v1054, %v80
    %v1061 = vmul.f32 %v1042, %v81
    %v1062 = vmul.f32 %v1055, %v80
    %v1063 = vmul.f32 %v1043, %v81
    %s1064 = scalar_lea.vmem %s3, 160
    %v1065 = vld [vmem:[%s1064] sm:$0xff]
    %v1066 = vld [vmem:[%s1064 + $0x8] sm:$0xff]
    %v1067 = vld [vmem:[%s1064 + $0x10] sm:$0xff]
    %v1068 = vld [vmem:[%s1064 + $0x18] sm:$0xff]
    %1070 = vset.pattern.permute.xlu0 0
    %1071 = vperm.xlu0 %1070, %v1065
    %v1072 = vpop.permute.xlu0 %1071
    %1075 = vset.pattern.permute.xlu0 0
    %1076 = vperm.xlu0 %1075, %v1066
    %v1077 = vpop.permute.xlu0 %1076
    %1080 = vset.pattern.permute.xlu0 0
    %1081 = vperm.xlu0 %1080, %v1067
    %v1082 = vpop.permute.xlu0 %1081
    %1085 = vset.pattern.permute.xlu0 0
    %1086 = vperm.xlu0 %1085, %v1068
    %v1087 = vpop.permute.xlu0 %1086
    %v1089 = vmul.f32 %v1072, %v1056
    %v1090 = vmul.f32 %v1072, %v1057
    %v1091 = vmul.f32 %v1077, %v1058
    %v1092 = vmul.f32 %v1077, %v1059
    %v1093 = vmul.f32 %v1082, %v1060
    %v1094 = vmul.f32 %v1082, %v1061
    %v1095 = vmul.f32 %v1087, %v1062
    %v1096 = vmul.f32 %v1087, %v1063
    %v1097 = vadd.f32 %v1007, %v1089
    %v1098 = vadd.f32 %v1008, %v1090
    %v1099 = vadd.f32 %v1009, %v1091
    %v1100 = vadd.f32 %v1010, %v1092
    %v1101 = vadd.f32 %v1011, %v1093
    %v1102 = vadd.f32 %v1012, %v1094
    %v1103 = vadd.f32 %v1013, %v1095
    %v1104 = vadd.f32 %v1014, %v1096
    %1105 = vrot.lane.b32.xlu0 %v974, 2
    %v1106 = vpop.permute.xlu0 %1105
    %1107 = vrot.lane.b32.xlu0 %v975, 2
    %v1108 = vpop.permute.xlu0 %1107
    %1109 = vrot.lane.b32.xlu0 %v976, 2
    %v1110 = vpop.permute.xlu0 %1109
    %1111 = vrot.lane.b32.xlu0 %v977, 2
    %v1112 = vpop.permute.xlu0 %1111
    %1113 = vrot.lane.b32.xlu0 %v978, 2
    %v1114 = vpop.permute.xlu0 %1113
    %1115 = vrot.lane.b32.xlu0 %v979, 2
    %v1116 = vpop.permute.xlu0 %1115
    %1117 = vrot.lane.b32.xlu0 %v980, 2
    %v1118 = vpop.permute.xlu0 %1117
    %1119 = vrot.lane.b32.xlu0 %v981, 2
    %v1120 = vpop.permute.xlu0 %1119
    %v1121 = vsel %vm370, %v1106, %v1108
    %v1122 = vsel %vm370, %v1110, %v1112
    %v1123 = vsel %vm370, %v1114, %v1116
    %v1124 = vsel %vm370, %v1118, %v1120
    %v1133 = vsel %vm370, 0.0, %v1106
    %v1134 = vsel %vm370, 0.0, %v1110
    %v1135 = vsel %vm370, 0.0, %v1114
    %v1136 = vsel %vm370, 0.0, %v1118
    %v1137 = vmul.f32 %v1133, %v74
    %v1138 = vmul.f32 %v1121, %v75
    %v1139 = vmul.f32 %v1134, %v74
    %v1140 = vmul.f32 %v1122, %v75
    %v1141 = vmul.f32 %v1135, %v74
    %v1142 = vmul.f32 %v1123, %v75
    %v1143 = vmul.f32 %v1136, %v74
    %v1144 = vmul.f32 %v1124, %v75
    %s1145 = scalar_lea.vmem %s3, 192
    %v1146 = vld [vmem:[%s1145] sm:$0xff]
    %v1147 = vld [vmem:[%s1145 + $0x8] sm:$0xff]
    %v1148 = vld [vmem:[%s1145 + $0x10] sm:$0xff]
    %v1149 = vld [vmem:[%s1145 + $0x18] sm:$0xff]
    %1151 = vset.pattern.permute.xlu0 0
    %1152 = vperm.xlu0 %1151, %v1146
    %v1153 = vpop.permute.xlu0 %1152
    %1156 = vset.pattern.permute.xlu0 0
    %1157 = vperm.xlu0 %1156, %v1147
    %v1158 = vpop.permute.xlu0 %1157
    %1161 = vset.pattern.permute.xlu0 0
    %1162 = vperm.xlu0 %1161, %v1148
    %v1163 = vpop.permute.xlu0 %1162
    %1166 = vset.pattern.permute.xlu0 0
    %1167 = vperm.xlu0 %1166, %v1149
    %v1168 = vpop.permute.xlu0 %1167
    %v1170 = vmul.f32 %v1153, %v1137
    %v1171 = vmul.f32 %v1153, %v1138
    %v1172 = vmul.f32 %v1158, %v1139
    %v1173 = vmul.f32 %v1158, %v1140
    %v1174 = vmul.f32 %v1163, %v1141
    %v1175 = vmul.f32 %v1163, %v1142
    %v1176 = vmul.f32 %v1168, %v1143
    %v1177 = vmul.f32 %v1168, %v1144
    %v1178 = vadd.f32 %v1097, %v1170
    %v1179 = vadd.f32 %v1098, %v1171
    %v1180 = vadd.f32 %v1099, %v1172
    %v1181 = vadd.f32 %v1100, %v1173
    %v1182 = vadd.f32 %v1101, %v1174
    %v1183 = vadd.f32 %v1102, %v1175
    %v1184 = vadd.f32 %v1103, %v1176
    %v1185 = vadd.f32 %v1104, %v1177
    %s1186 = sld [smem:[#allocation2 + $0x3]]
    %v1187 = vstv %s1186
    %v1188 = vmul.f32 %v1187, %v1178
    %v1189 = vmul.f32 %v1187, %v1179
    %v1190 = vmul.f32 %v1187, %v1180
    %v1191 = vmul.f32 %v1187, %v1181
    %v1192 = vmul.f32 %v1187, %v1182
    %v1193 = vmul.f32 %v1187, %v1183
    %v1194 = vmul.f32 %v1187, %v1184
    %v1195 = vmul.f32 %v1187, %v1185
    %v1196 = vmax.f32 %v1178, %v1188
    %v1197 = vmax.f32 %v1179, %v1189
    %v1198 = vmax.f32 %v1180, %v1190
    %v1199 = vmax.f32 %v1181, %v1191
    %v1200 = vmax.f32 %v1182, %v1192
    %v1201 = vmax.f32 %v1183, %v1193
    %v1202 = vmax.f32 %v1184, %v1194
    %v1203 = vmax.f32 %v1185, %v1195
    %v1204 = vadd.f32 %v1196, %v1198
    %v1205 = vadd.f32 %v1204, %v1200
    %v1206 = vadd.f32 %v1205, %v1202
    %v1207 = vrot.slane %v1206, 4
    %v1208 = vadd.f32 %v1206, %v1207
    %v1209 = vrot.slane %v1208, 2
    %v1210 = vadd.f32 %v1208, %v1209
    %v1211 = vrot.slane %v1210, 1
    %v1212 = vadd.f32 %v1210, %v1211
    %v1213 = vadd.f32 %v1197, %v1199
    %v1214 = vadd.f32 %v1213, %v1201
    %v1215 = vadd.f32 %v1214, %v1203
    %v1216 = vrot.slane %v1215, 4
    %v1217 = vadd.f32 %v1215, %v1216
    %v1218 = vrot.slane %v1217, 2
    %v1219 = vadd.f32 %v1217, %v1218
    %v1220 = vrot.slane %v1219, 1
    %v1221 = vadd.f32 %v1219, %v1220
    %v1222 = vmul.f32 %v1196, %v1196
    %v1223 = vmul.f32 %v1197, %v1197
    %v1224 = vmul.f32 %v1198, %v1198
    %v1225 = vmul.f32 %v1199, %v1199
    %v1226 = vmul.f32 %v1200, %v1200
    %v1227 = vmul.f32 %v1201, %v1201
    %v1228 = vmul.f32 %v1202, %v1202
    %v1229 = vmul.f32 %v1203, %v1203
    %v1230 = vadd.f32 %v1222, %v1224
    %v1231 = vadd.f32 %v1230, %v1226
    %v1232 = vadd.f32 %v1231, %v1228
    %v1233 = vrot.slane %v1232, 4
    %v1234 = vadd.f32 %v1232, %v1233
    %v1235 = vrot.slane %v1234, 2
    %v1236 = vadd.f32 %v1234, %v1235
    %v1237 = vrot.slane %v1236, 1
    %v1238 = vadd.f32 %v1236, %v1237
    %v1239 = vadd.f32 %v1223, %v1225
    %v1240 = vadd.f32 %v1239, %v1227
    %v1241 = vadd.f32 %v1240, %v1229
    %v1242 = vrot.slane %v1241, 4
    %v1243 = vadd.f32 %v1241, %v1242
    %v1244 = vrot.slane %v1243, 2
    %v1245 = vadd.f32 %v1243, %v1244
    %v1246 = vrot.slane %v1245, 1
    %v1247 = vadd.f32 %v1245, %v1246
    %v1248 = vmul.f32 %v1212, 0.03125
    %v1249 = vmul.f32 %v1221, 0.03125
    %v1250 = vmul.f32 %v1238, 0.03125
    %v1251 = vmul.f32 %v1247, 0.03125
    %v1252 = vmul.f32 %v1248, %v1248
    %v1253 = vmul.f32 %v1249, %v1249
    %v1254 = vsub.f32 %v1250, %v1252
    %v1255 = vsub.f32 %v1251, %v1253
    %v1256 = vmax.f32 %v1254, 0.0
    %v1257 = vmax.f32 %v1255, 0.0
    %v1258 = vsub.f32 %v1196, %v1248
    %v1259 = vsub.f32 %v1197, %v1249
    %v1260 = vsub.f32 %v1198, %v1248
    %v1261 = vsub.f32 %v1199, %v1249
    %v1262 = vsub.f32 %v1200, %v1248
    %v1263 = vsub.f32 %v1201, %v1249
    %v1264 = vsub.f32 %v1202, %v1248
    %v1265 = vsub.f32 %v1203, %v1249
    %v1266 = vadd.f32 %v1256, 1e-08
    %v1267 = vadd.f32 %v1257, 1e-08
    %v1268 = vrsqrt.pop %v1266
    %v1269 = vrsqrt.pop %v1267
    %v1270 = vmul.f32 %v1258, %v1268
    %v1271 = vmul.f32 %v1259, %v1269
    %v1272 = vmul.f32 %v1260, %v1268
    %v1273 = vmul.f32 %v1261, %v1269
    %v1274 = vmul.f32 %v1262, %v1268
    %v1275 = vmul.f32 %v1263, %v1269
    %v1276 = vmul.f32 %v1264, %v1268
    %v1277 = vmul.f32 %v1265, %v1269
    %s1278 = scalar_lea.vmem %s1, 96
    %v1279 = vld [vmem:[%s1278] sm:$0xff]
    %v1280 = vld [vmem:[%s1278 + $0x8] sm:$0xff]
    %v1281 = vld [vmem:[%s1278 + $0x10] sm:$0xff]
    %v1282 = vld [vmem:[%s1278 + $0x18] sm:$0xff]
    %1283 = vxpose.xlu0.b32.start [1/16] %v1279, 128
    %1284 = vxpose.xlu0.b32.cont [2/16] %v1280, 128
    %1285 = vxpose.xlu0.b32.cont [3/16] %v1281, 128
    %1286 = vxpose.xlu0.b32.cont [4/16] %v1282, 128
    %1287 = vxpose.xlu0.b32.cont [5/16] 0.0, 128
    %1288 = vxpose.xlu0.b32.cont [6/16] 0.0, 128
    %1289 = vxpose.xlu0.b32.cont [7/16] 0.0, 128
    %1290 = vxpose.xlu0.b32.cont [8/16] 0.0, 128
    %1291 = vxpose.xlu0.b32.cont [9/16] 0.0, 128
    %1292 = vxpose.xlu0.b32.cont [10/16] 0.0, 128
    %1293 = vxpose.xlu0.b32.cont [11/16] 0.0, 128
    %1294 = vxpose.xlu0.b32.cont [12/16] 0.0, 128
    %1295 = vxpose.xlu0.b32.cont [13/16] 0.0, 128
    %1296 = vxpose.xlu0.b32.cont [14/16] 0.0, 128
    %1297 = vxpose.xlu0.b32.cont [15/16] 0.0, 128
    %1298 = vxpose.xlu0.b32.end [16/16] 0.0, 128
    %v1299 = vpop.trf.xlu0
    %v1300 = vpop.trf.xlu0
    %v1301 = vpop.trf.xlu0
    %v1302 = vpop.trf.xlu0
    %v1303 = vpop.trf.xlu0
    %v1304 = vpop.trf.xlu0
    %v1305 = vpop.trf.xlu0
    %v1306 = vpop.trf.xlu0
    %v1307 = vpop.trf.xlu0
    %v1308 = vpop.trf.xlu0
    %v1309 = vpop.trf.xlu0
    %v1310 = vpop.trf.xlu0
    %v1311 = vpop.trf.xlu0
    %v1312 = vpop.trf.xlu0
    %v1313 = vpop.trf.xlu0
    %v1314 = vpop.trf.xlu0
    %v1316 = vsel %vm646, %v1299, 0
    %v1319 = vsel %vm646, %v1300, 0
    %1321 = vmatprep.subr.mxu0 0.0
    %1322 = vmatpush1.msra.mxu0 0.0
    %1323 = vmatprep.subr.mxu0 0.0
    %1324 = vmatpush1.msra.mxu0 0.0
    %1325 = vmatprep.subr.mxu0 0.0
    %1326 = vmatpush1.msra.mxu0 0.0
    %1327 = vmatprep.subr.mxu0 0.0
    %1328 = vmatpush1.msra.mxu0 0.0
    %1329 = vmatprep.subr.mxu0 0.0
    %1330 = vmatpush1.msra.mxu0 0.0
    %1331 = vmatprep.subr.mxu0 0.0
    %1332 = vmatpush1.msra.mxu0 0.0
    %1333 = vmatprep.subr.mxu0 0.0
    %1334 = vmatpush1.msra.mxu0 0.0
    %1335 = vmatprep.subr.mxu0 0.0
    %1336 = vmatpush1.msra.mxu0 0.0
    %1337 = vmatprep.subr.mxu0 0.0
    %1338 = vmatpush1.msra.mxu0 0.0
    %1339 = vmatprep.subr.mxu0 0.0
    %1340 = vmatpush1.msra.mxu0 0.0
    %1341 = vmatprep.subr.mxu0 0.0
    %1342 = vmatpush1.msra.mxu0 0.0
    %1343 = vmatprep.subr.mxu0 0.0
    %1344 = vmatpush1.msra.mxu0 0.0
    %1345 = vmatprep.subr.mxu0 %v1277
    %1346 = vmatpush1.msra.mxu0 %v1276
    %1347 = vmatprep.subr.mxu0 %v1275
    %1348 = vmatpush1.msra.mxu0 %v1274
    %1349 = vmatprep.subr.mxu0 %v1273
    %1350 = vmatpush1.msra.mxu0 %v1272
    %1351 = vmatprep.subr.mxu0 %v1271
    %1352 = vmatpush1.msra.mxu0 %v1270
    %1353 = vmatprep.subr.mxu0 0.0
    %1354 = vmatpush2.msra.mxu0 0.0
    %1355 = vmatprep.subr.mxu0 0.0
    %1356 = vmatpush2.msra.mxu0 0.0
    %1357 = vmatprep.subr.mxu0 0.0
    %1358 = vmatpush2.msra.mxu0 0.0
    %1359 = vmatprep.subr.mxu0 0.0
    %1360 = vmatpush2.msra.mxu0 0.0
    %1361 = vmatprep.subr.mxu0 0.0
    %1362 = vmatpush2.msra.mxu0 0.0
    %1363 = vmatprep.subr.mxu0 0.0
    %1364 = vmatpush2.msra.mxu0 0.0
    %1365 = vmatprep.subr.mxu0 0.0
    %1366 = vmatpush2.msra.mxu0 0.0
    %1367 = vmatprep.subr.mxu0 0.0
    %1368 = vmatpush2.msra.mxu0 0.0
    %1369 = vmatprep.subr.mxu0 0.0
    %1370 = vmatpush2.msra.mxu0 0.0
    %1371 = vmatprep.subr.mxu0 0.0
    %1372 = vmatpush2.msra.mxu0 0.0
    %1373 = vmatprep.subr.mxu0 0.0
    %1374 = vmatpush2.msra.mxu0 0.0
    %1375 = vmatprep.subr.mxu0 0.0
    %1376 = vmatpush2.msra.mxu0 0.0
    %1377 = vmatprep.subr.mxu0 0.0
    %1378 = vmatpush2.msra.mxu0 0.0
    %1379 = vmatprep.subr.mxu0 0.0
    %1380 = vmatpush2.msra.mxu0 0.0
    %1381 = vmatprep.subr.mxu0 0.0
    %1382 = vmatpush2.msra.mxu0 0.0
    %1383 = vmatprep.subr.mxu0 0.0
    %1384 = vmatpush2.msra.mxu0 0.0
    %1385 = vmatprep.mubr.f32.mxu0 0.0
    %1386 = vmatmul.mubr.f32.gmra.mxu0 %v1316
    %v1387 = vpop.f32.mrf.mxu0
    %v1388 = vadd.f32 0.0, %v1387
    %v1389 = vpop.f32.mrf.mxu0
    %v1390 = vadd.f32 0.0, %v1389
    %1391 = vmatprep.mubr.f32.mxu0 0.0
    %1392 = vmatmul.mubr.f32.gmra.mxu0 %v1319
    %v1393 = vpop.f32.mrf.mxu0
    %v1394 = vadd.f32 0.0, %v1393
    %v1395 = vpop.f32.mrf.mxu0
    %v1396 = vadd.f32 0.0, %v1395
    %1397 = vdwg.mxu0
    %s1398 = scalar_lea.vmem %s3, 288
    %v1399 = vld [vmem:[%s1398] sm:$0xff]
    %v1400 = vld [vmem:[%s1398 + $0x8] sm:$0xff]
    %v1401 = vadd.f32 %v747, %v1388
    %v1402 = vadd.f32 %v748, %v1390
    %v1403 = vadd.f32 %v749, %v1394
    %v1404 = vadd.f32 %v750, %v1396
    %1406 = vset.pattern.permute.xlu0 0
    %1407 = vperm.xlu0 %1406, %v1399
    %v1408 = vpop.permute.xlu0 %1407
    %1411 = vset.pattern.permute.xlu0 0
    %1412 = vperm.xlu0 %1411, %v1400
    %v1413 = vpop.permute.xlu0 %1412
    %v1415 = vadd.f32 %v1401, %v1408
    %v1416 = vadd.f32 %v1402, %v1408
    %v1417 = vadd.f32 %v1403, %v1413
    %v1418 = vadd.f32 %v1404, %v1413
    %s1419 = scalar_lea.vmem %s1, 128
    %v1420 = vld [vmem:[%s1419] sm:$0xff]
    %v1421 = vld [vmem:[%s1419 + $0x8] sm:$0xff]
    %v1422 = vld [vmem:[%s1419 + $0x10] sm:$0xff]
    %v1423 = vld [vmem:[%s1419 + $0x18] sm:$0xff]
    %v1425 = vsel %vm86, %v1420, 0
    %v1428 = vsel %vm86, %v1421, 0
    %v1431 = vsel %vm86, %v1422, 0
    %v1434 = vsel %vm86, %v1423, 0
    %1436 = vmatprep.subr.mxu0 0.0
    %1437 = vmatpush1.msra.mxu0 0.0
    %1438 = vmatprep.subr.mxu0 0.0
    %1439 = vmatpush1.msra.mxu0 0.0
    %1440 = vmatprep.subr.mxu0 0.0
    %1441 = vmatpush1.msra.mxu0 0.0
    %1442 = vmatprep.subr.mxu0 0.0
    %1443 = vmatpush1.msra.mxu0 0.0
    %1444 = vmatprep.subr.mxu0 0.0
    %1445 = vmatpush1.msra.mxu0 0.0
    %1446 = vmatprep.subr.mxu0 0.0
    %1447 = vmatpush1.msra.mxu0 0.0
    %1448 = vmatprep.subr.mxu0 0.0
    %1449 = vmatpush1.msra.mxu0 0.0
    %1450 = vmatprep.subr.mxu0 0.0
    %1451 = vmatpush1.msra.mxu0 0.0
    %1452 = vmatprep.subr.mxu0 0.0
    %1453 = vmatpush1.msra.mxu0 0.0
    %1454 = vmatprep.subr.mxu0 0.0
    %1455 = vmatpush1.msra.mxu0 0.0
    %1456 = vmatprep.subr.mxu0 0.0
    %1457 = vmatpush1.msra.mxu0 0.0
    %1458 = vmatprep.subr.mxu0 0.0
    %1459 = vmatpush1.msra.mxu0 0.0
    %1460 = vmatprep.subr.mxu0 0.0
    %1461 = vmatpush1.msra.mxu0 0.0
    %1462 = vmatprep.subr.mxu0 0.0
    %1463 = vmatpush1.msra.mxu0 0.0
    %1464 = vmatprep.subr.mxu0 %v1418
    %1465 = vmatpush1.msra.mxu0 %v1417
    %1466 = vmatprep.subr.mxu0 %v1416
    %1467 = vmatpush1.msra.mxu0 %v1415
    %1468 = vmatprep.subr.mxu0 0.0
    %1469 = vmatpush2.msra.mxu0 0.0
    %1470 = vmatprep.subr.mxu0 0.0
    %1471 = vmatpush2.msra.mxu0 0.0
    %1472 = vmatprep.subr.mxu0 0.0
    %1473 = vmatpush2.msra.mxu0 0.0
    %1474 = vmatprep.subr.mxu0 0.0
    %1475 = vmatpush2.msra.mxu0 0.0
    %1476 = vmatprep.subr.mxu0 0.0
    %1477 = vmatpush2.msra.mxu0 0.0
    %1478 = vmatprep.subr.mxu0 0.0
    %1479 = vmatpush2.msra.mxu0 0.0
    %1480 = vmatprep.subr.mxu0 0.0
    %1481 = vmatpush2.msra.mxu0 0.0
    %1482 = vmatprep.subr.mxu0 0.0
    %1483 = vmatpush2.msra.mxu0 0.0
    %1484 = vmatprep.subr.mxu0 0.0
    %1485 = vmatpush2.msra.mxu0 0.0
    %1486 = vmatprep.subr.mxu0 0.0
    %1487 = vmatpush2.msra.mxu0 0.0
    %1488 = vmatprep.subr.mxu0 0.0
    %1489 = vmatpush2.msra.mxu0 0.0
    %1490 = vmatprep.subr.mxu0 0.0
    %1491 = vmatpush2.msra.mxu0 0.0
    %1492 = vmatprep.subr.mxu0 0.0
    %1493 = vmatpush2.msra.mxu0 0.0
    %1494 = vmatprep.subr.mxu0 0.0
    %1495 = vmatpush2.msra.mxu0 0.0
    %1496 = vmatprep.subr.mxu0 0.0
    %1497 = vmatpush2.msra.mxu0 0.0
    %1498 = vmatprep.subr.mxu0 0.0
    %1499 = vmatpush2.msra.mxu0 0.0
    %1500 = vmatprep.mubr.f32.mxu0 0.0
    %1501 = vmatmul.mubr.f32.gmra.mxu0 %v1425
    %v1502 = vpop.f32.mrf.mxu0
    %v1503 = vadd.f32 0.0, %v1502
    %v1504 = vpop.f32.mrf.mxu0
    %v1505 = vadd.f32 0.0, %v1504
    %1506 = vmatprep.mubr.f32.mxu0 0.0
    %1507 = vmatmul.mubr.f32.gmra.mxu0 %v1428
    %v1508 = vpop.f32.mrf.mxu0
    %v1509 = vadd.f32 0.0, %v1508
    %v1510 = vpop.f32.mrf.mxu0
    %v1511 = vadd.f32 0.0, %v1510
    %1512 = vmatprep.mubr.f32.mxu0 0.0
    %1513 = vmatmul.mubr.f32.gmra.mxu0 %v1431
    %v1514 = vpop.f32.mrf.mxu0
    %v1515 = vadd.f32 0.0, %v1514
    %v1516 = vpop.f32.mrf.mxu0
    %v1517 = vadd.f32 0.0, %v1516
    %1518 = vmatprep.mubr.f32.mxu0 0.0
    %1519 = vmatmul.mubr.f32.gmra.mxu0 %v1434
    %v1520 = vpop.f32.mrf.mxu0
    %v1521 = vadd.f32 0.0, %v1520
    %v1522 = vpop.f32.mrf.mxu0
    %v1523 = vadd.f32 0.0, %v1522
    %1524 = vdwg.mxu0
    %s1525 = sld [smem:[#allocation2 + $0x4]]
    %v1526 = vstv %s1525
    %v1527 = vmul.f32 %v1526, %v1503
    %v1528 = vmul.f32 %v1526, %v1505
    %v1529 = vmul.f32 %v1526, %v1509
    %v1530 = vmul.f32 %v1526, %v1511
    %v1531 = vmul.f32 %v1526, %v1515
    %v1532 = vmul.f32 %v1526, %v1517
    %v1533 = vmul.f32 %v1526, %v1521
    %v1534 = vmul.f32 %v1526, %v1523
    %v1535 = vmax.f32 %v1503, %v1527
    %v1536 = vmax.f32 %v1505, %v1528
    %v1537 = vmax.f32 %v1509, %v1529
    %v1538 = vmax.f32 %v1511, %v1530
    %v1539 = vmax.f32 %v1515, %v1531
    %v1540 = vmax.f32 %v1517, %v1532
    %v1541 = vmax.f32 %v1521, %v1533
    %v1542 = vmax.f32 %v1523, %v1534
    %v1543 = vadd.f32 %v1535, %v1537
    %v1544 = vadd.f32 %v1543, %v1539
    %v1545 = vadd.f32 %v1544, %v1541
    %v1546 = vrot.slane %v1545, 4
    %v1547 = vadd.f32 %v1545, %v1546
    %v1548 = vrot.slane %v1547, 2
    %v1549 = vadd.f32 %v1547, %v1548
    %v1550 = vrot.slane %v1549, 1
    %v1551 = vadd.f32 %v1549, %v1550
    %v1552 = vadd.f32 %v1536, %v1538
    %v1553 = vadd.f32 %v1552, %v1540
    %v1554 = vadd.f32 %v1553, %v1542
    %v1555 = vrot.slane %v1554, 4
    %v1556 = vadd.f32 %v1554, %v1555
    %v1557 = vrot.slane %v1556, 2
    %v1558 = vadd.f32 %v1556, %v1557
    %v1559 = vrot.slane %v1558, 1
    %v1560 = vadd.f32 %v1558, %v1559
    %v1561 = vmul.f32 %v1535, %v1535
    %v1562 = vmul.f32 %v1536, %v1536
    %v1563 = vmul.f32 %v1537, %v1537
    %v1564 = vmul.f32 %v1538, %v1538
    %v1565 = vmul.f32 %v1539, %v1539
    %v1566 = vmul.f32 %v1540, %v1540
    %v1567 = vmul.f32 %v1541, %v1541
    %v1568 = vmul.f32 %v1542, %v1542
    %v1569 = vadd.f32 %v1561, %v1563
    %v1570 = vadd.f32 %v1569, %v1565
    %v1571 = vadd.f32 %v1570, %v1567
    %v1572 = vrot.slane %v1571, 4
    %v1573 = vadd.f32 %v1571, %v1572
    %v1574 = vrot.slane %v1573, 2
    %v1575 = vadd.f32 %v1573, %v1574
    %v1576 = vrot.slane %v1575, 1
    %v1577 = vadd.f32 %v1575, %v1576
    %v1578 = vadd.f32 %v1562, %v1564
    %v1579 = vadd.f32 %v1578, %v1566
    %v1580 = vadd.f32 %v1579, %v1568
    %v1581 = vrot.slane %v1580, 4
    %v1582 = vadd.f32 %v1580, %v1581
    %v1583 = vrot.slane %v1582, 2
    %v1584 = vadd.f32 %v1582, %v1583
    %v1585 = vrot.slane %v1584, 1
    %v1586 = vadd.f32 %v1584, %v1585
    %v1587 = vmul.f32 %v1551, 0.03125
    %v1588 = vmul.f32 %v1560, 0.03125
    %v1589 = vmul.f32 %v1577, 0.03125
    %v1590 = vmul.f32 %v1586, 0.03125
    %v1591 = vmul.f32 %v1587, %v1587
    %v1592 = vmul.f32 %v1588, %v1588
    %v1593 = vsub.f32 %v1589, %v1591
    %v1594 = vsub.f32 %v1590, %v1592
    %v1595 = vmax.f32 %v1593, 0.0
    %v1596 = vmax.f32 %v1594, 0.0
    %v1597 = vsub.f32 %v1535, %v1587
    %v1598 = vsub.f32 %v1536, %v1588
    %v1599 = vsub.f32 %v1537, %v1587
    %v1600 = vsub.f32 %v1538, %v1588
    %v1601 = vsub.f32 %v1539, %v1587
    %v1602 = vsub.f32 %v1540, %v1588
    %v1603 = vsub.f32 %v1541, %v1587
    %v1604 = vsub.f32 %v1542, %v1588
    %v1605 = vadd.f32 %v1595, 1e-08
    %v1606 = vadd.f32 %v1596, 1e-08
    %v1607 = vrsqrt.pop %v1605
    %v1608 = vrsqrt.pop %v1606
    %v1609 = vmul.f32 %v1597, %v1607
    %v1610 = vmul.f32 %v1598, %v1608
    %v1611 = vmul.f32 %v1599, %v1607
    %v1612 = vmul.f32 %v1600, %v1608
    %v1613 = vmul.f32 %v1601, %v1607
    %v1614 = vmul.f32 %v1602, %v1608
    %v1615 = vmul.f32 %v1603, %v1607
    %v1616 = vmul.f32 %v1604, %v1608
    %s1617 = scalar_lea.vmem %s3, 416
    %v1618 = vld [vmem:[%s1617] sm:$0xff]
    %v1619 = vld [vmem:[%s1617 + $0x8] sm:$0xff]
    %v1620 = vld [vmem:[%s1617 + $0x10] sm:$0xff]
    %v1621 = vld [vmem:[%s1617 + $0x18] sm:$0xff]
    %1623 = vset.pattern.permute.xlu0 0
    %1624 = vperm.xlu0 %1623, %v1618
    %v1625 = vpop.permute.xlu0 %1624
    %1628 = vset.pattern.permute.xlu0 0
    %1629 = vperm.xlu0 %1628, %v1619
    %v1630 = vpop.permute.xlu0 %1629
    %1633 = vset.pattern.permute.xlu0 0
    %1634 = vperm.xlu0 %1633, %v1620
    %v1635 = vpop.permute.xlu0 %1634
    %1638 = vset.pattern.permute.xlu0 0
    %1639 = vperm.xlu0 %1638, %v1621
    %v1640 = vpop.permute.xlu0 %1639
    %v1642 = vadd.f32 %v1609, %v1625
    %v1643 = vadd.f32 %v1610, %v1625
    %v1644 = vadd.f32 %v1611, %v1630
    %v1645 = vadd.f32 %v1612, %v1630
    %v1646 = vadd.f32 %v1613, %v1635
    %v1647 = vadd.f32 %v1614, %v1635
    %v1648 = vadd.f32 %v1615, %v1640
    %v1649 = vadd.f32 %v1616, %v1640
    %s1650 = scalar_lea.vmem %s3, 384
    %v1651 = vld [vmem:[%s1650] sm:$0xff]
    %v1652 = vld [vmem:[%s1650 + $0x8] sm:$0xff]
    %v1653 = vld [vmem:[%s1650 + $0x10] sm:$0xff]
    %v1654 = vld [vmem:[%s1650 + $0x18] sm:$0xff]
    %1656 = vset.pattern.permute.xlu0 0
    %1657 = vperm.xlu0 %1656, %v1651
    %v1658 = vpop.permute.xlu0 %1657
    %1661 = vset.pattern.permute.xlu0 0
    %1662 = vperm.xlu0 %1661, %v1652
    %v1663 = vpop.permute.xlu0 %1662
    %1666 = vset.pattern.permute.xlu0 0
    %1667 = vperm.xlu0 %1666, %v1653
    %v1668 = vpop.permute.xlu0 %1667
    %1671 = vset.pattern.permute.xlu0 0
    %1672 = vperm.xlu0 %1671, %v1654
    %v1673 = vpop.permute.xlu0 %1672
    %v1675 = vmul.f32 %v1658, %v1642
    %v1676 = vmul.f32 %v1658, %v1643
    %v1677 = vmul.f32 %v1663, %v1644
    %v1678 = vmul.f32 %v1663, %v1645
    %v1679 = vmul.f32 %v1668, %v1646
    %v1680 = vmul.f32 %v1668, %v1647
    %v1681 = vmul.f32 %v1673, %v1648
    %v1682 = vmul.f32 %v1673, %v1649
    %1691 = vrot.lane.b32.xlu0 %v1642, 2
    %v1692 = vpop.permute.xlu0 %1691
    %1693 = vrot.lane.b32.xlu0 %v1643, 2
    %v1694 = vpop.permute.xlu0 %1693
    %1695 = vrot.lane.b32.xlu0 %v1644, 2
    %v1696 = vpop.permute.xlu0 %1695
    %1697 = vrot.lane.b32.xlu0 %v1645, 2
    %v1698 = vpop.permute.xlu0 %1697
    %1699 = vrot.lane.b32.xlu0 %v1646, 2
    %v1700 = vpop.permute.xlu0 %1699
    %1701 = vrot.lane.b32.xlu0 %v1647, 2
    %v1702 = vpop.permute.xlu0 %1701
    %1703 = vrot.lane.b32.xlu0 %v1648, 2
    %v1704 = vpop.permute.xlu0 %1703
    %1705 = vrot.lane.b32.xlu0 %v1649, 2
    %v1706 = vpop.permute.xlu0 %1705
    %v1707 = vsel %vm370, %v1692, %v1694
    %v1708 = vsel %vm370, %v1696, %v1698
    %v1709 = vsel %vm370, %v1700, %v1702
    %v1710 = vsel %vm370, %v1704, %v1706
    %v1719 = vsel %vm370, 0.0, %v1692
    %v1720 = vsel %vm370, 0.0, %v1696
    %v1721 = vsel %vm370, 0.0, %v1700
    %v1722 = vsel %vm370, 0.0, %v1704
    %v1723 = vmul.f32 %v1719, %v74
    %v1724 = vmul.f32 %v1707, %v75
    %v1725 = vmul.f32 %v1720, %v74
    %v1726 = vmul.f32 %v1708, %v75
    %v1727 = vmul.f32 %v1721, %v74
    %v1728 = vmul.f32 %v1709, %v75
    %v1729 = vmul.f32 %v1722, %v74
    %v1730 = vmul.f32 %v1710, %v75
    %s1731 = scalar_lea.vmem %s3, 320
    %v1732 = vld [vmem:[%s1731] sm:$0xff]
    %v1733 = vld [vmem:[%s1731 + $0x8] sm:$0xff]
    %v1734 = vld [vmem:[%s1731 + $0x10] sm:$0xff]
    %v1735 = vld [vmem:[%s1731 + $0x18] sm:$0xff]
    %1737 = vset.pattern.permute.xlu0 0
    %1738 = vperm.xlu0 %1737, %v1732
    %v1739 = vpop.permute.xlu0 %1738
    %1742 = vset.pattern.permute.xlu0 0
    %1743 = vperm.xlu0 %1742, %v1733
    %v1744 = vpop.permute.xlu0 %1743
    %1747 = vset.pattern.permute.xlu0 0
    %1748 = vperm.xlu0 %1747, %v1734
    %v1749 = vpop.permute.xlu0 %1748
    %1752 = vset.pattern.permute.xlu0 0
    %1753 = vperm.xlu0 %1752, %v1735
    %v1754 = vpop.permute.xlu0 %1753
    %v1756 = vmul.f32 %v1739, %v1723
    %v1757 = vmul.f32 %v1739, %v1724
    %v1758 = vmul.f32 %v1744, %v1725
    %v1759 = vmul.f32 %v1744, %v1726
    %v1760 = vmul.f32 %v1749, %v1727
    %v1761 = vmul.f32 %v1749, %v1728
    %v1762 = vmul.f32 %v1754, %v1729
    %v1763 = vmul.f32 %v1754, %v1730
    %v1764 = vadd.f32 %v1675, %v1756
    %v1765 = vadd.f32 %v1676, %v1757
    %v1766 = vadd.f32 %v1677, %v1758
    %v1767 = vadd.f32 %v1678, %v1759
    %v1768 = vadd.f32 %v1679, %v1760
    %v1769 = vadd.f32 %v1680, %v1761
    %v1770 = vadd.f32 %v1681, %v1762
    %v1771 = vadd.f32 %v1682, %v1763
    %1772 = vrot.lane.b32.xlu0 %v1642, 1
    %v1773 = vpop.permute.xlu0 %1772
    %1774 = vrot.lane.b32.xlu0 %v1643, 1
    %v1775 = vpop.permute.xlu0 %1774
    %1776 = vrot.lane.b32.xlu0 %v1644, 1
    %v1777 = vpop.permute.xlu0 %1776
    %1778 = vrot.lane.b32.xlu0 %v1645, 1
    %v1779 = vpop.permute.xlu0 %1778
    %1780 = vrot.lane.b32.xlu0 %v1646, 1
    %v1781 = vpop.permute.xlu0 %1780
    %1782 = vrot.lane.b32.xlu0 %v1647, 1
    %v1783 = vpop.permute.xlu0 %1782
    %1784 = vrot.lane.b32.xlu0 %v1648, 1
    %v1785 = vpop.permute.xlu0 %1784
    %1786 = vrot.lane.b32.xlu0 %v1649, 1
    %v1787 = vpop.permute.xlu0 %1786
    %v1788 = vsel %vm451, %v1773, %v1775
    %v1789 = vsel %vm451, %v1777, %v1779
    %v1790 = vsel %vm451, %v1781, %v1783
    %v1791 = vsel %vm451, %v1785, %v1787
    %v1800 = vsel %vm451, 0.0, %v1773
    %v1801 = vsel %vm451, 0.0, %v1777
    %v1802 = vsel %vm451, 0.0, %v1781
    %v1803 = vsel %vm451, 0.0, %v1785
    %v1804 = vmul.f32 %v1800, %v68
    %v1805 = vmul.f32 %v1788, %v69
    %v1806 = vmul.f32 %v1801, %v68
    %v1807 = vmul.f32 %v1789, %v69
    %v1808 = vmul.f32 %v1802, %v68
    %v1809 = vmul.f32 %v1790, %v69
    %v1810 = vmul.f32 %v1803, %v68
    %v1811 = vmul.f32 %v1791, %v69
    %s1812 = scalar_lea.vmem %s3, 352
    %v1813 = vld [vmem:[%s1812] sm:$0xff]
    %v1814 = vld [vmem:[%s1812 + $0x8] sm:$0xff]
    %v1815 = vld [vmem:[%s1812 + $0x10] sm:$0xff]
    %v1816 = vld [vmem:[%s1812 + $0x18] sm:$0xff]
    %1818 = vset.pattern.permute.xlu0 0
    %1819 = vperm.xlu0 %1818, %v1813
    %v1820 = vpop.permute.xlu0 %1819
    %1823 = vset.pattern.permute.xlu0 0
    %1824 = vperm.xlu0 %1823, %v1814
    %v1825 = vpop.permute.xlu0 %1824
    %1828 = vset.pattern.permute.xlu0 0
    %1829 = vperm.xlu0 %1828, %v1815
    %v1830 = vpop.permute.xlu0 %1829
    %1833 = vset.pattern.permute.xlu0 0
    %1834 = vperm.xlu0 %1833, %v1816
    %v1835 = vpop.permute.xlu0 %1834
    %v1837 = vmul.f32 %v1820, %v1804
    %v1838 = vmul.f32 %v1820, %v1805
    %v1839 = vmul.f32 %v1825, %v1806
    %v1840 = vmul.f32 %v1825, %v1807
    %v1841 = vmul.f32 %v1830, %v1808
    %v1842 = vmul.f32 %v1830, %v1809
    %v1843 = vmul.f32 %v1835, %v1810
    %v1844 = vmul.f32 %v1835, %v1811
    %v1845 = vadd.f32 %v1764, %v1837
    %v1846 = vadd.f32 %v1765, %v1838
    %v1847 = vadd.f32 %v1766, %v1839
    %v1848 = vadd.f32 %v1767, %v1840
    %v1849 = vadd.f32 %v1768, %v1841
    %v1850 = vadd.f32 %v1769, %v1842
    %v1851 = vadd.f32 %v1770, %v1843
    %v1852 = vadd.f32 %v1771, %v1844
    %s1853 = sld [smem:[#allocation2 + $0x5]]
    %v1854 = vstv %s1853
    %v1855 = vmul.f32 %v1854, %v1845
    %v1856 = vmul.f32 %v1854, %v1846
    %v1857 = vmul.f32 %v1854, %v1847
    %v1858 = vmul.f32 %v1854, %v1848
    %v1859 = vmul.f32 %v1854, %v1849
    %v1860 = vmul.f32 %v1854, %v1850
    %v1861 = vmul.f32 %v1854, %v1851
    %v1862 = vmul.f32 %v1854, %v1852
    %v1863 = vmax.f32 %v1845, %v1855
    %v1864 = vmax.f32 %v1846, %v1856
    %v1865 = vmax.f32 %v1847, %v1857
    %v1866 = vmax.f32 %v1848, %v1858
    %v1867 = vmax.f32 %v1849, %v1859
    %v1868 = vmax.f32 %v1850, %v1860
    %v1869 = vmax.f32 %v1851, %v1861
    %v1870 = vmax.f32 %v1852, %v1862
    %v1871 = vadd.f32 %v1863, %v1865
    %v1872 = vadd.f32 %v1871, %v1867
    %v1873 = vadd.f32 %v1872, %v1869
    %v1874 = vrot.slane %v1873, 4
    %v1875 = vadd.f32 %v1873, %v1874
    %v1876 = vrot.slane %v1875, 2
    %v1877 = vadd.f32 %v1875, %v1876
    %v1878 = vrot.slane %v1877, 1
    %v1879 = vadd.f32 %v1877, %v1878
    %v1880 = vadd.f32 %v1864, %v1866
    %v1881 = vadd.f32 %v1880, %v1868
    %v1882 = vadd.f32 %v1881, %v1870
    %v1883 = vrot.slane %v1882, 4
    %v1884 = vadd.f32 %v1882, %v1883
    %v1885 = vrot.slane %v1884, 2
    %v1886 = vadd.f32 %v1884, %v1885
    %v1887 = vrot.slane %v1886, 1
    %v1888 = vadd.f32 %v1886, %v1887
    %v1889 = vmul.f32 %v1863, %v1863
    %v1890 = vmul.f32 %v1864, %v1864
    %v1891 = vmul.f32 %v1865, %v1865
    %v1892 = vmul.f32 %v1866, %v1866
    %v1893 = vmul.f32 %v1867, %v1867
    %v1894 = vmul.f32 %v1868, %v1868
    %v1895 = vmul.f32 %v1869, %v1869
    %v1896 = vmul.f32 %v1870, %v1870
    %v1897 = vadd.f32 %v1889, %v1891
    %v1898 = vadd.f32 %v1897, %v1893
    %v1899 = vadd.f32 %v1898, %v1895
    %v1900 = vrot.slane %v1899, 4
    %v1901 = vadd.f32 %v1899, %v1900
    %v1902 = vrot.slane %v1901, 2
    %v1903 = vadd.f32 %v1901, %v1902
    %v1904 = vrot.slane %v1903, 1
    %v1905 = vadd.f32 %v1903, %v1904
    %v1906 = vadd.f32 %v1890, %v1892
    %v1907 = vadd.f32 %v1906, %v1894
    %v1908 = vadd.f32 %v1907, %v1896
    %v1909 = vrot.slane %v1908, 4
    %v1910 = vadd.f32 %v1908, %v1909
    %v1911 = vrot.slane %v1910, 2
    %v1912 = vadd.f32 %v1910, %v1911
    %v1913 = vrot.slane %v1912, 1
    %v1914 = vadd.f32 %v1912, %v1913
    %v1915 = vmul.f32 %v1879, 0.03125
    %v1916 = vmul.f32 %v1888, 0.03125
    %v1917 = vmul.f32 %v1905, 0.03125
    %v1918 = vmul.f32 %v1914, 0.03125
    %v1919 = vmul.f32 %v1915, %v1915
    %v1920 = vmul.f32 %v1916, %v1916
    %v1921 = vsub.f32 %v1917, %v1919
    %v1922 = vsub.f32 %v1918, %v1920
    %v1923 = vmax.f32 %v1921, 0.0
    %v1924 = vmax.f32 %v1922, 0.0
    %v1925 = vsub.f32 %v1863, %v1915
    %v1926 = vsub.f32 %v1864, %v1916
    %v1927 = vsub.f32 %v1865, %v1915
    %v1928 = vsub.f32 %v1866, %v1916
    %v1929 = vsub.f32 %v1867, %v1915
    %v1930 = vsub.f32 %v1868, %v1916
    %v1931 = vsub.f32 %v1869, %v1915
    %v1932 = vsub.f32 %v1870, %v1916
    %v1933 = vadd.f32 %v1923, 1e-08
    %v1934 = vadd.f32 %v1924, 1e-08
    %v1935 = vrsqrt.pop %v1933
    %v1936 = vrsqrt.pop %v1934
    %v1937 = vmul.f32 %v1925, %v1935
    %v1938 = vmul.f32 %v1926, %v1936
    %v1939 = vmul.f32 %v1927, %v1935
    %v1940 = vmul.f32 %v1928, %v1936
    %v1941 = vmul.f32 %v1929, %v1935
    %v1942 = vmul.f32 %v1930, %v1936
    %v1943 = vmul.f32 %v1931, %v1935
    %v1944 = vmul.f32 %v1932, %v1936
    %s1945 = scalar_lea.vmem %s1, 160
    %v1946 = vld [vmem:[%s1945] sm:$0xff]
    %v1947 = vld [vmem:[%s1945 + $0x8] sm:$0xff]
    %v1948 = vld [vmem:[%s1945 + $0x10] sm:$0xff]
    %v1949 = vld [vmem:[%s1945 + $0x18] sm:$0xff]
    %1950 = vxpose.xlu0.b32.start [1/16] %v1946, 128
    %1951 = vxpose.xlu0.b32.cont [2/16] %v1947, 128
    %1952 = vxpose.xlu0.b32.cont [3/16] %v1948, 128
    %1953 = vxpose.xlu0.b32.cont [4/16] %v1949, 128
    %1954 = vxpose.xlu0.b32.cont [5/16] 0.0, 128
    %1955 = vxpose.xlu0.b32.cont [6/16] 0.0, 128
    %1956 = vxpose.xlu0.b32.cont [7/16] 0.0, 128
    %1957 = vxpose.xlu0.b32.cont [8/16] 0.0, 128
    %1958 = vxpose.xlu0.b32.cont [9/16] 0.0, 128
    %1959 = vxpose.xlu0.b32.cont [10/16] 0.0, 128
    %1960 = vxpose.xlu0.b32.cont [11/16] 0.0, 128
    %1961 = vxpose.xlu0.b32.cont [12/16] 0.0, 128
    %1962 = vxpose.xlu0.b32.cont [13/16] 0.0, 128
    %1963 = vxpose.xlu0.b32.cont [14/16] 0.0, 128
    %1964 = vxpose.xlu0.b32.cont [15/16] 0.0, 128
    %1965 = vxpose.xlu0.b32.end [16/16] 0.0, 128
    %v1966 = vpop.trf.xlu0
    %v1967 = vpop.trf.xlu0
    %v1968 = vpop.trf.xlu0
    %v1969 = vpop.trf.xlu0
    %v1970 = vpop.trf.xlu0
    %v1971 = vpop.trf.xlu0
    %v1972 = vpop.trf.xlu0
    %v1973 = vpop.trf.xlu0
    %v1974 = vpop.trf.xlu0
    %v1975 = vpop.trf.xlu0
    %v1976 = vpop.trf.xlu0
    %v1977 = vpop.trf.xlu0
    %v1978 = vpop.trf.xlu0
    %v1979 = vpop.trf.xlu0
    %v1980 = vpop.trf.xlu0
    %v1981 = vpop.trf.xlu0
    %v1983 = vsel %vm646, %v1966, 0
    %v1986 = vsel %vm646, %v1967, 0
    %1988 = vmatprep.subr.mxu0 0.0
    %1989 = vmatpush1.msra.mxu0 0.0
    %1990 = vmatprep.subr.mxu0 0.0
    %1991 = vmatpush1.msra.mxu0 0.0
    %1992 = vmatprep.subr.mxu0 0.0
    %1993 = vmatpush1.msra.mxu0 0.0
    %1994 = vmatprep.subr.mxu0 0.0
    %1995 = vmatpush1.msra.mxu0 0.0
    %1996 = vmatprep.subr.mxu0 0.0
    %1997 = vmatpush1.msra.mxu0 0.0
    %1998 = vmatprep.subr.mxu0 0.0
    %1999 = vmatpush1.msra.mxu0 0.0
    %2000 = vmatprep.subr.mxu0 0.0
    %2001 = vmatpush1.msra.mxu0 0.0
    %2002 = vmatprep.subr.mxu0 0.0
    %2003 = vmatpush1.msra.mxu0 0.0
    %2004 = vmatprep.subr.mxu0 0.0
    %2005 = vmatpush1.msra.mxu0 0.0
    %2006 = vmatprep.subr.mxu0 0.0
    %2007 = vmatpush1.msra.mxu0 0.0
    %2008 = vmatprep.subr.mxu0 0.0
    %2009 = vmatpush1.msra.mxu0 0.0
    %2010 = vmatprep.subr.mxu0 0.0
    %2011 = vmatpush1.msra.mxu0 0.0
    %2012 = vmatprep.subr.mxu0 %v1944
    %2013 = vmatpush1.msra.mxu0 %v1943
    %2014 = vmatprep.subr.mxu0 %v1942
    %2015 = vmatpush1.msra.mxu0 %v1941
    %2016 = vmatprep.subr.mxu0 %v1940
    %2017 = vmatpush1.msra.mxu0 %v1939
    %2018 = vmatprep.subr.mxu0 %v1938
    %2019 = vmatpush1.msra.mxu0 %v1937
    %2020 = vmatprep.subr.mxu0 0.0
    %2021 = vmatpush2.msra.mxu0 0.0
    %2022 = vmatprep.subr.mxu0 0.0
    %2023 = vmatpush2.msra.mxu0 0.0
    %2024 = vmatprep.subr.mxu0 0.0
    %2025 = vmatpush2.msra.mxu0 0.0
    %2026 = vmatprep.subr.mxu0 0.0
    %2027 = vmatpush2.msra.mxu0 0.0
    %2028 = vmatprep.subr.mxu0 0.0
    %2029 = vmatpush2.msra.mxu0 0.0
    %2030 = vmatprep.subr.mxu0 0.0
    %2031 = vmatpush2.msra.mxu0 0.0
    %2032 = vmatprep.subr.mxu0 0.0
    %2033 = vmatpush2.msra.mxu0 0.0
    %2034 = vmatprep.subr.mxu0 0.0
    %2035 = vmatpush2.msra.mxu0 0.0
    %2036 = vmatprep.subr.mxu0 0.0
    %2037 = vmatpush2.msra.mxu0 0.0
    %2038 = vmatprep.subr.mxu0 0.0
    %2039 = vmatpush2.msra.mxu0 0.0
    %2040 = vmatprep.subr.mxu0 0.0
    %2041 = vmatpush2.msra.mxu0 0.0
    %2042 = vmatprep.subr.mxu0 0.0
    %2043 = vmatpush2.msra.mxu0 0.0
    %2044 = vmatprep.subr.mxu0 0.0
    %2045 = vmatpush2.msra.mxu0 0.0
    %2046 = vmatprep.subr.mxu0 0.0
    %2047 = vmatpush2.msra.mxu0 0.0
    %2048 = vmatprep.subr.mxu0 0.0
    %2049 = vmatpush2.msra.mxu0 0.0
    %2050 = vmatprep.subr.mxu0 0.0
    %2051 = vmatpush2.msra.mxu0 0.0
    %2052 = vmatprep.mubr.f32.mxu0 0.0
    %2053 = vmatmul.mubr.f32.gmra.mxu0 %v1983
    %v2054 = vpop.f32.mrf.mxu0
    %v2055 = vadd.f32 0.0, %v2054
    %v2056 = vpop.f32.mrf.mxu0
    %v2057 = vadd.f32 0.0, %v2056
    %2058 = vmatprep.mubr.f32.mxu0 0.0
    %2059 = vmatmul.mubr.f32.gmra.mxu0 %v1986
    %v2060 = vpop.f32.mrf.mxu0
    %v2061 = vadd.f32 0.0, %v2060
    %v2062 = vpop.f32.mrf.mxu0
    %v2063 = vadd.f32 0.0, %v2062
    %2064 = vdwg.mxu0
    %s2065 = scalar_lea.vmem %s3, 448
    %v2066 = vld [vmem:[%s2065] sm:$0xff]
    %v2067 = vld [vmem:[%s2065 + $0x8] sm:$0xff]
    %v2068 = vadd.f32 %v1415, %v2055
    %v2069 = vadd.f32 %v1416, %v2057
    %v2070 = vadd.f32 %v1417, %v2061
    %v2071 = vadd.f32 %v1418, %v2063
    %2073 = vset.pattern.permute.xlu0 0
    %2074 = vperm.xlu0 %2073, %v2066
    %v2075 = vpop.permute.xlu0 %2074
    %2078 = vset.pattern.permute.xlu0 0
    %2079 = vperm.xlu0 %2078, %v2067
    %v2080 = vpop.permute.xlu0 %2079
    %v2082 = vadd.f32 %v2068, %v2075
    %v2083 = vadd.f32 %v2069, %v2075
    %v2084 = vadd.f32 %v2070, %v2080
    %v2085 = vadd.f32 %v2071, %v2080
    %s2086 = scalar_lea.vmem %s1, 192
    %v2087 = vld [vmem:[%s2086] sm:$0xff]
    %v2088 = vld [vmem:[%s2086 + $0x8] sm:$0xff]
    %v2089 = vld [vmem:[%s2086 + $0x10] sm:$0xff]
    %v2090 = vld [vmem:[%s2086 + $0x18] sm:$0xff]
    %v2092 = vsel %vm86, %v2087, 0
    %v2095 = vsel %vm86, %v2088, 0
    %v2098 = vsel %vm86, %v2089, 0
    %v2101 = vsel %vm86, %v2090, 0
    %2103 = vmatprep.subr.mxu0 0.0
    %2104 = vmatpush1.msra.mxu0 0.0
    %2105 = vmatprep.subr.mxu0 0.0
    %2106 = vmatpush1.msra.mxu0 0.0
    %2107 = vmatprep.subr.mxu0 0.0
    %2108 = vmatpush1.msra.mxu0 0.0
    %2109 = vmatprep.subr.mxu0 0.0
    %2110 = vmatpush1.msra.mxu0 0.0
    %2111 = vmatprep.subr.mxu0 0.0
    %2112 = vmatpush1.msra.mxu0 0.0
    %2113 = vmatprep.subr.mxu0 0.0
    %2114 = vmatpush1.msra.mxu0 0.0
    %2115 = vmatprep.subr.mxu0 0.0
    %2116 = vmatpush1.msra.mxu0 0.0
    %2117 = vmatprep.subr.mxu0 0.0
    %2118 = vmatpush1.msra.mxu0 0.0
    %2119 = vmatprep.subr.mxu0 0.0
    %2120 = vmatpush1.msra.mxu0 0.0
    %2121 = vmatprep.subr.mxu0 0.0
    %2122 = vmatpush1.msra.mxu0 0.0
    %2123 = vmatprep.subr.mxu0 0.0
    %2124 = vmatpush1.msra.mxu0 0.0
    %2125 = vmatprep.subr.mxu0 0.0
    %2126 = vmatpush1.msra.mxu0 0.0
    %2127 = vmatprep.subr.mxu0 0.0
    %2128 = vmatpush1.msra.mxu0 0.0
    %2129 = vmatprep.subr.mxu0 0.0
    %2130 = vmatpush1.msra.mxu0 0.0
    %2131 = vmatprep.subr.mxu0 %v2085
    %2132 = vmatpush1.msra.mxu0 %v2084
    %2133 = vmatprep.subr.mxu0 %v2083
    %2134 = vmatpush1.msra.mxu0 %v2082
    %2135 = vmatprep.subr.mxu0 0.0
    %2136 = vmatpush2.msra.mxu0 0.0
    %2137 = vmatprep.subr.mxu0 0.0
    %2138 = vmatpush2.msra.mxu0 0.0
    %2139 = vmatprep.subr.mxu0 0.0
    %2140 = vmatpush2.msra.mxu0 0.0
    %2141 = vmatprep.subr.mxu0 0.0
    %2142 = vmatpush2.msra.mxu0 0.0
    %2143 = vmatprep.subr.mxu0 0.0
    %2144 = vmatpush2.msra.mxu0 0.0
    %2145 = vmatprep.subr.mxu0 0.0
    %2146 = vmatpush2.msra.mxu0 0.0
    %2147 = vmatprep.subr.mxu0 0.0
    %2148 = vmatpush2.msra.mxu0 0.0
    %2149 = vmatprep.subr.mxu0 0.0
    %2150 = vmatpush2.msra.mxu0 0.0
    %2151 = vmatprep.subr.mxu0 0.0
    %2152 = vmatpush2.msra.mxu0 0.0
    %2153 = vmatprep.subr.mxu0 0.0
    %2154 = vmatpush2.msra.mxu0 0.0
    %2155 = vmatprep.subr.mxu0 0.0
    %2156 = vmatpush2.msra.mxu0 0.0
    %2157 = vmatprep.subr.mxu0 0.0
    %2158 = vmatpush2.msra.mxu0 0.0
    %2159 = vmatprep.subr.mxu0 0.0
    %2160 = vmatpush2.msra.mxu0 0.0
    %2161 = vmatprep.subr.mxu0 0.0
    %2162 = vmatpush2.msra.mxu0 0.0
    %2163 = vmatprep.subr.mxu0 0.0
    %2164 = vmatpush2.msra.mxu0 0.0
    %2165 = vmatprep.subr.mxu0 0.0
    %2166 = vmatpush2.msra.mxu0 0.0
    %2167 = vmatprep.mubr.f32.mxu0 0.0
    %2168 = vmatmul.mubr.f32.gmra.mxu0 %v2092
    %v2169 = vpop.f32.mrf.mxu0
    %v2170 = vadd.f32 0.0, %v2169
    %v2171 = vpop.f32.mrf.mxu0
    %v2172 = vadd.f32 0.0, %v2171
    %2173 = vmatprep.mubr.f32.mxu0 0.0
    %2174 = vmatmul.mubr.f32.gmra.mxu0 %v2095
    %v2175 = vpop.f32.mrf.mxu0
    %v2176 = vadd.f32 0.0, %v2175
    %v2177 = vpop.f32.mrf.mxu0
    %v2178 = vadd.f32 0.0, %v2177
    %2179 = vmatprep.mubr.f32.mxu0 0.0
    %2180 = vmatmul.mubr.f32.gmra.mxu0 %v2098
    %v2181 = vpop.f32.mrf.mxu0
    %v2182 = vadd.f32 0.0, %v2181
    %v2183 = vpop.f32.mrf.mxu0
    %v2184 = vadd.f32 0.0, %v2183
    %2185 = vmatprep.mubr.f32.mxu0 0.0
    %2186 = vmatmul.mubr.f32.gmra.mxu0 %v2101
    %v2187 = vpop.f32.mrf.mxu0
    %v2188 = vadd.f32 0.0, %v2187
    %v2189 = vpop.f32.mrf.mxu0
    %v2190 = vadd.f32 0.0, %v2189
    %2191 = vdwg.mxu0
    %s2192 = sld [smem:[#allocation2 + $0x6]]
    %v2193 = vstv %s2192
    %v2194 = vmul.f32 %v2193, %v2170
    %v2195 = vmul.f32 %v2193, %v2172
    %v2196 = vmul.f32 %v2193, %v2176
    %v2197 = vmul.f32 %v2193, %v2178
    %v2198 = vmul.f32 %v2193, %v2182
    %v2199 = vmul.f32 %v2193, %v2184
    %v2200 = vmul.f32 %v2193, %v2188
    %v2201 = vmul.f32 %v2193, %v2190
    %v2202 = vmax.f32 %v2170, %v2194
    %v2203 = vmax.f32 %v2172, %v2195
    %v2204 = vmax.f32 %v2176, %v2196
    %v2205 = vmax.f32 %v2178, %v2197
    %v2206 = vmax.f32 %v2182, %v2198
    %v2207 = vmax.f32 %v2184, %v2199
    %v2208 = vmax.f32 %v2188, %v2200
    %v2209 = vmax.f32 %v2190, %v2201
    %v2210 = vadd.f32 %v2202, %v2204
    %v2211 = vadd.f32 %v2210, %v2206
    %v2212 = vadd.f32 %v2211, %v2208
    %v2213 = vrot.slane %v2212, 4
    %v2214 = vadd.f32 %v2212, %v2213
    %v2215 = vrot.slane %v2214, 2
    %v2216 = vadd.f32 %v2214, %v2215
    %v2217 = vrot.slane %v2216, 1
    %v2218 = vadd.f32 %v2216, %v2217
    %v2219 = vadd.f32 %v2203, %v2205
    %v2220 = vadd.f32 %v2219, %v2207
    %v2221 = vadd.f32 %v2220, %v2209
    %v2222 = vrot.slane %v2221, 4
    %v2223 = vadd.f32 %v2221, %v2222
    %v2224 = vrot.slane %v2223, 2
    %v2225 = vadd.f32 %v2223, %v2224
    %v2226 = vrot.slane %v2225, 1
    %v2227 = vadd.f32 %v2225, %v2226
    %v2228 = vmul.f32 %v2202, %v2202
    %v2229 = vmul.f32 %v2203, %v2203
    %v2230 = vmul.f32 %v2204, %v2204
    %v2231 = vmul.f32 %v2205, %v2205
    %v2232 = vmul.f32 %v2206, %v2206
    %v2233 = vmul.f32 %v2207, %v2207
    %v2234 = vmul.f32 %v2208, %v2208
    %v2235 = vmul.f32 %v2209, %v2209
    %v2236 = vadd.f32 %v2228, %v2230
    %v2237 = vadd.f32 %v2236, %v2232
    %v2238 = vadd.f32 %v2237, %v2234
    %v2239 = vrot.slane %v2238, 4
    %v2240 = vadd.f32 %v2238, %v2239
    %v2241 = vrot.slane %v2240, 2
    %v2242 = vadd.f32 %v2240, %v2241
    %v2243 = vrot.slane %v2242, 1
    %v2244 = vadd.f32 %v2242, %v2243
    %v2245 = vadd.f32 %v2229, %v2231
    %v2246 = vadd.f32 %v2245, %v2233
    %v2247 = vadd.f32 %v2246, %v2235
    %v2248 = vrot.slane %v2247, 4
    %v2249 = vadd.f32 %v2247, %v2248
    %v2250 = vrot.slane %v2249, 2
    %v2251 = vadd.f32 %v2249, %v2250
    %v2252 = vrot.slane %v2251, 1
    %v2253 = vadd.f32 %v2251, %v2252
    %v2254 = vmul.f32 %v2218, 0.03125
    %v2255 = vmul.f32 %v2227, 0.03125
    %v2256 = vmul.f32 %v2244, 0.03125
    %v2257 = vmul.f32 %v2253, 0.03125
    %v2258 = vmul.f32 %v2254, %v2254
    %v2259 = vmul.f32 %v2255, %v2255
    %v2260 = vsub.f32 %v2256, %v2258
    %v2261 = vsub.f32 %v2257, %v2259
    %v2262 = vmax.f32 %v2260, 0.0
    %v2263 = vmax.f32 %v2261, 0.0
    %v2264 = vsub.f32 %v2202, %v2254
    %v2265 = vsub.f32 %v2203, %v2255
    %v2266 = vsub.f32 %v2204, %v2254
    %v2267 = vsub.f32 %v2205, %v2255
    %v2268 = vsub.f32 %v2206, %v2254
    %v2269 = vsub.f32 %v2207, %v2255
    %v2270 = vsub.f32 %v2208, %v2254
    %v2271 = vsub.f32 %v2209, %v2255
    %v2272 = vadd.f32 %v2262, 1e-08
    %v2273 = vadd.f32 %v2263, 1e-08
    %v2274 = vrsqrt.pop %v2272
    %v2275 = vrsqrt.pop %v2273
    %v2276 = vmul.f32 %v2264, %v2274
    %v2277 = vmul.f32 %v2265, %v2275
    %v2278 = vmul.f32 %v2266, %v2274
    %v2279 = vmul.f32 %v2267, %v2275
    %v2280 = vmul.f32 %v2268, %v2274
    %v2281 = vmul.f32 %v2269, %v2275
    %v2282 = vmul.f32 %v2270, %v2274
    %v2283 = vmul.f32 %v2271, %v2275
    %s2284 = scalar_lea.vmem %s3, 576
    %v2285 = vld [vmem:[%s2284] sm:$0xff]
    %v2286 = vld [vmem:[%s2284 + $0x8] sm:$0xff]
    %v2287 = vld [vmem:[%s2284 + $0x10] sm:$0xff]
    %v2288 = vld [vmem:[%s2284 + $0x18] sm:$0xff]
    %2290 = vset.pattern.permute.xlu0 0
    %2291 = vperm.xlu0 %2290, %v2285
    %v2292 = vpop.permute.xlu0 %2291
    %2295 = vset.pattern.permute.xlu0 0
    %2296 = vperm.xlu0 %2295, %v2286
    %v2297 = vpop.permute.xlu0 %2296
    %2300 = vset.pattern.permute.xlu0 0
    %2301 = vperm.xlu0 %2300, %v2287
    %v2302 = vpop.permute.xlu0 %2301
    %2305 = vset.pattern.permute.xlu0 0
    %2306 = vperm.xlu0 %2305, %v2288
    %v2307 = vpop.permute.xlu0 %2306
    %v2309 = vadd.f32 %v2276, %v2292
    %v2310 = vadd.f32 %v2277, %v2292
    %v2311 = vadd.f32 %v2278, %v2297
    %v2312 = vadd.f32 %v2279, %v2297
    %v2313 = vadd.f32 %v2280, %v2302
    %v2314 = vadd.f32 %v2281, %v2302
    %v2315 = vadd.f32 %v2282, %v2307
    %v2316 = vadd.f32 %v2283, %v2307
    %s2317 = scalar_lea.vmem %s3, 544
    %v2318 = vld [vmem:[%s2317] sm:$0xff]
    %v2319 = vld [vmem:[%s2317 + $0x8] sm:$0xff]
    %v2320 = vld [vmem:[%s2317 + $0x10] sm:$0xff]
    %v2321 = vld [vmem:[%s2317 + $0x18] sm:$0xff]
    %2323 = vset.pattern.permute.xlu0 0
    %2324 = vperm.xlu0 %2323, %v2318
    %v2325 = vpop.permute.xlu0 %2324
    %2328 = vset.pattern.permute.xlu0 0
    %2329 = vperm.xlu0 %2328, %v2319
    %v2330 = vpop.permute.xlu0 %2329
    %2333 = vset.pattern.permute.xlu0 0
    %2334 = vperm.xlu0 %2333, %v2320
    %v2335 = vpop.permute.xlu0 %2334
    %2338 = vset.pattern.permute.xlu0 0
    %2339 = vperm.xlu0 %2338, %v2321
    %v2340 = vpop.permute.xlu0 %2339
    %v2342 = vmul.f32 %v2325, %v2309
    %v2343 = vmul.f32 %v2325, %v2310
    %v2344 = vmul.f32 %v2330, %v2311
    %v2345 = vmul.f32 %v2330, %v2312
    %v2346 = vmul.f32 %v2335, %v2313
    %v2347 = vmul.f32 %v2335, %v2314
    %v2348 = vmul.f32 %v2340, %v2315
    %v2349 = vmul.f32 %v2340, %v2316
    %2358 = vrot.lane.b32.xlu0 %v2309, 4
    %v2359 = vpop.permute.xlu0 %2358
    %2360 = vrot.lane.b32.xlu0 %v2310, 4
    %v2361 = vpop.permute.xlu0 %2360
    %2362 = vrot.lane.b32.xlu0 %v2311, 4
    %v2363 = vpop.permute.xlu0 %2362
    %2364 = vrot.lane.b32.xlu0 %v2312, 4
    %v2365 = vpop.permute.xlu0 %2364
    %2366 = vrot.lane.b32.xlu0 %v2313, 4
    %v2367 = vpop.permute.xlu0 %2366
    %2368 = vrot.lane.b32.xlu0 %v2314, 4
    %v2369 = vpop.permute.xlu0 %2368
    %2370 = vrot.lane.b32.xlu0 %v2315, 4
    %v2371 = vpop.permute.xlu0 %2370
    %2372 = vrot.lane.b32.xlu0 %v2316, 4
    %v2373 = vpop.permute.xlu0 %2372
    %v2374 = vsel %vm1039, %v2359, %v2361
    %v2375 = vsel %vm1039, %v2363, %v2365
    %v2376 = vsel %vm1039, %v2367, %v2369
    %v2377 = vsel %vm1039, %v2371, %v2373
    %v2386 = vsel %vm1039, 0.0, %v2359
    %v2387 = vsel %vm1039, 0.0, %v2363
    %v2388 = vsel %vm1039, 0.0, %v2367
    %v2389 = vsel %vm1039, 0.0, %v2371
    %v2390 = vmul.f32 %v2386, %v80
    %v2391 = vmul.f32 %v2374, %v81
    %v2392 = vmul.f32 %v2387, %v80
    %v2393 = vmul.f32 %v2375, %v81
    %v2394 = vmul.f32 %v2388, %v80
    %v2395 = vmul.f32 %v2376, %v81
    %v2396 = vmul.f32 %v2389, %v80
    %v2397 = vmul.f32 %v2377, %v81
    %s2398 = scalar_lea.vmem %s3, 480
    %v2399 = vld [vmem:[%s2398] sm:$0xff]
    %v2400 = vld [vmem:[%s2398 + $0x8] sm:$0xff]
    %v2401 = vld [vmem:[%s2398 + $0x10] sm:$0xff]
    %v2402 = vld [vmem:[%s2398 + $0x18] sm:$0xff]
    %2404 = vset.pattern.permute.xlu0 0
    %2405 = vperm.xlu0 %2404, %v2399
    %v2406 = vpop.permute.xlu0 %2405
    %2409 = vset.pattern.permute.xlu0 0
    %2410 = vperm.xlu0 %2409, %v2400
    %v2411 = vpop.permute.xlu0 %2410
    %2414 = vset.pattern.permute.xlu0 0
    %2415 = vperm.xlu0 %2414, %v2401
    %v2416 = vpop.permute.xlu0 %2415
    %2419 = vset.pattern.permute.xlu0 0
    %2420 = vperm.xlu0 %2419, %v2402
    %v2421 = vpop.permute.xlu0 %2420
    %v2423 = vmul.f32 %v2406, %v2390
    %v2424 = vmul.f32 %v2406, %v2391
    %v2425 = vmul.f32 %v2411, %v2392
    %v2426 = vmul.f32 %v2411, %v2393
    %v2427 = vmul.f32 %v2416, %v2394
    %v2428 = vmul.f32 %v2416, %v2395
    %v2429 = vmul.f32 %v2421, %v2396
    %v2430 = vmul.f32 %v2421, %v2397
    %v2431 = vadd.f32 %v2342, %v2423
    %v2432 = vadd.f32 %v2343, %v2424
    %v2433 = vadd.f32 %v2344, %v2425
    %v2434 = vadd.f32 %v2345, %v2426
    %v2435 = vadd.f32 %v2346, %v2427
    %v2436 = vadd.f32 %v2347, %v2428
    %v2437 = vadd.f32 %v2348, %v2429
    %v2438 = vadd.f32 %v2349, %v2430
    %2439 = vrot.lane.b32.xlu0 %v2309, 2
    %v2440 = vpop.permute.xlu0 %2439
    %2441 = vrot.lane.b32.xlu0 %v2310, 2
    %v2442 = vpop.permute.xlu0 %2441
    %2443 = vrot.lane.b32.xlu0 %v2311, 2
    %v2444 = vpop.permute.xlu0 %2443
    %2445 = vrot.lane.b32.xlu0 %v2312, 2
    %v2446 = vpop.permute.xlu0 %2445
    %2447 = vrot.lane.b32.xlu0 %v2313, 2
    %v2448 = vpop.permute.xlu0 %2447
    %2449 = vrot.lane.b32.xlu0 %v2314, 2
    %v2450 = vpop.permute.xlu0 %2449
    %2451 = vrot.lane.b32.xlu0 %v2315, 2
    %v2452 = vpop.permute.xlu0 %2451
    %2453 = vrot.lane.b32.xlu0 %v2316, 2
    %v2454 = vpop.permute.xlu0 %2453
    %v2455 = vsel %vm370, %v2440, %v2442
    %v2456 = vsel %vm370, %v2444, %v2446
    %v2457 = vsel %vm370, %v2448, %v2450
    %v2458 = vsel %vm370, %v2452, %v2454
    %v2467 = vsel %vm370, 0.0, %v2440
    %v2468 = vsel %vm370, 0.0, %v2444
    %v2469 = vsel %vm370, 0.0, %v2448
    %v2470 = vsel %vm370, 0.0, %v2452
    %v2471 = vmul.f32 %v2467, %v74
    %v2472 = vmul.f32 %v2455, %v75
    %v2473 = vmul.f32 %v2468, %v74
    %v2474 = vmul.f32 %v2456, %v75
    %v2475 = vmul.f32 %v2469, %v74
    %v2476 = vmul.f32 %v2457, %v75
    %v2477 = vmul.f32 %v2470, %v74
    %v2478 = vmul.f32 %v2458, %v75
    %s2479 = scalar_lea.vmem %s3, 512
    %v2480 = vld [vmem:[%s2479] sm:$0xff]
    %v2481 = vld [vmem:[%s2479 + $0x8] sm:$0xff]
    %v2482 = vld [vmem:[%s2479 + $0x10] sm:$0xff]
    %v2483 = vld [vmem:[%s2479 + $0x18] sm:$0xff]
    %2485 = vset.pattern.permute.xlu0 0
    %2486 = vperm.xlu0 %2485, %v2480
    %v2487 = vpop.permute.xlu0 %2486
    %2490 = vset.pattern.permute.xlu0 0
    %2491 = vperm.xlu0 %2490, %v2481
    %v2492 = vpop.permute.xlu0 %2491
    %2495 = vset.pattern.permute.xlu0 0
    %2496 = vperm.xlu0 %2495, %v2482
    %v2497 = vpop.permute.xlu0 %2496
    %2500 = vset.pattern.permute.xlu0 0
    %2501 = vperm.xlu0 %2500, %v2483
    %v2502 = vpop.permute.xlu0 %2501
    %v2504 = vmul.f32 %v2487, %v2471
    %v2505 = vmul.f32 %v2487, %v2472
    %v2506 = vmul.f32 %v2492, %v2473
    %v2507 = vmul.f32 %v2492, %v2474
    %v2508 = vmul.f32 %v2497, %v2475
    %v2509 = vmul.f32 %v2497, %v2476
    %v2510 = vmul.f32 %v2502, %v2477
    %v2511 = vmul.f32 %v2502, %v2478
    %v2512 = vadd.f32 %v2431, %v2504
    %v2513 = vadd.f32 %v2432, %v2505
    %v2514 = vadd.f32 %v2433, %v2506
    %v2515 = vadd.f32 %v2434, %v2507
    %v2516 = vadd.f32 %v2435, %v2508
    %v2517 = vadd.f32 %v2436, %v2509
    %v2518 = vadd.f32 %v2437, %v2510
    %v2519 = vadd.f32 %v2438, %v2511
    %s2520 = sld [smem:[#allocation2 + $0x7]]
    %v2521 = vstv %s2520
    %v2522 = vmul.f32 %v2521, %v2512
    %v2523 = vmul.f32 %v2521, %v2513
    %v2524 = vmul.f32 %v2521, %v2514
    %v2525 = vmul.f32 %v2521, %v2515
    %v2526 = vmul.f32 %v2521, %v2516
    %v2527 = vmul.f32 %v2521, %v2517
    %v2528 = vmul.f32 %v2521, %v2518
    %v2529 = vmul.f32 %v2521, %v2519
    %v2530 = vmax.f32 %v2512, %v2522
    %v2531 = vmax.f32 %v2513, %v2523
    %v2532 = vmax.f32 %v2514, %v2524
    %v2533 = vmax.f32 %v2515, %v2525
    %v2534 = vmax.f32 %v2516, %v2526
    %v2535 = vmax.f32 %v2517, %v2527
    %v2536 = vmax.f32 %v2518, %v2528
    %v2537 = vmax.f32 %v2519, %v2529
    %v2538 = vadd.f32 %v2530, %v2532
    %v2539 = vadd.f32 %v2538, %v2534
    %v2540 = vadd.f32 %v2539, %v2536
    %v2541 = vrot.slane %v2540, 4
    %v2542 = vadd.f32 %v2540, %v2541
    %v2543 = vrot.slane %v2542, 2
    %v2544 = vadd.f32 %v2542, %v2543
    %v2545 = vrot.slane %v2544, 1
    %v2546 = vadd.f32 %v2544, %v2545
    %v2547 = vadd.f32 %v2531, %v2533
    %v2548 = vadd.f32 %v2547, %v2535
    %v2549 = vadd.f32 %v2548, %v2537
    %v2550 = vrot.slane %v2549, 4
    %v2551 = vadd.f32 %v2549, %v2550
    %v2552 = vrot.slane %v2551, 2
    %v2553 = vadd.f32 %v2551, %v2552
    %v2554 = vrot.slane %v2553, 1
    %v2555 = vadd.f32 %v2553, %v2554
    %v2556 = vmul.f32 %v2530, %v2530
    %v2557 = vmul.f32 %v2531, %v2531
    %v2558 = vmul.f32 %v2532, %v2532
    %v2559 = vmul.f32 %v2533, %v2533
    %v2560 = vmul.f32 %v2534, %v2534
    %v2561 = vmul.f32 %v2535, %v2535
    %v2562 = vmul.f32 %v2536, %v2536
    %v2563 = vmul.f32 %v2537, %v2537
    %v2564 = vadd.f32 %v2556, %v2558
    %v2565 = vadd.f32 %v2564, %v2560
    %v2566 = vadd.f32 %v2565, %v2562
    %v2567 = vrot.slane %v2566, 4
    %v2568 = vadd.f32 %v2566, %v2567
    %v2569 = vrot.slane %v2568, 2
    %v2570 = vadd.f32 %v2568, %v2569
    %v2571 = vrot.slane %v2570, 1
    %v2572 = vadd.f32 %v2570, %v2571
    %v2573 = vadd.f32 %v2557, %v2559
    %v2574 = vadd.f32 %v2573, %v2561
    %v2575 = vadd.f32 %v2574, %v2563
    %v2576 = vrot.slane %v2575, 4
    %v2577 = vadd.f32 %v2575, %v2576
    %v2578 = vrot.slane %v2577, 2
    %v2579 = vadd.f32 %v2577, %v2578
    %v2580 = vrot.slane %v2579, 1
    %v2581 = vadd.f32 %v2579, %v2580
    %v2582 = vmul.f32 %v2546, 0.03125
    %v2583 = vmul.f32 %v2555, 0.03125
    %v2584 = vmul.f32 %v2572, 0.03125
    %v2585 = vmul.f32 %v2581, 0.03125
    %v2586 = vmul.f32 %v2582, %v2582
    %v2587 = vmul.f32 %v2583, %v2583
    %v2588 = vsub.f32 %v2584, %v2586
    %v2589 = vsub.f32 %v2585, %v2587
    %v2590 = vmax.f32 %v2588, 0.0
    %v2591 = vmax.f32 %v2589, 0.0
    %v2592 = vsub.f32 %v2530, %v2582
    %v2593 = vsub.f32 %v2531, %v2583
    %v2594 = vsub.f32 %v2532, %v2582
    %v2595 = vsub.f32 %v2533, %v2583
    %v2596 = vsub.f32 %v2534, %v2582
    %v2597 = vsub.f32 %v2535, %v2583
    %v2598 = vsub.f32 %v2536, %v2582
    %v2599 = vsub.f32 %v2537, %v2583
    %v2600 = vadd.f32 %v2590, 1e-08
    %v2601 = vadd.f32 %v2591, 1e-08
    %v2602 = vrsqrt.pop %v2600
    %v2603 = vrsqrt.pop %v2601
    %v2604 = vmul.f32 %v2592, %v2602
    %v2605 = vmul.f32 %v2593, %v2603
    %v2606 = vmul.f32 %v2594, %v2602
    %v2607 = vmul.f32 %v2595, %v2603
    %v2608 = vmul.f32 %v2596, %v2602
    %v2609 = vmul.f32 %v2597, %v2603
    %v2610 = vmul.f32 %v2598, %v2602
    %v2611 = vmul.f32 %v2599, %v2603
    %s2612 = scalar_lea.vmem %s1, 224
    %v2613 = vld [vmem:[%s2612] sm:$0xff]
    %v2614 = vld [vmem:[%s2612 + $0x8] sm:$0xff]
    %v2615 = vld [vmem:[%s2612 + $0x10] sm:$0xff]
    %v2616 = vld [vmem:[%s2612 + $0x18] sm:$0xff]
    %2617 = vxpose.xlu0.b32.start [1/16] %v2613, 128
    %2618 = vxpose.xlu0.b32.cont [2/16] %v2614, 128
    %2619 = vxpose.xlu0.b32.cont [3/16] %v2615, 128
    %2620 = vxpose.xlu0.b32.cont [4/16] %v2616, 128
    %2621 = vxpose.xlu0.b32.cont [5/16] 0.0, 128
    %2622 = vxpose.xlu0.b32.cont [6/16] 0.0, 128
    %2623 = vxpose.xlu0.b32.cont [7/16] 0.0, 128
    %2624 = vxpose.xlu0.b32.cont [8/16] 0.0, 128
    %2625 = vxpose.xlu0.b32.cont [9/16] 0.0, 128
    %2626 = vxpose.xlu0.b32.cont [10/16] 0.0, 128
    %2627 = vxpose.xlu0.b32.cont [11/16] 0.0, 128
    %2628 = vxpose.xlu0.b32.cont [12/16] 0.0, 128
    %2629 = vxpose.xlu0.b32.cont [13/16] 0.0, 128
    %2630 = vxpose.xlu0.b32.cont [14/16] 0.0, 128
    %2631 = vxpose.xlu0.b32.cont [15/16] 0.0, 128
    %2632 = vxpose.xlu0.b32.end [16/16] 0.0, 128
    %v2633 = vpop.trf.xlu0
    %v2634 = vpop.trf.xlu0
    %v2635 = vpop.trf.xlu0
    %v2636 = vpop.trf.xlu0
    %v2637 = vpop.trf.xlu0
    %v2638 = vpop.trf.xlu0
    %v2639 = vpop.trf.xlu0
    %v2640 = vpop.trf.xlu0
    %v2641 = vpop.trf.xlu0
    %v2642 = vpop.trf.xlu0
    %v2643 = vpop.trf.xlu0
    %v2644 = vpop.trf.xlu0
    %v2645 = vpop.trf.xlu0
    %v2646 = vpop.trf.xlu0
    %v2647 = vpop.trf.xlu0
    %v2648 = vpop.trf.xlu0
    %v2650 = vsel %vm646, %v2633, 0
    %v2653 = vsel %vm646, %v2634, 0
    %2655 = vmatprep.subr.mxu0 0.0
    %2656 = vmatpush1.msra.mxu0 0.0
    %2657 = vmatprep.subr.mxu0 0.0
    %2658 = vmatpush1.msra.mxu0 0.0
    %2659 = vmatprep.subr.mxu0 0.0
    %2660 = vmatpush1.msra.mxu0 0.0
    %2661 = vmatprep.subr.mxu0 0.0
    %2662 = vmatpush1.msra.mxu0 0.0
    %2663 = vmatprep.subr.mxu0 0.0
    %2664 = vmatpush1.msra.mxu0 0.0
    %2665 = vmatprep.subr.mxu0 0.0
    %2666 = vmatpush1.msra.mxu0 0.0
    %2667 = vmatprep.subr.mxu0 0.0
    %2668 = vmatpush1.msra.mxu0 0.0
    %2669 = vmatprep.subr.mxu0 0.0
    %2670 = vmatpush1.msra.mxu0 0.0
    %2671 = vmatprep.subr.mxu0 0.0
    %2672 = vmatpush1.msra.mxu0 0.0
    %2673 = vmatprep.subr.mxu0 0.0
    %2674 = vmatpush1.msra.mxu0 0.0
    %2675 = vmatprep.subr.mxu0 0.0
    %2676 = vmatpush1.msra.mxu0 0.0
    %2677 = vmatprep.subr.mxu0 0.0
    %2678 = vmatpush1.msra.mxu0 0.0
    %2679 = vmatprep.subr.mxu0 %v2611
    %2680 = vmatpush1.msra.mxu0 %v2610
    %2681 = vmatprep.subr.mxu0 %v2609
    %2682 = vmatpush1.msra.mxu0 %v2608
    %2683 = vmatprep.subr.mxu0 %v2607
    %2684 = vmatpush1.msra.mxu0 %v2606
    %2685 = vmatprep.subr.mxu0 %v2605
    %2686 = vmatpush1.msra.mxu0 %v2604
    %2687 = vmatprep.subr.mxu0 0.0
    %2688 = vmatpush2.msra.mxu0 0.0
    %2689 = vmatprep.subr.mxu0 0.0
    %2690 = vmatpush2.msra.mxu0 0.0
    %2691 = vmatprep.subr.mxu0 0.0
    %2692 = vmatpush2.msra.mxu0 0.0
    %2693 = vmatprep.subr.mxu0 0.0
    %2694 = vmatpush2.msra.mxu0 0.0
    %2695 = vmatprep.subr.mxu0 0.0
    %2696 = vmatpush2.msra.mxu0 0.0
    %2697 = vmatprep.subr.mxu0 0.0
    %2698 = vmatpush2.msra.mxu0 0.0
    %2699 = vmatprep.subr.mxu0 0.0
    %2700 = vmatpush2.msra.mxu0 0.0
    %2701 = vmatprep.subr.mxu0 0.0
    %2702 = vmatpush2.msra.mxu0 0.0
    %2703 = vmatprep.subr.mxu0 0.0
    %2704 = vmatpush2.msra.mxu0 0.0
    %2705 = vmatprep.subr.mxu0 0.0
    %2706 = vmatpush2.msra.mxu0 0.0
    %2707 = vmatprep.subr.mxu0 0.0
    %2708 = vmatpush2.msra.mxu0 0.0
    %2709 = vmatprep.subr.mxu0 0.0
    %2710 = vmatpush2.msra.mxu0 0.0
    %2711 = vmatprep.subr.mxu0 0.0
    %2712 = vmatpush2.msra.mxu0 0.0
    %2713 = vmatprep.subr.mxu0 0.0
    %2714 = vmatpush2.msra.mxu0 0.0
    %2715 = vmatprep.subr.mxu0 0.0
    %2716 = vmatpush2.msra.mxu0 0.0
    %2717 = vmatprep.subr.mxu0 0.0
    %2718 = vmatpush2.msra.mxu0 0.0
    %2719 = vmatprep.mubr.f32.mxu0 0.0
    %2720 = vmatmul.mubr.f32.gmra.mxu0 %v2650
    %v2721 = vpop.f32.mrf.mxu0
    %v2722 = vadd.f32 0.0, %v2721
    %v2723 = vpop.f32.mrf.mxu0
    %v2724 = vadd.f32 0.0, %v2723
    %2725 = vmatprep.mubr.f32.mxu0 0.0
    %2726 = vmatmul.mubr.f32.gmra.mxu0 %v2653
    %v2727 = vpop.f32.mrf.mxu0
    %v2728 = vadd.f32 0.0, %v2727
    %v2729 = vpop.f32.mrf.mxu0
    %v2730 = vadd.f32 0.0, %v2729
    %2731 = vdwg.mxu0
    %s2732 = scalar_lea.vmem %s3, 608
    %v2733 = vld [vmem:[%s2732] sm:$0xff]
    %v2734 = vld [vmem:[%s2732 + $0x8] sm:$0xff]
    %v2735 = vadd.f32 %v2082, %v2722
    %v2736 = vadd.f32 %v2083, %v2724
    %v2737 = vadd.f32 %v2084, %v2728
    %v2738 = vadd.f32 %v2085, %v2730
    %2740 = vset.pattern.permute.xlu0 0
    %2741 = vperm.xlu0 %2740, %v2733
    %v2742 = vpop.permute.xlu0 %2741
    %2745 = vset.pattern.permute.xlu0 0
    %2746 = vperm.xlu0 %2745, %v2734
    %v2747 = vpop.permute.xlu0 %2746
    %v2749 = vadd.f32 %v2735, %v2742
    %v2750 = vadd.f32 %v2736, %v2742
    %v2751 = vadd.f32 %v2737, %v2747
    %v2752 = vadd.f32 %v2738, %v2747
    %v2753 = vld [vmem:[%s2] sm:$0xff]
    %v2754 = vld [vmem:[%s2 + $0x8] sm:$0xff]
    %v2755 = vld [vmem:[%s2 + $0x10] sm:$0xff]
    %v2756 = vld [vmem:[%s2 + $0x18] sm:$0xff]
    %v2758 = vsel %vm86, %v2753, 0
    %v2761 = vsel %vm86, %v2754, 0
    %v2764 = vsel %vm86, %v2755, 0
    %v2767 = vsel %vm86, %v2756, 0
    %2769 = vmatprep.subr.mxu0 0.0
    %2770 = vmatpush1.msra.mxu0 0.0
    %2771 = vmatprep.subr.mxu0 0.0
    %2772 = vmatpush1.msra.mxu0 0.0
    %2773 = vmatprep.subr.mxu0 0.0
    %2774 = vmatpush1.msra.mxu0 0.0
    %2775 = vmatprep.subr.mxu0 0.0
    %2776 = vmatpush1.msra.mxu0 0.0
    %2777 = vmatprep.subr.mxu0 0.0
    %2778 = vmatpush1.msra.mxu0 0.0
    %2779 = vmatprep.subr.mxu0 0.0
    %2780 = vmatpush1.msra.mxu0 0.0
    %2781 = vmatprep.subr.mxu0 0.0
    %2782 = vmatpush1.msra.mxu0 0.0
    %2783 = vmatprep.subr.mxu0 0.0
    %2784 = vmatpush1.msra.mxu0 0.0
    %2785 = vmatprep.subr.mxu0 0.0
    %2786 = vmatpush1.msra.mxu0 0.0
    %2787 = vmatprep.subr.mxu0 0.0
    %2788 = vmatpush1.msra.mxu0 0.0
    %2789 = vmatprep.subr.mxu0 0.0
    %2790 = vmatpush1.msra.mxu0 0.0
    %2791 = vmatprep.subr.mxu0 0.0
    %2792 = vmatpush1.msra.mxu0 0.0
    %2793 = vmatprep.subr.mxu0 0.0
    %2794 = vmatpush1.msra.mxu0 0.0
    %2795 = vmatprep.subr.mxu0 0.0
    %2796 = vmatpush1.msra.mxu0 0.0
    %2797 = vmatprep.subr.mxu0 %v2752
    %2798 = vmatpush1.msra.mxu0 %v2751
    %2799 = vmatprep.subr.mxu0 %v2750
    %2800 = vmatpush1.msra.mxu0 %v2749
    %2801 = vmatprep.subr.mxu0 0.0
    %2802 = vmatpush2.msra.mxu0 0.0
    %2803 = vmatprep.subr.mxu0 0.0
    %2804 = vmatpush2.msra.mxu0 0.0
    %2805 = vmatprep.subr.mxu0 0.0
    %2806 = vmatpush2.msra.mxu0 0.0
    %2807 = vmatprep.subr.mxu0 0.0
    %2808 = vmatpush2.msra.mxu0 0.0
    %2809 = vmatprep.subr.mxu0 0.0
    %2810 = vmatpush2.msra.mxu0 0.0
    %2811 = vmatprep.subr.mxu0 0.0
    %2812 = vmatpush2.msra.mxu0 0.0
    %2813 = vmatprep.subr.mxu0 0.0
    %2814 = vmatpush2.msra.mxu0 0.0
    %2815 = vmatprep.subr.mxu0 0.0
    %2816 = vmatpush2.msra.mxu0 0.0
    %2817 = vmatprep.subr.mxu0 0.0
    %2818 = vmatpush2.msra.mxu0 0.0
    %2819 = vmatprep.subr.mxu0 0.0
    %2820 = vmatpush2.msra.mxu0 0.0
    %2821 = vmatprep.subr.mxu0 0.0
    %2822 = vmatpush2.msra.mxu0 0.0
    %2823 = vmatprep.subr.mxu0 0.0
    %2824 = vmatpush2.msra.mxu0 0.0
    %2825 = vmatprep.subr.mxu0 0.0
    %2826 = vmatpush2.msra.mxu0 0.0
    %2827 = vmatprep.subr.mxu0 0.0
    %2828 = vmatpush2.msra.mxu0 0.0
    %2829 = vmatprep.subr.mxu0 0.0
    %2830 = vmatpush2.msra.mxu0 0.0
    %2831 = vmatprep.subr.mxu0 0.0
    %2832 = vmatpush2.msra.mxu0 0.0
    %2833 = vmatprep.mubr.f32.mxu0 0.0
    %2834 = vmatmul.mubr.f32.gmra.mxu0 %v2758
    %v2835 = vpop.f32.mrf.mxu0
    %v2836 = vadd.f32 0.0, %v2835
    %v2837 = vpop.f32.mrf.mxu0
    %v2838 = vadd.f32 0.0, %v2837
    %2839 = vmatprep.mubr.f32.mxu0 0.0
    %2840 = vmatmul.mubr.f32.gmra.mxu0 %v2761
    %v2841 = vpop.f32.mrf.mxu0
    %v2842 = vadd.f32 0.0, %v2841
    %v2843 = vpop.f32.mrf.mxu0
    %v2844 = vadd.f32 0.0, %v2843
    %2845 = vmatprep.mubr.f32.mxu0 0.0
    %2846 = vmatmul.mubr.f32.gmra.mxu0 %v2764
    %v2847 = vpop.f32.mrf.mxu0
    %v2848 = vadd.f32 0.0, %v2847
    %v2849 = vpop.f32.mrf.mxu0
    %v2850 = vadd.f32 0.0, %v2849
    %2851 = vmatprep.mubr.f32.mxu0 0.0
    %2852 = vmatmul.mubr.f32.gmra.mxu0 %v2767
    %v2853 = vpop.f32.mrf.mxu0
    %v2854 = vadd.f32 0.0, %v2853
    %v2855 = vpop.f32.mrf.mxu0
    %v2856 = vadd.f32 0.0, %v2855
    %2857 = vdwg.mxu0
    %2858 = vst [vmem:[%s5] sm:$0xff] %v2836
    %2859 = vst [vmem:[%s5 + $0x8] sm:$0xff] %v2838
    %2860 = vst [vmem:[%s5 + $0x10] sm:$0xff] %v2842
    %2861 = vst [vmem:[%s5 + $0x18] sm:$0xff] %v2844
    %2862 = vst [vmem:[%s5 + $0x20] sm:$0xff] %v2848
    %2863 = vst [vmem:[%s5 + $0x28] sm:$0xff] %v2850
    %2864 = vst [vmem:[%s5 + $0x30] sm:$0xff] %v2854
    %2865 = vst [vmem:[%s5 + $0x38] sm:$0xff] %v2856
    // Predicated region
    $region26: #{separator_forward.1} parent=1 // pred_check
      _
    $region27: #{separator_forward.1} parent=1 // pred_check_branch
      %2867 = sbr.rel (0) target = $region29
    $region28: #{separator_forward.1} parent=1 // pred_region
      _
    $region29: #{separator_forward.1} parent=1 // pred_fallthru
      _
    // Predicated region
    $region30: #{separator_forward.1} parent=1 // pred_check
      _
    $region31: #{separator_forward.1} parent=1 // pred_check_branch
      %2869 = sbr.rel (0) target = $region33
    $region32: #{separator_forward.1} parent=1 // pred_region
      _
    $region33: #{separator_forward.1} parent=1 // pred_fallthru
      _
    %2870 = vsyncpa [#allocation3], 1

</llo_original>
